<compile_context>
chip_gen: v7x
topology: tpu7x:2x2x1
jax: 0.10.0
libtpu: 0.0.40
codegen_flags: <defaults>
</compile_context>

<pallas_src>
import functools

import numpy as np

import jax
import jax.numpy as jnp
from jax.experimental import pallas as pl
from jax.experimental.pallas import tpu as pltpu

LANES = 128


def _round_up(v, m):
    return ((v + m - 1) // m) * m


def _block_out_hw(h, w):
    """Spatial size after one Conv(3x3, s=2, p=1) + MaxPool(2) block."""
    ho = (h + 2 - 3) // 2 + 1
    wo = (w + 2 - 3) // 2 + 1
    return ho // 2, wo // 2


# ----------------------------------------------------------------------------
# In-kernel helpers
# ----------------------------------------------------------------------------
def _silu(y):
    # SiLU via a single EUP transcendental (avoids exp(-y) overflow + vrcp).
    return y * (0.5 * (jnp.tanh(0.5 * y) + 1.0))


def _conv_bn_silu_pool(p, w, scale, shift, m):
    """p: [4*m, K] bf16 patches (2x2 pool positions stacked along rows),
       w: [K, C] bf16, scale/shift: [1, C] f32  ->  pooled [m, C] f32."""
    y = jnp.dot(p, w, preferred_element_type=jnp.float32)   # one MXU matmul
    y = y * scale + shift                                    # conv bias + BN folded
    y = _silu(y)
    # MaxPool2d(2): max over the 4 pool-position row blocks (aligned slices).
    return jnp.maximum(jnp.maximum(y[0 * m:1 * m], y[1 * m:2 * m]),
                       jnp.maximum(y[2 * m:3 * m], y[3 * m:4 * m]))


# ----------------------------------------------------------------------------
# Pallas kernels
# ----------------------------------------------------------------------------
def _conv_block_kernel(p_ref, w_ref, sc_ref, sh_ref, o_ref):
    """Layer 1: Conv+BN+SiLU+MaxPool, bf16 lane-dense output."""
    m = o_ref.shape[0]
    o_ref[...] = _conv_bn_silu_pool(p_ref[...], w_ref[...], sc_ref[...],
                                    sh_ref[...], m).astype(o_ref.dtype)


def _tail_kernel(p2_ref, w2_ref, sc2_ref, sh2_ref,
                 w3_ref, s3_ref, sc3_ref, sh3_ref,
                 w4_ref, b4_ref, w5_ref, b5_ref, o_ref):
    """Conv2 block + Conv3 block + (Linear -> Softmax -> Linear) head."""
    ns = o_ref.shape[0]              # padded sample slots (multiple of 8)
    m2 = p2_ref.shape[0] // 4        # conv2 pooled rows (padded, multiple of 16)
    cp3 = sc3_ref.shape[1]           # conv3 out-channel lanes (128)

    # ---- Conv2 + BN + SiLU + MaxPool (one MXU matmul) ----
    a2 = _conv_bn_silu_pool(p2_ref[...], w2_ref[...], sc2_ref[...],
                            sh2_ref[...], m2).astype(jnp.bfloat16)   # [m2, 128]

    # ---- Conv3 + BN + SiLU + MaxPool, all in VMEM ----
    # Per-tap weight products in one matmul, then 9 one-hot gather matmuls
    # (pool-position-major output rows) instead of any im2col glue.
    y2 = jnp.dot(a2, w3_ref[...], preferred_element_type=jnp.float32)
    y2 = y2.astype(jnp.bfloat16)                                      # [m2, 9*128]
    acc = jnp.dot(s3_ref[0], y2[:, 0:cp3], preferred_element_type=jnp.float32)
    for t in range(1, 9):
        acc = acc + jnp.dot(s3_ref[t], y2[:, t * cp3:(t + 1) * cp3],
                            preferred_element_type=jnp.float32)        # [4*ns, 128]
    y3 = _silu(acc * sc3_ref[...] + sh3_ref[...])
    a3 = jnp.maximum(jnp.maximum(y3[0 * ns:1 * ns], y3[1 * ns:2 * ns]),
                     jnp.maximum(y3[2 * ns:3 * ns], y3[3 * ns:4 * ns]))  # [ns, 128]

    # ---- Head: Linear -> Softmax(dim=1) -> Linear ----
    # Padded hidden columns carry a -1e30 bias so they are exactly 0 after exp.
    h = jnp.dot(a3.astype(jnp.bfloat16), w4_ref[...],
                preferred_element_type=jnp.float32) + b4_ref[...]
    e = jnp.exp(h - jnp.max(h, axis=-1, keepdims=True))
    p = e / jnp.sum(e, axis=-1, keepdims=True)
    o_ref[...] = jnp.dot(p, w5_ref[...],
                         preferred_element_type=jnp.float32) + b5_ref[...]


# ----------------------------------------------------------------------------
# Plain-JAX glue
# ----------------------------------------------------------------------------
def _im2col_pool_groups(x):
    """x: [N,H,W,C] -> bf16 patches [4*Mp, Kp] grouped by 2x2 pool position.

    Rows within each pool-position block are ordered (n, hp, wp) over the
    POOLED output grid; K = 9*C is ordered (kh, kw, c) and zero-padded to a
    multiple of 128 lanes.
    """
    N, H, W, C = x.shape
    Ho = (H + 2 - 3) // 2 + 1
    Wo = (W + 2 - 3) // 2 + 1
    xp = jnp.pad(x, ((0, 0), (1, 1), (1, 1), (0, 0)))
    cols = []
    for kh in range(3):
        for kw in range(3):
            cols.append(xp[:, kh:kh + 2 * (Ho - 1) + 1:2,
                            kw:kw + 2 * (Wo - 1) + 1:2, :])
    K = 9 * C
    pat = jnp.concatenate(cols, axis=-1)                  # [N, Ho, Wo, K]
    Hp, Wp = Ho // 2, Wo // 2
    pat = pat[:, :2 * Hp, :2 * Wp, :]                     # floor pooling
    pat = pat.reshape(N, Hp, 2, Wp, 2, K)
    pat = jnp.transpose(pat, (2, 4, 0, 1, 3, 5)).reshape(4, N * Hp * Wp, K)
    M = N * Hp * Wp
    Mp = _round_up(M, 16)
    Kp = _round_up(K, LANES)
    pat = jnp.pad(pat, ((0, 0), (0, Mp - M), (0, Kp - K))).astype(jnp.bfloat16)
    return pat.reshape(4 * Mp, Kp), M, Mp, Hp, Wp


# ----------------------------------------------------------------------------
# One-time weight preprocessing (outside the jitted forward)
# ----------------------------------------------------------------------------
def fold_params(params, batch, height, width, eps=1e-5):
    folded = {}

    # Conv1 / Conv2: im2col weight + folded BN, padded lane-dense.
    for i in (1, 2):
        w = params[f"conv{i}_w"]                              # [Cout, Cin, 3, 3]
        cout = w.shape[0]
        w2d = jnp.transpose(w, (2, 3, 1, 0)).reshape(-1, cout)  # [(kh,kw,ci), Cout]
        k = w2d.shape[0]
        kp, cp = _round_up(k, LANES), _round_up(cout, LANES)
        gamma, beta, rm, rv = params[f"bn{i}"]
        scale = gamma / jnp.sqrt(rv + eps)
        shift = (params[f"conv{i}_b"] - rm) * scale + beta
        folded[f"w{i}"] = jnp.pad(w2d, ((0, kp - k), (0, cp - cout))).astype(jnp.bfloat16)
        folded[f"sc{i}"] = jnp.pad(scale.reshape(1, -1), ((0, 0), (0, cp - cout)))
        folded[f"sh{i}"] = jnp.pad(shift.reshape(1, -1), ((0, 0), (0, cp - cout)))
    folded["c1"] = int(params["conv1_w"].shape[0])

    # Static activation spatial chain.
    hp1, wp1 = _block_out_hw(height, width)
    hp2, wp2 = _block_out_hw(hp1, wp1)
    hp3, wp3 = _block_out_hw(hp2, wp2)
    if hp3 != 1 or wp3 != 1:
        raise NotImplementedError(
            "tail kernel assumes conv3's pooled output is 1x1 spatial")

    # Conv3: per-tap weight block [Cin_p, 9*Cout_p] + one-hot gather matrices.
    w3 = params["conv3_w"]                                    # [64, 32, 3, 3]
    cout3, cin3 = int(w3.shape[0]), int(w3.shape[1])
    cp3 = _round_up(cout3, LANES)
    cinp3 = _round_up(cin3, LANES)
    w3t = jnp.transpose(w3, (1, 2, 3, 0))                     # [ci, kh, kw, co]
    w3t = jnp.pad(w3t, ((0, 0), (0, 0), (0, 0), (0, cp3 - cout3)))
    w3t = w3t.reshape(cin3, 9 * cp3)
    folded["w3"] = jnp.pad(w3t, ((0, cinp3 - cin3), (0, 0))).astype(jnp.bfloat16)
    gamma, beta, rm, rv = params["bn3"]
    scale = gamma / jnp.sqrt(rv + eps)
    shift = (params["conv3_b"] - rm) * scale + beta
    folded["sc3"] = jnp.pad(scale.reshape(1, -1), ((0, 0), (0, cp3 - cout3)))
    folded["sh3"] = jnp.pad(shift.reshape(1, -1), ((0, 0), (0, cp3 - cout3)))

    # One-hot gather: conv3-pre row = pool_pos*ns + n  <-  conv2-pooled row
    # (n*hp2 + hin)*wp2 + win with hin = 2*ho + kh - 1 (zero outside bounds).
    ns = _round_up(batch, 8)
    m2p = _round_up(batch * hp2 * wp2, 16)
    s3 = np.zeros((9, 4 * ns, m2p), np.float32)
    for kh in range(3):
        for kw in range(3):
            t = kh * 3 + kw
            for ho in range(2):
                for wo in range(2):
                    hin, win = 2 * ho + kh - 1, 2 * wo + kw - 1
                    if 0 <= hin < hp2 and 0 <= win < wp2:
                        pos = ho * 2 + wo
                        for n in range(batch):
                            s3[t, pos * ns + n, (n * hp2 + hin) * wp2 + win] = 1.0
    folded["s3"] = jnp.asarray(s3, jnp.bfloat16)
    folded["ns"] = ns

    # Head: Linear(64->10) -> Softmax -> Linear(10->2), padded to 128 lanes.
    w4 = params["fc1_w"]                                      # [in, out]
    fin, h1 = int(w4.shape[0]), int(w4.shape[1])
    fp, hh = _round_up(fin, LANES), _round_up(h1, LANES)
    folded["w4"] = jnp.pad(w4, ((0, fp - fin), (0, hh - h1))).astype(jnp.bfloat16)
    folded["b4"] = jnp.pad(params["fc1_b"].reshape(1, -1), ((0, 0), (0, hh - h1)),
                           constant_values=-1e30)             # kill padded softmax cols
    w5 = params["fc2_w"]
    c2 = int(w5.shape[1])
    cpc = _round_up(c2, LANES)
    folded["w5"] = jnp.pad(w5, ((0, hh - h1), (0, cpc - c2)))  # f32 (exact final dot)
    folded["b5"] = jnp.pad(params["fc2_b"].reshape(1, -1), ((0, 0), (0, cpc - c2)))
    folded["n_classes"] = c2
    return folded


# ----------------------------------------------------------------------------
# Params + forward
# ----------------------------------------------------------------------------
def init_params(key, channels, height, width):
    ks = jax.random.split(key, 10)

    def norm(k, shape, s=0.1):
        return jax.random.normal(k, shape, jnp.float32) * s

    p = {}
    cins, couts = [channels, 16, 32], [16, 32, 64]
    for i in range(3):
        p[f"conv{i+1}_w"] = norm(ks[2 * i], (couts[i], cins[i], 3, 3))   # OIHW
        p[f"conv{i+1}_b"] = norm(ks[2 * i + 1], (couts[i],))
        p[f"bn{i+1}"] = (jnp.ones((couts[i],), jnp.float32),    # gamma
                         jnp.zeros((couts[i],), jnp.float32),   # beta
                         jnp.zeros((couts[i],), jnp.float32),   # running_mean
                         jnp.ones((couts[i],), jnp.float32))    # running_var
    h, w = height, width
    for _ in range(3):
        h, w = _block_out_hw(h, w)
    feat = h * w * 64
    p["fc1_w"] = norm(ks[6], (feat, 10))   # stored as [in, out]
    p["fc1_b"] = norm(ks[7], (10,))
    p["fc2_w"] = norm(ks[8], (10, 2))
    p["fc2_b"] = norm(ks[9], (2,))
    return p


def forward(folded, x_nchw):
    """x_nchw: [N, C, H, W] float32 -> logits [N, 2]."""
    x = jnp.transpose(x_nchw, (0, 2, 3, 1))        # NCHW -> NHWC
    n = x.shape[0]
    vspec = pl.BlockSpec(memory_space=pltpu.MemorySpace.VMEM)

    # ---- kernel A: Conv1 + BN + SiLU + MaxPool (single step, bf16 out) ----
    pat1, m1, mp1, hp1, wp1 = _im2col_pool_groups(x)
    cp1 = folded["w1"].shape[1]
    out1 = pl.pallas_call(
        _conv_block_kernel,
        out_shape=jax.ShapeDtypeStruct((mp1, cp1), jnp.bfloat16),
        in_specs=[vspec] * 4,
        out_specs=vspec,
    )(pat1, folded["w1"], folded["sc1"], folded["sh1"])
    a1 = out1[:m1, :folded["c1"]].reshape(n, hp1, wp1, folded["c1"])

    # ---- kernel B: Conv2 block + Conv3 block + head, fused ----
    pat2, _, _, _, _ = _im2col_pool_groups(a1)
    ns = folded["ns"]
    ncol = folded["b5"].shape[1]
    out = pl.pallas_call(
        _tail_kernel,
        out_shape=jax.ShapeDtypeStruct((ns, ncol), jnp.float32),
        in_specs=[vspec] * 12,
        out_specs=vspec,
    )(pat2, folded["w2"], folded["sc2"], folded["sh2"],
      folded["w3"], folded["s3"], folded["sc3"], folded["sh3"],
      folded["w4"], folded["b4"], folded["w5"], folded["b5"])
    return out[:n, :folded["n_classes"]]


if __name__ == "__main__":
    key = jax.random.PRNGKey(0)
    kx, kp = jax.random.split(key)
    B, C, H, W = 2, 3, 64, 64            # small shapes consistent with the module
    x = jax.random.normal(kx, (B, C, H, W), jnp.float32)
    params = init_params(kp, channels=C, height=H, width=W)
    folded = fold_params(params, batch=B, height=H, width=W)

    fwd = jax.jit(functools.partial(forward, folded))
    out = jax.block_until_ready(fwd(x))
    assert out.shape == (B, 2) and out.dtype == jnp.float32
    assert bool(jnp.all(jnp.isfinite(out)))
    print("KERNEL_OK")
</pallas_src>

<mosaic_0001>
module attributes {stable_mosaic.version = 11 : i64} {
  func.func @_conv_block_kernel(%arg0: memref<2048x128xbf16, #tpu.memory_space<vmem>>, %arg1: memref<128x128xbf16, #tpu.memory_space<vmem>>, %arg2: memref<1x128xf32, #tpu.memory_space<vmem>>, %arg3: memref<1x128xf32, #tpu.memory_space<vmem>>, %arg4: memref<512x128xbf16, #tpu.memory_space<vmem>>) attributes {dimension_semantics = [], scalar_prefetch = 0 : i64, scratch_operands = 0 : i64, tpu.core_type = #tpu.core_type<tc>} {
    %c0 = arith.constant 0 : index
    %c0_0 = arith.constant 0 : index
    %0 = vector.load %arg0[%c0, %c0_0] : memref<2048x128xbf16, #tpu.memory_space<vmem>>, vector<2048x128xbf16>
    %c0_1 = arith.constant 0 : index
    %c0_2 = arith.constant 0 : index
    %1 = vector.load %arg1[%c0_1, %c0_2] : memref<128x128xbf16, #tpu.memory_space<vmem>>, vector<128x128xbf16>
    %c0_3 = arith.constant 0 : index
    %c0_4 = arith.constant 0 : index
    %2 = vector.load %arg2[%c0_3, %c0_4] : memref<1x128xf32, #tpu.memory_space<vmem>>, vector<1x128xf32>
    %c0_5 = arith.constant 0 : index
    %c0_6 = arith.constant 0 : index
    %3 = vector.load %arg3[%c0_5, %c0_6] : memref<1x128xf32, #tpu.memory_space<vmem>>, vector<1x128xf32>
    %cst = arith.constant dense<0.000000e+00> : vector<2048x128xf32>
    %4 = tpu.matmul %0, %1, %cst {dimension_numbers = #tpu.dot_dimension_numbers<[1], [0], [0], [1], [0, 0, 1, 1], [], []>} : vector<2048x128xbf16>, vector<128x128xbf16>, vector<2048x128xf32> -> vector<2048x128xf32>
    %5 = vector.broadcast %2 : vector<1x128xf32> to vector<2048x128xf32>
    %6 = arith.mulf %4, %5 : vector<2048x128xf32>
    %7 = vector.broadcast %3 : vector<1x128xf32> to vector<2048x128xf32>
    %8 = arith.addf %6, %7 : vector<2048x128xf32>
    %cst_7 = arith.constant 5.000000e-01 : f32
    %9 = vector.broadcast %cst_7 : f32 to vector<2048x128xf32>
    %10 = arith.mulf %9, %8 : vector<2048x128xf32>
    %11 = math.tanh %10 : vector<2048x128xf32>
    %cst_8 = arith.constant 1.000000e+00 : f32
    %12 = vector.broadcast %cst_8 : f32 to vector<2048x128xf32>
    %13 = arith.addf %11, %12 : vector<2048x128xf32>
    %cst_9 = arith.constant 5.000000e-01 : f32
    %14 = vector.broadcast %cst_9 : f32 to vector<2048x128xf32>
    %15 = arith.mulf %14, %13 : vector<2048x128xf32>
    %16 = arith.mulf %8, %15 : vector<2048x128xf32>
    %17 = vector.extract_strided_slice %16 {offsets = [0, 0], sizes = [512, 128], strides = [1, 1]} : vector<2048x128xf32> to vector<512x128xf32>
    %18 = vector.extract_strided_slice %16 {offsets = [512, 0], sizes = [512, 128], strides = [1, 1]} : vector<2048x128xf32> to vector<512x128xf32>
    %19 = arith.maximumf %17, %18 : vector<512x128xf32>
    %20 = vector.extract_strided_slice %16 {offsets = [1024, 0], sizes = [512, 128], strides = [1, 1]} : vector<2048x128xf32> to vector<512x128xf32>
    %21 = vector.extract_strided_slice %16 {offsets = [1536, 0], sizes = [512, 128], strides = [1, 1]} : vector<2048x128xf32> to vector<512x128xf32>
    %22 = arith.maximumf %20, %21 : vector<512x128xf32>
    %23 = arith.maximumf %19, %22 : vector<512x128xf32>
    %24 = arith.truncf %23 : vector<512x128xf32> to vector<512x128xbf16>
    %c0_10 = arith.constant 0 : index
    %c0_11 = arith.constant 0 : index
    %25 = vector.load %arg4[%c0_10, %c0_11] : memref<512x128xbf16, #tpu.memory_space<vmem>>, vector<512x128xbf16>
    tpu.vector_store %arg4[%c0_10, %c0_11], %24 {strides = array<i32>} : memref<512x128xbf16, #tpu.memory_space<vmem>>, vector<512x128xbf16>,
    return
  }
}

module attributes {stable_mosaic.version = 11 : i64} {
  func.func @_tail_kernel(%arg0: memref<128x256xbf16, #tpu.memory_space<vmem>>, %arg1: memref<256x128xbf16, #tpu.memory_space<vmem>>, %arg2: memref<1x128xf32, #tpu.memory_space<vmem>>, %arg3: memref<1x128xf32, #tpu.memory_space<vmem>>, %arg4: memref<128x1152xbf16, #tpu.memory_space<vmem>>, %arg5: memref<9x32x32xbf16, #tpu.memory_space<vmem>>, %arg6: memref<1x128xf32, #tpu.memory_space<vmem>>, %arg7: memref<1x128xf32, #tpu.memory_space<vmem>>, %arg8: memref<128x128xbf16, #tpu.memory_space<vmem>>, %arg9: memref<1x128xf32, #tpu.memory_space<vmem>>, %arg10: memref<128x128xf32, #tpu.memory_space<vmem>>, %arg11: memref<1x128xf32, #tpu.memory_space<vmem>>, %arg12: memref<8x128xf32, #tpu.memory_space<vmem>>) attributes {dimension_semantics = [], scalar_prefetch = 0 : i64, scratch_operands = 0 : i64, tpu.core_type = #tpu.core_type<tc>} {
    %c0 = arith.constant 0 : index
    %c0_0 = arith.constant 0 : index
    %0 = vector.load %arg0[%c0, %c0_0] : memref<128x256xbf16, #tpu.memory_space<vmem>>, vector<128x256xbf16>
    %c0_1 = arith.constant 0 : index
    %c0_2 = arith.constant 0 : index
    %1 = vector.load %arg1[%c0_1, %c0_2] : memref<256x128xbf16, #tpu.memory_space<vmem>>, vector<256x128xbf16>
    %c0_3 = arith.constant 0 : index
    %c0_4 = arith.constant 0 : index
    %2 = vector.load %arg2[%c0_3, %c0_4] : memref<1x128xf32, #tpu.memory_space<vmem>>, vector<1x128xf32>
    %c0_5 = arith.constant 0 : index
    %c0_6 = arith.constant 0 : index
    %3 = vector.load %arg3[%c0_5, %c0_6] : memref<1x128xf32, #tpu.memory_space<vmem>>, vector<1x128xf32>
    %cst = arith.constant dense<0.000000e+00> : vector<128x128xf32>
    %4 = tpu.matmul %0, %1, %cst {dimension_numbers = #tpu.dot_dimension_numbers<[1], [0], [0], [1], [0, 0, 1, 1], [], []>} : vector<128x256xbf16>, vector<256x128xbf16>, vector<128x128xf32> -> vector<128x128xf32>
    %5 = vector.broadcast %2 : vector<1x128xf32> to vector<128x128xf32>
    %6 = arith.mulf %4, %5 : vector<128x128xf32>
    %7 = vector.broadcast %3 : vector<1x128xf32> to vector<128x128xf32>
    %8 = arith.addf %6, %7 : vector<128x128xf32>
    %cst_7 = arith.constant 5.000000e-01 : f32
    %9 = vector.broadcast %cst_7 : f32 to vector<128x128xf32>
    %10 = arith.mulf %9, %8 : vector<128x128xf32>
    %11 = math.tanh %10 : vector<128x128xf32>
    %cst_8 = arith.constant 1.000000e+00 : f32
    %12 = vector.broadcast %cst_8 : f32 to vector<128x128xf32>
    %13 = arith.addf %11, %12 : vector<128x128xf32>
    %cst_9 = arith.constant 5.000000e-01 : f32
    %14 = vector.broadcast %cst_9 : f32 to vector<128x128xf32>
    %15 = arith.mulf %14, %13 : vector<128x128xf32>
    %16 = arith.mulf %8, %15 : vector<128x128xf32>
    %17 = vector.extract_strided_slice %16 {offsets = [0, 0], sizes = [32, 128], strides = [1, 1]} : vector<128x128xf32> to vector<32x128xf32>
    %18 = vector.extract_strided_slice %16 {offsets = [32, 0], sizes = [32, 128], strides = [1, 1]} : vector<128x128xf32> to vector<32x128xf32>
    %19 = arith.maximumf %17, %18 : vector<32x128xf32>
    %20 = vector.extract_strided_slice %16 {offsets = [64, 0], sizes = [32, 128], strides = [1, 1]} : vector<128x128xf32> to vector<32x128xf32>
    %21 = vector.extract_strided_slice %16 {offsets = [96, 0], sizes = [32, 128], strides = [1, 1]} : vector<128x128xf32> to vector<32x128xf32>
    %22 = arith.maximumf %20, %21 : vector<32x128xf32>
    %23 = arith.maximumf %19, %22 : vector<32x128xf32>
    %24 = arith.truncf %23 : vector<32x128xf32> to vector<32x128xbf16>
    %c0_10 = arith.constant 0 : index
    %c0_11 = arith.constant 0 : index
    %25 = vector.load %arg4[%c0_10, %c0_11] : memref<128x1152xbf16, #tpu.memory_space<vmem>>, vector<128x1152xbf16>
    %cst_12 = arith.constant dense<0.000000e+00> : vector<32x1152xf32>
    %26 = tpu.matmul %24, %25, %cst_12 {dimension_numbers = #tpu.dot_dimension_numbers<[1], [0], [0], [1], [0, 0, 1, 1], [], []>} : vector<32x128xbf16>, vector<128x1152xbf16>, vector<32x1152xf32> -> vector<32x1152xf32>
    %27 = arith.truncf %26 : vector<32x1152xf32> to vector<32x1152xbf16>
    %c0_13 = arith.constant 0 : index
    %c0_14 = arith.constant 0 : index
    %c0_15 = arith.constant 0 : index
    %28 = vector.load %arg5[%c0_13, %c0_14, %c0_15] : memref<9x32x32xbf16, #tpu.memory_space<vmem>>, vector<1x32x32xbf16>
    %29 = vector.shape_cast %28 : vector<1x32x32xbf16> to vector<32x32xbf16>
    %30 = vector.extract_strided_slice %27 {offsets = [0, 0], sizes = [32, 128], strides = [1, 1]} : vector<32x1152xbf16> to vector<32x128xbf16>
    %cst_16 = arith.constant dense<0.000000e+00> : vector<32x128xf32>
    %31 = tpu.matmul %29, %30, %cst_16 {dimension_numbers = #tpu.dot_dimension_numbers<[1], [0], [0], [1], [0, 0, 1, 1], [], []>} : vector<32x32xbf16>, vector<32x128xbf16>, vector<32x128xf32> -> vector<32x128xf32>
    %c1 = arith.constant 1 : index
    %c0_17 = arith.constant 0 : index
    %c0_18 = arith.constant 0 : index
    %32 = vector.load %arg5[%c1, %c0_17, %c0_18] : memref<9x32x32xbf16, #tpu.memory_space<vmem>>, vector<1x32x32xbf16>
    %33 = vector.shape_cast %32 : vector<1x32x32xbf16> to vector<32x32xbf16>
    %34 = vector.extract_strided_slice %27 {offsets = [0, 128], sizes = [32, 128], strides = [1, 1]} : vector<32x1152xbf16> to vector<32x128xbf16>
    %cst_19 = arith.constant dense<0.000000e+00> : vector<32x128xf32>
    %35 = tpu.matmul %33, %34, %cst_19 {dimension_numbers = #tpu.dot_dimension_numbers<[1], [0], [0], [1], [0, 0, 1, 1], [], []>} : vector<32x32xbf16>, vector<32x128xbf16>, vector<32x128xf32> -> vector<32x128xf32>
    %36 = arith.addf %31, %35 : vector<32x128xf32>
    %c2 = arith.constant 2 : index
    %c0_20 = arith.constant 0 : index
    %c0_21 = arith.constant 0 : index
    %37 = vector.load %arg5[%c2, %c0_20, %c0_21] : memref<9x32x32xbf16, #tpu.memory_space<vmem>>, vector<1x32x32xbf16>
    %38 = vector.shape_cast %37 : vector<1x32x32xbf16> to vector<32x32xbf16>
    %39 = vector.extract_strided_slice %27 {offsets = [0, 256], sizes = [32, 128], strides = [1, 1]} : vector<32x1152xbf16> to vector<32x128xbf16>
    %cst_22 = arith.constant dense<0.000000e+00> : vector<32x128xf32>
    %40 = tpu.matmul %38, %39, %cst_22 {dimension_numbers = #tpu.dot_dimension_numbers<[1], [0], [0], [1], [0, 0, 1, 1], [], []>} : vector<32x32xbf16>, vector<32x128xbf16>, vector<32x128xf32> -> vector<32x128xf32>
    %41 = arith.addf %36, %40 : vector<32x128xf32>
    %c3 = arith.constant 3 : index
    %c0_23 = arith.constant 0 : index
    %c0_24 = arith.constant 0 : index
    %42 = vector.load %arg5[%c3, %c0_23, %c0_24] : memref<9x32x32xbf16, #tpu.memory_space<vmem>>, vector<1x32x32xbf16>
    %43 = vector.shape_cast %42 : vector<1x32x32xbf16> to vector<32x32xbf16>
    %44 = vector.extract_strided_slice %27 {offsets = [0, 384], sizes = [32, 128], strides = [1, 1]} : vector<32x1152xbf16> to vector<32x128xbf16>
    %cst_25 = arith.constant dense<0.000000e+00> : vector<32x128xf32>
    %45 = tpu.matmul %43, %44, %cst_25 {dimension_numbers = #tpu.dot_dimension_numbers<[1], [0], [0], [1], [0, 0, 1, 1], [], []>} : vector<32x32xbf16>, vector<32x128xbf16>, vector<32x128xf32> -> vector<32x128xf32>
    %46 = arith.addf %41, %45 : vector<32x128xf32>
    %c4 = arith.constant 4 : index
    %c0_26 = arith.constant 0 : index
    %c0_27 = arith.constant 0 : index
    %47 = vector.load %arg5[%c4, %c0_26, %c0_27] : memref<9x32x32xbf16, #tpu.memory_space<vmem>>, vector<1x32x32xbf16>
    %48 = vector.shape_cast %47 : vector<1x32x32xbf16> to vector<32x32xbf16>
    %49 = vector.extract_strided_slice %27 {offsets = [0, 512], sizes = [32, 128], strides = [1, 1]} : vector<32x1152xbf16> to vector<32x128xbf16>
    %cst_28 = arith.constant dense<0.000000e+00> : vector<32x128xf32>
    %50 = tpu.matmul %48, %49, %cst_28 {dimension_numbers = #tpu.dot_dimension_numbers<[1], [0], [0], [1], [0, 0, 1, 1], [], []>} : vector<32x32xbf16>, vector<32x128xbf16>, vector<32x128xf32> -> vector<32x128xf32>
    %51 = arith.addf %46, %50 : vector<32x128xf32>
    %c5 = arith.constant 5 : index
    %c0_29 = arith.constant 0 : index
    %c0_30 = arith.constant 0 : index
    %52 = vector.load %arg5[%c5, %c0_29, %c0_30] : memref<9x32x32xbf16, #tpu.memory_space<vmem>>, vector<1x32x32xbf16>
    %53 = vector.shape_cast %52 : vector<1x32x32xbf16> to vector<32x32xbf16>
    %54 = vector.extract_strided_slice %27 {offsets = [0, 640], sizes = [32, 128], strides = [1, 1]} : vector<32x1152xbf16> to vector<32x128xbf16>
    %cst_31 = arith.constant dense<0.000000e+00> : vector<32x128xf32>
    %55 = tpu.matmul %53, %54, %cst_31 {dimension_numbers = #tpu.dot_dimension_numbers<[1], [0], [0], [1], [0, 0, 1, 1], [], []>} : vector<32x32xbf16>, vector<32x128xbf16>, vector<32x128xf32> -> vector<32x128xf32>
    %56 = arith.addf %51, %55 : vector<32x128xf32>
    %c6 = arith.constant 6 : index
    %c0_32 = arith.constant 0 : index
    %c0_33 = arith.constant 0 : index
    %57 = vector.load %arg5[%c6, %c0_32, %c0_33] : memref<9x32x32xbf16, #tpu.memory_space<vmem>>, vector<1x32x32xbf16>
    %58 = vector.shape_cast %57 : vector<1x32x32xbf16> to vector<32x32xbf16>
    %59 = vector.extract_strided_slice %27 {offsets = [0, 768], sizes = [32, 128], strides = [1, 1]} : vector<32x1152xbf16> to vector<32x128xbf16>
    %cst_34 = arith.constant dense<0.000000e+00> : vector<32x128xf32>
    %60 = tpu.matmul %58, %59, %cst_34 {dimension_numbers = #tpu.dot_dimension_numbers<[1], [0], [0], [1], [0, 0, 1, 1], [], []>} : vector<32x32xbf16>, vector<32x128xbf16>, vector<32x128xf32> -> vector<32x128xf32>
    %61 = arith.addf %56, %60 : vector<32x128xf32>
    %c7 = arith.constant 7 : index
    %c0_35 = arith.constant 0 : index
    %c0_36 = arith.constant 0 : index
    %62 = vector.load %arg5[%c7, %c0_35, %c0_36] : memref<9x32x32xbf16, #tpu.memory_space<vmem>>, vector<1x32x32xbf16>
    %63 = vector.shape_cast %62 : vector<1x32x32xbf16> to vector<32x32xbf16>
    %64 = vector.extract_strided_slice %27 {offsets = [0, 896], sizes = [32, 128], strides = [1, 1]} : vector<32x1152xbf16> to vector<32x128xbf16>
    %cst_37 = arith.constant dense<0.000000e+00> : vector<32x128xf32>
    %65 = tpu.matmul %63, %64, %cst_37 {dimension_numbers = #tpu.dot_dimension_numbers<[1], [0], [0], [1], [0, 0, 1, 1], [], []>} : vector<32x32xbf16>, vector<32x128xbf16>, vector<32x128xf32> -> vector<32x128xf32>
    %66 = arith.addf %61, %65 : vector<32x128xf32>
    %c8 = arith.constant 8 : index
    %c0_38 = arith.constant 0 : index
    %c0_39 = arith.constant 0 : index
    %67 = vector.load %arg5[%c8, %c0_38, %c0_39] : memref<9x32x32xbf16, #tpu.memory_space<vmem>>, vector<1x32x32xbf16>
    %68 = vector.shape_cast %67 : vector<1x32x32xbf16> to vector<32x32xbf16>
    %69 = vector.extract_strided_slice %27 {offsets = [0, 1024], sizes = [32, 128], strides = [1, 1]} : vector<32x1152xbf16> to vector<32x128xbf16>
    %cst_40 = arith.constant dense<0.000000e+00> : vector<32x128xf32>
    %70 = tpu.matmul %68, %69, %cst_40 {dimension_numbers = #tpu.dot_dimension_numbers<[1], [0], [0], [1], [0, 0, 1, 1], [], []>} : vector<32x32xbf16>, vector<32x128xbf16>, vector<32x128xf32> -> vector<32x128xf32>
    %71 = arith.addf %66, %70 : vector<32x128xf32>
    %c0_41 = arith.constant 0 : index
    %c0_42 = arith.constant 0 : index
    %72 = vector.load %arg6[%c0_41, %c0_42] : memref<1x128xf32, #tpu.memory_space<vmem>>, vector<1x128xf32>
    %73 = vector.broadcast %72 : vector<1x128xf32> to vector<32x128xf32>
    %74 = arith.mulf %71, %73 : vector<32x128xf32>
    %c0_43 = arith.constant 0 : index
    %c0_44 = arith.constant 0 : index
    %75 = vector.load %arg7[%c0_43, %c0_44] : memref<1x128xf32, #tpu.memory_space<vmem>>, vector<1x128xf32>
    %76 = vector.broadcast %75 : vector<1x128xf32> to vector<32x128xf32>
    %77 = arith.addf %74, %76 : vector<32x128xf32>
    %cst_45 = arith.constant 5.000000e-01 : f32
    %78 = vector.broadcast %cst_45 : f32 to vector<32x128xf32>
    %79 = arith.mulf %78, %77 : vector<32x128xf32>
    %80 = math.tanh %79 : vector<32x128xf32>
    %cst_46 = arith.constant 1.000000e+00 : f32
    %81 = vector.broadcast %cst_46 : f32 to vector<32x128xf32>
    %82 = arith.addf %80, %81 : vector<32x128xf32>
    %cst_47 = arith.constant 5.000000e-01 : f32
    %83 = vector.broadcast %cst_47 : f32 to vector<32x128xf32>
    %84 = arith.mulf %83, %82 : vector<32x128xf32>
    %85 = arith.mulf %77, %84 : vector<32x128xf32>
    %86 = vector.extract_strided_slice %85 {offsets = [0, 0], sizes = [8, 128], strides = [1, 1]} : vector<32x128xf32> to vector<8x128xf32>
    %87 = vector.extract_strided_slice %85 {offsets = [8, 0], sizes = [8, 128], strides = [1, 1]} : vector<32x128xf32> to vector<8x128xf32>
    %88 = arith.maximumf %86, %87 : vector<8x128xf32>
    %89 = vector.extract_strided_slice %85 {offsets = [16, 0], sizes = [8, 128], strides = [1, 1]} : vector<32x128xf32> to vector<8x128xf32>
    %90 = vector.extract_strided_slice %85 {offsets = [24, 0], sizes = [8, 128], strides = [1, 1]} : vector<32x128xf32> to vector<8x128xf32>
    %91 = arith.maximumf %89, %90 : vector<8x128xf32>
    %92 = arith.maximumf %88, %91 : vector<8x128xf32>
    %93 = arith.truncf %92 : vector<8x128xf32> to vector<8x128xbf16>
    %c0_48 = arith.constant 0 : index
    %c0_49 = arith.constant 0 : index
    %94 = vector.load %arg8[%c0_48, %c0_49] : memref<128x128xbf16, #tpu.memory_space<vmem>>, vector<128x128xbf16>
    %cst_50 = arith.constant dense<0.000000e+00> : vector<8x128xf32>
    %95 = tpu.matmul %93, %94, %cst_50 {dimension_numbers = #tpu.dot_dimension_numbers<[1], [0], [0], [1], [0, 0, 1, 1], [], []>} : vector<8x128xbf16>, vector<128x128xbf16>, vector<8x128xf32> -> vector<8x128xf32>
    %c0_51 = arith.constant 0 : index
    %c0_52 = arith.constant 0 : index
    %96 = vector.load %arg9[%c0_51, %c0_52] : memref<1x128xf32, #tpu.memory_space<vmem>>, vector<1x128xf32>
    %97 = vector.broadcast %96 : vector<1x128xf32> to vector<8x128xf32>
    %98 = arith.addf %95, %97 : vector<8x128xf32>
    %cst_53 = arith.constant dense<0xFF800000> : vector<8xf32>
    %99 = vector.multi_reduction <maximumf>, %98, %cst_53 [1] : vector<8x128xf32> to vector<8xf32>
    %100 = vector.shape_cast %99 : vector<8xf32> to vector<8x1xf32>
    %101 = vector.broadcast %100 : vector<8x1xf32> to vector<8x128xf32>
    %102 = arith.subf %98, %101 : vector<8x128xf32>
    %103 = math.exp %102 : vector<8x128xf32>
    %cst_54 = arith.constant dense<0.000000e+00> : vector<8xf32>
    %104 = vector.multi_reduction <add>, %103, %cst_54 [1] : vector<8x128xf32> to vector<8xf32>
    %105 = vector.shape_cast %104 : vector<8xf32> to vector<8x1xf32>
    %106 = vector.broadcast %105 : vector<8x1xf32> to vector<8x128xf32>
    %107 = arith.divf %103, %106 : vector<8x128xf32>
    %c0_55 = arith.constant 0 : index
    %c0_56 = arith.constant 0 : index
    %108 = vector.load %arg10[%c0_55, %c0_56] : memref<128x128xf32, #tpu.memory_space<vmem>>, vector<128x128xf32>
    %cst_57 = arith.constant dense<0.000000e+00> : vector<8x128xf32>
    %109 = tpu.matmul %107, %108, %cst_57 {dimension_numbers = #tpu.dot_dimension_numbers<[1], [0], [0], [1], [0, 0, 1, 1], [], []>} : vector<8x128xf32>, vector<128x128xf32>, vector<8x128xf32> -> vector<8x128xf32>
    %c0_58 = arith.constant 0 : index
    %c0_59 = arith.constant 0 : index
    %110 = vector.load %arg11[%c0_58, %c0_59] : memref<1x128xf32, #tpu.memory_space<vmem>>, vector<1x128xf32>
    %111 = vector.broadcast %110 : vector<1x128xf32> to vector<8x128xf32>
    %112 = arith.addf %109, %111 : vector<8x128xf32>
    %c0_60 = arith.constant 0 : index
    %c0_61 = arith.constant 0 : index
    %113 = vector.load %arg12[%c0_60, %c0_61] : memref<8x128xf32, #tpu.memory_space<vmem>>, vector<8x128xf32>
    tpu.vector_store %arg12[%c0_60, %c0_61], %112 {strides = array<i32>} : memref<8x128xf32, #tpu.memory_space<vmem>>, vector<8x128xf32>,
    return
  }
}

</mosaic_0001>

<llo_original>
// kernel: forward.2
$region0: #{forward.2}
  #allocation0 [shape = 'u32[]', space=smem, size = 0x4, offset = 0x4, fixed_abs, tag = 'smem constant byte address 0x4 - core index']
  #allocation1 [shape = 'u32[144,128]{1,0:T(1,128)}', space=vmem, size = 0x12000, scoped, tag = 'internal scratch']
  %s0 = inlined_call_operand.vmem [shape: bf16[2048,128], index: 0, kind: input, shape index: {}]
  %s1 = inlined_call_operand.vmem [shape: bf16[128,128], index: 1, kind: input, shape index: {}]
  %s2 = inlined_call_operand.vmem [shape: f32[1,128], index: 2, kind: input, shape index: {}]
  %s3 = inlined_call_operand.vmem [shape: f32[1,128], index: 3, kind: input, shape index: {}]
  %s4 = inlined_call_operand.vmem [shape: bf16[512,128], index: 4, kind: output, shape index: {}]
  %s5 = sld [smem:[#allocation0]]
  $region26: #{forward.2} parent=0
    _
  %s7 = ssub.s32 1, %s5
  %s8 = scalar_select 0, %s7, %s5
  // Predicated region
  $region2: #{forward.2} parent=0 // pred_check
    _
  $region3: #{forward.2} parent=0 // pred_check_branch
    %10 = sbr.rel (0) target = $region5
  $region4: #{forward.2} parent=0 // pred_region
    _
  $region5: #{forward.2} parent=0 // pred_fallthru
    _
  // Predicated region
  $region6: #{forward.2} parent=0 // pred_check
    _
  $region7: #{forward.2} parent=0 // pred_check_branch
    %12 = sbr.rel (0) target = $region9
  $region8: #{forward.2} parent=0 // pred_region
    _
  $region9: #{forward.2} parent=0 // pred_fallthru
    _
  // Predicated region
  $region10: #{forward.2} parent=0 // pred_check
    _
  $region11: #{forward.2} parent=0 // pred_check_branch
    %14 = sbr.rel (0) target = $region13
  $region12: #{forward.2} parent=0 // pred_region
    _
  $region13: #{forward.2} parent=0 // pred_fallthru
    _
  // Predicated region
  $region14: #{forward.2} parent=0 // pred_check
    _
  $region15: #{forward.2} parent=0 // pred_check_branch
    %16 = sbr.rel (0) target = $region17
  $region16: #{forward.2} parent=0 // pred_region
    _
  $region17: #{forward.2} parent=0 // pred_fallthru
    _
  %v18 = vld [vmem:[%s0] sm:$0xf]
  %v19 = vld [vmem:[%s0 + $0x4] sm:$0xf]
  %v20 = vld [vmem:[%s0 + $0x8] sm:$0xf]
  %v21 = vld [vmem:[%s0 + $0xc] sm:$0xf]
  %v22 = vld [vmem:[%s0 + $0x10] sm:$0xf]
  %v23 = vld [vmem:[%s0 + $0x14] sm:$0xf]
  %v24 = vld [vmem:[%s0 + $0x18] sm:$0xf]
  %v25 = vld [vmem:[%s0 + $0x1c] sm:$0xf]
  %v26 = vld [vmem:[%s0 + $0x20] sm:$0xf]
  %v27 = vld [vmem:[%s0 + $0x24] sm:$0xf]
  %v28 = vld [vmem:[%s0 + $0x28] sm:$0xf]
  %v29 = vld [vmem:[%s0 + $0x2c] sm:$0xf]
  %v30 = vld [vmem:[%s0 + $0x30] sm:$0xf]
  %v31 = vld [vmem:[%s0 + $0x34] sm:$0xf]
  %v32 = vld [vmem:[%s0 + $0x38] sm:$0xf]
  %v33 = vld [vmem:[%s0 + $0x3c] sm:$0xf]
  %v34 = vld [vmem:[%s0 + $0x40] sm:$0xf]
  %v35 = vld [vmem:[%s0 + $0x44] sm:$0xf]
  %v36 = vld [vmem:[%s0 + $0x48] sm:$0xf]
  %v37 = vld [vmem:[%s0 + $0x4c] sm:$0xf]
  %v38 = vld [vmem:[%s0 + $0x50] sm:$0xf]
  %v39 = vld [vmem:[%s0 + $0x54] sm:$0xf]
  %v40 = vld [vmem:[%s0 + $0x58] sm:$0xf]
  %v41 = vld [vmem:[%s0 + $0x5c] sm:$0xf]
  %v42 = vld [vmem:[%s0 + $0x60] sm:$0xf]
  %v43 = vld [vmem:[%s0 + $0x64] sm:$0xf]
  %v44 = vld [vmem:[%s0 + $0x68] sm:$0xf]
  %v45 = vld [vmem:[%s0 + $0x6c] sm:$0xf]
  %v46 = vld [vmem:[%s0 + $0x70] sm:$0xf]
  %v47 = vld [vmem:[%s0 + $0x74] sm:$0xf]
  %v48 = vld [vmem:[%s0 + $0x78] sm:$0xf]
  %v49 = vld [vmem:[%s0 + $0x7c] sm:$0xf]
  %v50 = vld [vmem:[%s0 + $0x80] sm:$0xf]
  %v51 = vld [vmem:[%s0 + $0x84] sm:$0xf]
  %v52 = vld [vmem:[%s0 + $0x88] sm:$0xf]
  %v53 = vld [vmem:[%s0 + $0x8c] sm:$0xf]
  %v54 = vld [vmem:[%s0 + $0x90] sm:$0xf]
  %v55 = vld [vmem:[%s0 + $0x94] sm:$0xf]
  %v56 = vld [vmem:[%s0 + $0x98] sm:$0xf]
  %v57 = vld [vmem:[%s0 + $0x9c] sm:$0xf]
  %v58 = vld [vmem:[%s0 + $0xa0] sm:$0xf]
  %v59 = vld [vmem:[%s0 + $0xa4] sm:$0xf]
  %v60 = vld [vmem:[%s0 + $0xa8] sm:$0xf]
  %v61 = vld [vmem:[%s0 + $0xac] sm:$0xf]
  %v62 = vld [vmem:[%s0 + $0xb0] sm:$0xf]
  %v63 = vld [vmem:[%s0 + $0xb4] sm:$0xf]
  %v64 = vld [vmem:[%s0 + $0xb8] sm:$0xf]
  %v65 = vld [vmem:[%s0 + $0xbc] sm:$0xf]
  %v66 = vld [vmem:[%s0 + $0xc0] sm:$0xf]
  %v67 = vld [vmem:[%s0 + $0xc4] sm:$0xf]
  %v68 = vld [vmem:[%s0 + $0xc8] sm:$0xf]
  %v69 = vld [vmem:[%s0 + $0xcc] sm:$0xf]
  %v70 = vld [vmem:[%s0 + $0xd0] sm:$0xf]
  %v71 = vld [vmem:[%s0 + $0xd4] sm:$0xf]
  %v72 = vld [vmem:[%s0 + $0xd8] sm:$0xf]
  %v73 = vld [vmem:[%s0 + $0xdc] sm:$0xf]
  %v74 = vld [vmem:[%s0 + $0xe0] sm:$0xf]
  %v75 = vld [vmem:[%s0 + $0xe4] sm:$0xf]
  %v76 = vld [vmem:[%s0 + $0xe8] sm:$0xf]
  %v77 = vld [vmem:[%s0 + $0xec] sm:$0xf]
  %v78 = vld [vmem:[%s0 + $0xf0] sm:$0xf]
  %v79 = vld [vmem:[%s0 + $0xf4] sm:$0xf]
  %v80 = vld [vmem:[%s0 + $0xf8] sm:$0xf]
  %v81 = vld [vmem:[%s0 + $0xfc] sm:$0xf]
  %v82 = vld [vmem:[%s0 + $0x100] sm:$0xf]
  %v83 = vld [vmem:[%s0 + $0x104] sm:$0xf]
  %v84 = vld [vmem:[%s0 + $0x108] sm:$0xf]
  %v85 = vld [vmem:[%s0 + $0x10c] sm:$0xf]
  %v86 = vld [vmem:[%s0 + $0x110] sm:$0xf]
  %v87 = vld [vmem:[%s0 + $0x114] sm:$0xf]
  %v88 = vld [vmem:[%s0 + $0x118] sm:$0xf]
  %v89 = vld [vmem:[%s0 + $0x11c] sm:$0xf]
  %v90 = vld [vmem:[%s0 + $0x120] sm:$0xf]
  %v91 = vld [vmem:[%s0 + $0x124] sm:$0xf]
  %v92 = vld [vmem:[%s0 + $0x128] sm:$0xf]
  %v93 = vld [vmem:[%s0 + $0x12c] sm:$0xf]
  %v94 = vld [vmem:[%s0 + $0x130] sm:$0xf]
  %v95 = vld [vmem:[%s0 + $0x134] sm:$0xf]
  %v96 = vld [vmem:[%s0 + $0x138] sm:$0xf]
  %v97 = vld [vmem:[%s0 + $0x13c] sm:$0xf]
  %v98 = vld [vmem:[%s0 + $0x140] sm:$0xf]
  %v99 = vld [vmem:[%s0 + $0x144] sm:$0xf]
  %v100 = vld [vmem:[%s0 + $0x148] sm:$0xf]
  %v101 = vld [vmem:[%s0 + $0x14c] sm:$0xf]
  %v102 = vld [vmem:[%s0 + $0x150] sm:$0xf]
  %v103 = vld [vmem:[%s0 + $0x154] sm:$0xf]
  %v104 = vld [vmem:[%s0 + $0x158] sm:$0xf]
  %v105 = vld [vmem:[%s0 + $0x15c] sm:$0xf]
  %v106 = vld [vmem:[%s0 + $0x160] sm:$0xf]
  %v107 = vld [vmem:[%s0 + $0x164] sm:$0xf]
  %v108 = vld [vmem:[%s0 + $0x168] sm:$0xf]
  %v109 = vld [vmem:[%s0 + $0x16c] sm:$0xf]
  %v110 = vld [vmem:[%s0 + $0x170] sm:$0xf]
  %v111 = vld [vmem:[%s0 + $0x174] sm:$0xf]
  %v112 = vld [vmem:[%s0 + $0x178] sm:$0xf]
  %v113 = vld [vmem:[%s0 + $0x17c] sm:$0xf]
  %v114 = vld [vmem:[%s0 + $0x180] sm:$0xf]
  %v115 = vld [vmem:[%s0 + $0x184] sm:$0xf]
  %v116 = vld [vmem:[%s0 + $0x188] sm:$0xf]
  %v117 = vld [vmem:[%s0 + $0x18c] sm:$0xf]
  %v118 = vld [vmem:[%s0 + $0x190] sm:$0xf]
  %v119 = vld [vmem:[%s0 + $0x194] sm:$0xf]
  %v120 = vld [vmem:[%s0 + $0x198] sm:$0xf]
  %v121 = vld [vmem:[%s0 + $0x19c] sm:$0xf]
  %v122 = vld [vmem:[%s0 + $0x1a0] sm:$0xf]
  %v123 = vld [vmem:[%s0 + $0x1a4] sm:$0xf]
  %v124 = vld [vmem:[%s0 + $0x1a8] sm:$0xf]
  %v125 = vld [vmem:[%s0 + $0x1ac] sm:$0xf]
  %v126 = vld [vmem:[%s0 + $0x1b0] sm:$0xf]
  %v127 = vld [vmem:[%s0 + $0x1b4] sm:$0xf]
  %v128 = vld [vmem:[%s0 + $0x1b8] sm:$0xf]
  %v129 = vld [vmem:[%s0 + $0x1bc] sm:$0xf]
  %v130 = vld [vmem:[%s0 + $0x1c0] sm:$0xf]
  %v131 = vld [vmem:[%s0 + $0x1c4] sm:$0xf]
  %v132 = vld [vmem:[%s0 + $0x1c8] sm:$0xf]
  %v133 = vld [vmem:[%s0 + $0x1cc] sm:$0xf]
  %v134 = vld [vmem:[%s0 + $0x1d0] sm:$0xf]
  %v135 = vld [vmem:[%s0 + $0x1d4] sm:$0xf]
  %v136 = vld [vmem:[%s0 + $0x1d8] sm:$0xf]
  %v137 = vld [vmem:[%s0 + $0x1dc] sm:$0xf]
  %v138 = vld [vmem:[%s0 + $0x1e0] sm:$0xf]
  %v139 = vld [vmem:[%s0 + $0x1e4] sm:$0xf]
  %v140 = vld [vmem:[%s0 + $0x1e8] sm:$0xf]
  %v141 = vld [vmem:[%s0 + $0x1ec] sm:$0xf]
  %v142 = vld [vmem:[%s0 + $0x1f0] sm:$0xf]
  %v143 = vld [vmem:[%s0 + $0x1f4] sm:$0xf]
  %v144 = vld [vmem:[%s0 + $0x1f8] sm:$0xf]
  %v145 = vld [vmem:[%s0 + $0x1fc] sm:$0xf]
  %v146 = vld [vmem:[%s0 + $0x200] sm:$0xf]
  %v147 = vld [vmem:[%s0 + $0x204] sm:$0xf]
  %v148 = vld [vmem:[%s0 + $0x208] sm:$0xf]
  %v149 = vld [vmem:[%s0 + $0x20c] sm:$0xf]
  %v150 = vld [vmem:[%s0 + $0x210] sm:$0xf]
  %v151 = vld [vmem:[%s0 + $0x214] sm:$0xf]
  %v152 = vld [vmem:[%s0 + $0x218] sm:$0xf]
  %v153 = vld [vmem:[%s0 + $0x21c] sm:$0xf]
  %v154 = vld [vmem:[%s0 + $0x220] sm:$0xf]
  %v155 = vld [vmem:[%s0 + $0x224] sm:$0xf]
  %v156 = vld [vmem:[%s0 + $0x228] sm:$0xf]
  %v157 = vld [vmem:[%s0 + $0x22c] sm:$0xf]
  %v158 = vld [vmem:[%s0 + $0x230] sm:$0xf]
  %v159 = vld [vmem:[%s0 + $0x234] sm:$0xf]
  %v160 = vld [vmem:[%s0 + $0x238] sm:$0xf]
  %v161 = vld [vmem:[%s0 + $0x23c] sm:$0xf]
  %v162 = vld [vmem:[%s0 + $0x240] sm:$0xf]
  %v163 = vld [vmem:[%s0 + $0x244] sm:$0xf]
  %v164 = vld [vmem:[%s0 + $0x248] sm:$0xf]
  %v165 = vld [vmem:[%s0 + $0x24c] sm:$0xf]
  %v166 = vld [vmem:[%s0 + $0x250] sm:$0xf]
  %v167 = vld [vmem:[%s0 + $0x254] sm:$0xf]
  %v168 = vld [vmem:[%s0 + $0x258] sm:$0xf]
  %v169 = vld [vmem:[%s0 + $0x25c] sm:$0xf]
  %v170 = vld [vmem:[%s0 + $0x260] sm:$0xf]
  %v171 = vld [vmem:[%s0 + $0x264] sm:$0xf]
  %v172 = vld [vmem:[%s0 + $0x268] sm:$0xf]
  %v173 = vld [vmem:[%s0 + $0x26c] sm:$0xf]
  %v174 = vld [vmem:[%s0 + $0x270] sm:$0xf]
  %v175 = vld [vmem:[%s0 + $0x274] sm:$0xf]
  %v176 = vld [vmem:[%s0 + $0x278] sm:$0xf]
  %v177 = vld [vmem:[%s0 + $0x27c] sm:$0xf]
  %v178 = vld [vmem:[%s0 + $0x280] sm:$0xf]
  %v179 = vld [vmem:[%s0 + $0x284] sm:$0xf]
  %v180 = vld [vmem:[%s0 + $0x288] sm:$0xf]
  %v181 = vld [vmem:[%s0 + $0x28c] sm:$0xf]
  %v182 = vld [vmem:[%s0 + $0x290] sm:$0xf]
  %v183 = vld [vmem:[%s0 + $0x294] sm:$0xf]
  %v184 = vld [vmem:[%s0 + $0x298] sm:$0xf]
  %v185 = vld [vmem:[%s0 + $0x29c] sm:$0xf]
  %v186 = vld [vmem:[%s0 + $0x2a0] sm:$0xf]
  %v187 = vld [vmem:[%s0 + $0x2a4] sm:$0xf]
  %v188 = vld [vmem:[%s0 + $0x2a8] sm:$0xf]
  %v189 = vld [vmem:[%s0 + $0x2ac] sm:$0xf]
  %v190 = vld [vmem:[%s0 + $0x2b0] sm:$0xf]
  %v191 = vld [vmem:[%s0 + $0x2b4] sm:$0xf]
  %v192 = vld [vmem:[%s0 + $0x2b8] sm:$0xf]
  %v193 = vld [vmem:[%s0 + $0x2bc] sm:$0xf]
  %v194 = vld [vmem:[%s0 + $0x2c0] sm:$0xf]
  %v195 = vld [vmem:[%s0 + $0x2c4] sm:$0xf]
  %v196 = vld [vmem:[%s0 + $0x2c8] sm:$0xf]
  %v197 = vld [vmem:[%s0 + $0x2cc] sm:$0xf]
  %v198 = vld [vmem:[%s0 + $0x2d0] sm:$0xf]
  %v199 = vld [vmem:[%s0 + $0x2d4] sm:$0xf]
  %v200 = vld [vmem:[%s0 + $0x2d8] sm:$0xf]
  %v201 = vld [vmem:[%s0 + $0x2dc] sm:$0xf]
  %v202 = vld [vmem:[%s0 + $0x2e0] sm:$0xf]
  %v203 = vld [vmem:[%s0 + $0x2e4] sm:$0xf]
  %v204 = vld [vmem:[%s0 + $0x2e8] sm:$0xf]
  %v205 = vld [vmem:[%s0 + $0x2ec] sm:$0xf]
  %v206 = vld [vmem:[%s0 + $0x2f0] sm:$0xf]
  %v207 = vld [vmem:[%s0 + $0x2f4] sm:$0xf]
  %v208 = vld [vmem:[%s0 + $0x2f8] sm:$0xf]
  %v209 = vld [vmem:[%s0 + $0x2fc] sm:$0xf]
  %v210 = vld [vmem:[%s0 + $0x300] sm:$0xf]
  %v211 = vld [vmem:[%s0 + $0x304] sm:$0xf]
  %v212 = vld [vmem:[%s0 + $0x308] sm:$0xf]
  %v213 = vld [vmem:[%s0 + $0x30c] sm:$0xf]
  %v214 = vld [vmem:[%s0 + $0x310] sm:$0xf]
  %v215 = vld [vmem:[%s0 + $0x314] sm:$0xf]
  %v216 = vld [vmem:[%s0 + $0x318] sm:$0xf]
  %v217 = vld [vmem:[%s0 + $0x31c] sm:$0xf]
  %v218 = vld [vmem:[%s0 + $0x320] sm:$0xf]
  %v219 = vld [vmem:[%s0 + $0x324] sm:$0xf]
  %v220 = vld [vmem:[%s0 + $0x328] sm:$0xf]
  %v221 = vld [vmem:[%s0 + $0x32c] sm:$0xf]
  %v222 = vld [vmem:[%s0 + $0x330] sm:$0xf]
  %v223 = vld [vmem:[%s0 + $0x334] sm:$0xf]
  %v224 = vld [vmem:[%s0 + $0x338] sm:$0xf]
  %v225 = vld [vmem:[%s0 + $0x33c] sm:$0xf]
  %v226 = vld [vmem:[%s0 + $0x340] sm:$0xf]
  %v227 = vld [vmem:[%s0 + $0x344] sm:$0xf]
  %v228 = vld [vmem:[%s0 + $0x348] sm:$0xf]
  %v229 = vld [vmem:[%s0 + $0x34c] sm:$0xf]
  %v230 = vld [vmem:[%s0 + $0x350] sm:$0xf]
  %v231 = vld [vmem:[%s0 + $0x354] sm:$0xf]
  %v232 = vld [vmem:[%s0 + $0x358] sm:$0xf]
  %v233 = vld [vmem:[%s0 + $0x35c] sm:$0xf]
  %v234 = vld [vmem:[%s0 + $0x360] sm:$0xf]
  %v235 = vld [vmem:[%s0 + $0x364] sm:$0xf]
  %v236 = vld [vmem:[%s0 + $0x368] sm:$0xf]
  %v237 = vld [vmem:[%s0 + $0x36c] sm:$0xf]
  %v238 = vld [vmem:[%s0 + $0x370] sm:$0xf]
  %v239 = vld [vmem:[%s0 + $0x374] sm:$0xf]
  %v240 = vld [vmem:[%s0 + $0x378] sm:$0xf]
  %v241 = vld [vmem:[%s0 + $0x37c] sm:$0xf]
  %v242 = vld [vmem:[%s0 + $0x380] sm:$0xf]
  %v243 = vld [vmem:[%s0 + $0x384] sm:$0xf]
  %v244 = vld [vmem:[%s0 + $0x388] sm:$0xf]
  %v245 = vld [vmem:[%s0 + $0x38c] sm:$0xf]
  %v246 = vld [vmem:[%s0 + $0x390] sm:$0xf]
  %v247 = vld [vmem:[%s0 + $0x394] sm:$0xf]
  %v248 = vld [vmem:[%s0 + $0x398] sm:$0xf]
  %v249 = vld [vmem:[%s0 + $0x39c] sm:$0xf]
  %v250 = vld [vmem:[%s0 + $0x3a0] sm:$0xf]
  %v251 = vld [vmem:[%s0 + $0x3a4] sm:$0xf]
  %v252 = vld [vmem:[%s0 + $0x3a8] sm:$0xf]
  %v253 = vld [vmem:[%s0 + $0x3ac] sm:$0xf]
  %v254 = vld [vmem:[%s0 + $0x3b0] sm:$0xf]
  %v255 = vld [vmem:[%s0 + $0x3b4] sm:$0xf]
  %v256 = vld [vmem:[%s0 + $0x3b8] sm:$0xf]
  %v257 = vld [vmem:[%s0 + $0x3bc] sm:$0xf]
  %v258 = vld [vmem:[%s0 + $0x3c0] sm:$0xf]
  %v259 = vld [vmem:[%s0 + $0x3c4] sm:$0xf]
  %v260 = vld [vmem:[%s0 + $0x3c8] sm:$0xf]
  %v261 = vld [vmem:[%s0 + $0x3cc] sm:$0xf]
  %v262 = vld [vmem:[%s0 + $0x3d0] sm:$0xf]
  %v263 = vld [vmem:[%s0 + $0x3d4] sm:$0xf]
  %v264 = vld [vmem:[%s0 + $0x3d8] sm:$0xf]
  %v265 = vld [vmem:[%s0 + $0x3dc] sm:$0xf]
  %v266 = vld [vmem:[%s0 + $0x3e0] sm:$0xf]
  %v267 = vld [vmem:[%s0 + $0x3e4] sm:$0xf]
  %v268 = vld [vmem:[%s0 + $0x3e8] sm:$0xf]
  %v269 = vld [vmem:[%s0 + $0x3ec] sm:$0xf]
  %v270 = vld [vmem:[%s0 + $0x3f0] sm:$0xf]
  %v271 = vld [vmem:[%s0 + $0x3f4] sm:$0xf]
  %v272 = vld [vmem:[%s0 + $0x3f8] sm:$0xf]
  %v273 = vld [vmem:[%s0 + $0x3fc] sm:$0xf]
  %v274 = vld [vmem:[%s1] sm:$0xf]
  %v275 = vld [vmem:[%s1 + $0x4] sm:$0xf]
  %v276 = vld [vmem:[%s1 + $0x8] sm:$0xf]
  %v277 = vld [vmem:[%s1 + $0xc] sm:$0xf]
  %v278 = vld [vmem:[%s1 + $0x10] sm:$0xf]
  %v279 = vld [vmem:[%s1 + $0x14] sm:$0xf]
  %v280 = vld [vmem:[%s1 + $0x18] sm:$0xf]
  %v281 = vld [vmem:[%s1 + $0x1c] sm:$0xf]
  %v282 = vld [vmem:[%s1 + $0x20] sm:$0xf]
  %v283 = vld [vmem:[%s1 + $0x24] sm:$0xf]
  %v284 = vld [vmem:[%s1 + $0x28] sm:$0xf]
  %v285 = vld [vmem:[%s1 + $0x2c] sm:$0xf]
  %v286 = vld [vmem:[%s1 + $0x30] sm:$0xf]
  %v287 = vld [vmem:[%s1 + $0x34] sm:$0xf]
  %v288 = vld [vmem:[%s1 + $0x38] sm:$0xf]
  %v289 = vld [vmem:[%s1 + $0x3c] sm:$0xf]
  %v290 = vld [vmem:[%s2] sm:$0x1]
  %v291 = vld [vmem:[%s3] sm:$0x1]
  %v548 = vunpack.c.l.b16 %v18
  %v549 = vunpack.c.l.b16 %v19
  %v550 = vunpack.c.l.b16 %v20
  %v551 = vunpack.c.l.b16 %v21
  %v552 = vunpack.c.l.b16 %v22
  %v553 = vunpack.c.l.b16 %v23
  %v554 = vunpack.c.l.b16 %v24
  %v555 = vunpack.c.l.b16 %v25
  %v556 = vunpack.c.l.b16 %v26
  %v557 = vunpack.c.l.b16 %v27
  %v558 = vunpack.c.l.b16 %v28
  %v559 = vunpack.c.l.b16 %v29
  %v560 = vunpack.c.l.b16 %v30
  %v561 = vunpack.c.l.b16 %v31
  %v562 = vunpack.c.l.b16 %v32
  %v563 = vunpack.c.l.b16 %v33
  %v564 = vunpack.c.l.b16 %v34
  %v565 = vunpack.c.l.b16 %v35
  %v566 = vunpack.c.l.b16 %v36
  %v567 = vunpack.c.l.b16 %v37
  %v568 = vunpack.c.l.b16 %v38
  %v569 = vunpack.c.l.b16 %v39
  %v570 = vunpack.c.l.b16 %v40
  %v571 = vunpack.c.l.b16 %v41
  %v572 = vunpack.c.l.b16 %v42
  %v573 = vunpack.c.l.b16 %v43
  %v574 = vunpack.c.l.b16 %v44
  %v575 = vunpack.c.l.b16 %v45
  %v576 = vunpack.c.l.b16 %v46
  %v577 = vunpack.c.l.b16 %v47
  %v578 = vunpack.c.l.b16 %v48
  %v579 = vunpack.c.l.b16 %v49
  %v580 = vunpack.c.l.b16 %v50
  %v581 = vunpack.c.l.b16 %v51
  %v582 = vunpack.c.l.b16 %v52
  %v583 = vunpack.c.l.b16 %v53
  %v584 = vunpack.c.l.b16 %v54
  %v585 = vunpack.c.l.b16 %v55
  %v586 = vunpack.c.l.b16 %v56
  %v587 = vunpack.c.l.b16 %v57
  %v588 = vunpack.c.l.b16 %v58
  %v589 = vunpack.c.l.b16 %v59
  %v590 = vunpack.c.l.b16 %v60
  %v591 = vunpack.c.l.b16 %v61
  %v592 = vunpack.c.l.b16 %v62
  %v593 = vunpack.c.l.b16 %v63
  %v594 = vunpack.c.l.b16 %v64
  %v595 = vunpack.c.l.b16 %v65
  %v596 = vunpack.c.l.b16 %v66
  %v597 = vunpack.c.l.b16 %v67
  %v598 = vunpack.c.l.b16 %v68
  %v599 = vunpack.c.l.b16 %v69
  %v600 = vunpack.c.l.b16 %v70
  %v601 = vunpack.c.l.b16 %v71
  %v602 = vunpack.c.l.b16 %v72
  %v603 = vunpack.c.l.b16 %v73
  %v604 = vunpack.c.l.b16 %v74
  %v605 = vunpack.c.l.b16 %v75
  %v606 = vunpack.c.l.b16 %v76
  %v607 = vunpack.c.l.b16 %v77
  %v608 = vunpack.c.l.b16 %v78
  %v609 = vunpack.c.l.b16 %v79
  %v610 = vunpack.c.l.b16 %v80
  %v611 = vunpack.c.l.b16 %v81
  %v612 = vunpack.c.l.b16 %v82
  %v613 = vunpack.c.l.b16 %v83
  %v614 = vunpack.c.l.b16 %v84
  %v615 = vunpack.c.l.b16 %v85
  %v616 = vunpack.c.l.b16 %v86
  %v617 = vunpack.c.l.b16 %v87
  %v618 = vunpack.c.l.b16 %v88
  %v619 = vunpack.c.l.b16 %v89
  %v620 = vunpack.c.l.b16 %v90
  %v621 = vunpack.c.l.b16 %v91
  %v622 = vunpack.c.l.b16 %v92
  %v623 = vunpack.c.l.b16 %v93
  %v624 = vunpack.c.l.b16 %v94
  %v625 = vunpack.c.l.b16 %v95
  %v626 = vunpack.c.l.b16 %v96
  %v627 = vunpack.c.l.b16 %v97
  %v628 = vunpack.c.l.b16 %v98
  %v629 = vunpack.c.l.b16 %v99
  %v630 = vunpack.c.l.b16 %v100
  %v631 = vunpack.c.l.b16 %v101
  %v632 = vunpack.c.l.b16 %v102
  %v633 = vunpack.c.l.b16 %v103
  %v634 = vunpack.c.l.b16 %v104
  %v635 = vunpack.c.l.b16 %v105
  %v636 = vunpack.c.l.b16 %v106
  %v637 = vunpack.c.l.b16 %v107
  %v638 = vunpack.c.l.b16 %v108
  %v639 = vunpack.c.l.b16 %v109
  %v640 = vunpack.c.l.b16 %v110
  %v641 = vunpack.c.l.b16 %v111
  %v642 = vunpack.c.l.b16 %v112
  %v643 = vunpack.c.l.b16 %v113
  %v644 = vunpack.c.l.b16 %v114
  %v645 = vunpack.c.l.b16 %v115
  %v646 = vunpack.c.l.b16 %v116
  %v647 = vunpack.c.l.b16 %v117
  %v648 = vunpack.c.l.b16 %v118
  %v649 = vunpack.c.l.b16 %v119
  %v650 = vunpack.c.l.b16 %v120
  %v651 = vunpack.c.l.b16 %v121
  %v652 = vunpack.c.l.b16 %v122
  %v653 = vunpack.c.l.b16 %v123
  %v654 = vunpack.c.l.b16 %v124
  %v655 = vunpack.c.l.b16 %v125
  %v656 = vunpack.c.l.b16 %v126
  %v657 = vunpack.c.l.b16 %v127
  %v658 = vunpack.c.l.b16 %v128
  %v659 = vunpack.c.l.b16 %v129
  %v660 = vunpack.c.l.b16 %v130
  %v661 = vunpack.c.l.b16 %v131
  %v662 = vunpack.c.l.b16 %v132
  %v663 = vunpack.c.l.b16 %v133
  %v664 = vunpack.c.l.b16 %v134
  %v665 = vunpack.c.l.b16 %v135
  %v666 = vunpack.c.l.b16 %v136
  %v667 = vunpack.c.l.b16 %v137
  %v668 = vunpack.c.l.b16 %v138
  %v669 = vunpack.c.l.b16 %v139
  %v670 = vunpack.c.l.b16 %v140
  %v671 = vunpack.c.l.b16 %v141
  %v672 = vunpack.c.l.b16 %v142
  %v673 = vunpack.c.l.b16 %v143
  %v674 = vunpack.c.l.b16 %v144
  %v675 = vunpack.c.l.b16 %v145
  %v676 = vunpack.c.l.b16 %v146
  %v677 = vunpack.c.l.b16 %v147
  %v678 = vunpack.c.l.b16 %v148
  %v679 = vunpack.c.l.b16 %v149
  %v680 = vunpack.c.l.b16 %v150
  %v681 = vunpack.c.l.b16 %v151
  %v682 = vunpack.c.l.b16 %v152
  %v683 = vunpack.c.l.b16 %v153
  %v684 = vunpack.c.l.b16 %v154
  %v685 = vunpack.c.l.b16 %v155
  %v686 = vunpack.c.l.b16 %v156
  %v687 = vunpack.c.l.b16 %v157
  %v688 = vunpack.c.l.b16 %v158
  %v689 = vunpack.c.l.b16 %v159
  %v690 = vunpack.c.l.b16 %v160
  %v691 = vunpack.c.l.b16 %v161
  %v692 = vunpack.c.l.b16 %v162
  %v693 = vunpack.c.l.b16 %v163
  %v694 = vunpack.c.l.b16 %v164
  %v695 = vunpack.c.l.b16 %v165
  %v696 = vunpack.c.l.b16 %v166
  %v697 = vunpack.c.l.b16 %v167
  %v698 = vunpack.c.l.b16 %v168
  %v699 = vunpack.c.l.b16 %v169
  %v700 = vunpack.c.l.b16 %v170
  %v701 = vunpack.c.l.b16 %v171
  %v702 = vunpack.c.l.b16 %v172
  %v703 = vunpack.c.l.b16 %v173
  %v704 = vunpack.c.l.b16 %v174
  %v705 = vunpack.c.l.b16 %v175
  %v706 = vunpack.c.l.b16 %v176
  %v707 = vunpack.c.l.b16 %v177
  %v708 = vunpack.c.l.b16 %v178
  %v709 = vunpack.c.l.b16 %v179
  %v710 = vunpack.c.l.b16 %v180
  %v711 = vunpack.c.l.b16 %v181
  %v712 = vunpack.c.l.b16 %v182
  %v713 = vunpack.c.l.b16 %v183
  %v714 = vunpack.c.l.b16 %v184
  %v715 = vunpack.c.l.b16 %v185
  %v716 = vunpack.c.l.b16 %v186
  %v717 = vunpack.c.l.b16 %v187
  %v718 = vunpack.c.l.b16 %v188
  %v719 = vunpack.c.l.b16 %v189
  %v720 = vunpack.c.l.b16 %v190
  %v721 = vunpack.c.l.b16 %v191
  %v722 = vunpack.c.l.b16 %v192
  %v723 = vunpack.c.l.b16 %v193
  %v724 = vunpack.c.l.b16 %v194
  %v725 = vunpack.c.l.b16 %v195
  %v726 = vunpack.c.l.b16 %v196
  %v727 = vunpack.c.l.b16 %v197
  %v728 = vunpack.c.l.b16 %v198
  %v729 = vunpack.c.l.b16 %v199
  %v730 = vunpack.c.l.b16 %v200
  %v731 = vunpack.c.l.b16 %v201
  %v732 = vunpack.c.l.b16 %v202
  %v733 = vunpack.c.l.b16 %v203
  %v734 = vunpack.c.l.b16 %v204
  %v735 = vunpack.c.l.b16 %v205
  %v736 = vunpack.c.l.b16 %v206
  %v737 = vunpack.c.l.b16 %v207
  %v738 = vunpack.c.l.b16 %v208
  %v739 = vunpack.c.l.b16 %v209
  %v740 = vunpack.c.l.b16 %v210
  %v741 = vunpack.c.l.b16 %v211
  %v742 = vunpack.c.l.b16 %v212
  %v743 = vunpack.c.l.b16 %v213
  %v744 = vunpack.c.l.b16 %v214
  %v745 = vunpack.c.l.b16 %v215
  %v746 = vunpack.c.l.b16 %v216
  %v747 = vunpack.c.l.b16 %v217
  %v748 = vunpack.c.l.b16 %v218
  %v749 = vunpack.c.l.b16 %v219
  %v750 = vunpack.c.l.b16 %v220
  %v751 = vunpack.c.l.b16 %v221
  %v752 = vunpack.c.l.b16 %v222
  %v753 = vunpack.c.l.b16 %v223
  %v754 = vunpack.c.l.b16 %v224
  %v755 = vunpack.c.l.b16 %v225
  %v756 = vunpack.c.l.b16 %v226
  %v757 = vunpack.c.l.b16 %v227
  %v758 = vunpack.c.l.b16 %v228
  %v759 = vunpack.c.l.b16 %v229
  %v760 = vunpack.c.l.b16 %v230
  %v761 = vunpack.c.l.b16 %v231
  %v762 = vunpack.c.l.b16 %v232
  %v763 = vunpack.c.l.b16 %v233
  %v764 = vunpack.c.l.b16 %v234
  %v765 = vunpack.c.l.b16 %v235
  %v766 = vunpack.c.l.b16 %v236
  %v767 = vunpack.c.l.b16 %v237
  %v768 = vunpack.c.l.b16 %v238
  %v769 = vunpack.c.l.b16 %v239
  %v770 = vunpack.c.l.b16 %v240
  %v771 = vunpack.c.l.b16 %v241
  %v772 = vunpack.c.l.b16 %v242
  %v773 = vunpack.c.l.b16 %v243
  %v774 = vunpack.c.l.b16 %v244
  %v775 = vunpack.c.l.b16 %v245
  %v776 = vunpack.c.l.b16 %v246
  %v777 = vunpack.c.l.b16 %v247
  %v778 = vunpack.c.l.b16 %v248
  %v779 = vunpack.c.l.b16 %v249
  %v780 = vunpack.c.l.b16 %v250
  %v781 = vunpack.c.l.b16 %v251
  %v782 = vunpack.c.l.b16 %v252
  %v783 = vunpack.c.l.b16 %v253
  %v784 = vunpack.c.l.b16 %v254
  %v785 = vunpack.c.l.b16 %v255
  %v786 = vunpack.c.l.b16 %v256
  %v787 = vunpack.c.l.b16 %v257
  %v788 = vunpack.c.l.b16 %v258
  %v789 = vunpack.c.l.b16 %v259
  %v790 = vunpack.c.l.b16 %v260
  %v791 = vunpack.c.l.b16 %v261
  %v792 = vunpack.c.l.b16 %v262
  %v793 = vunpack.c.l.b16 %v263
  %v794 = vunpack.c.l.b16 %v264
  %v795 = vunpack.c.l.b16 %v265
  %v796 = vunpack.c.l.b16 %v266
  %v797 = vunpack.c.l.b16 %v267
  %v798 = vunpack.c.l.b16 %v268
  %v799 = vunpack.c.l.b16 %v269
  %v800 = vunpack.c.l.b16 %v270
  %v801 = vunpack.c.l.b16 %v271
  %v802 = vunpack.c.l.b16 %v272
  %v803 = vunpack.c.l.b16 %v273
  %v804 = vpack.c.b16 %v549, %v548
  %v805 = vpack.c.b16 %v551, %v550
  %v806 = vpack.c.b16 %v553, %v552
  %v807 = vpack.c.b16 %v555, %v554
  %v808 = vpack.c.b16 %v557, %v556
  %v809 = vpack.c.b16 %v559, %v558
  %v810 = vpack.c.b16 %v561, %v560
  %v811 = vpack.c.b16 %v563, %v562
  %v812 = vpack.c.b16 %v565, %v564
  %v813 = vpack.c.b16 %v567, %v566
  %v814 = vpack.c.b16 %v569, %v568
  %v815 = vpack.c.b16 %v571, %v570
  %v816 = vpack.c.b16 %v573, %v572
  %v817 = vpack.c.b16 %v575, %v574
  %v818 = vpack.c.b16 %v577, %v576
  %v819 = vpack.c.b16 %v579, %v578
  %v820 = vpack.c.b16 %v581, %v580
  %v821 = vpack.c.b16 %v583, %v582
  %v822 = vpack.c.b16 %v585, %v584
  %v823 = vpack.c.b16 %v587, %v586
  %v824 = vpack.c.b16 %v589, %v588
  %v825 = vpack.c.b16 %v591, %v590
  %v826 = vpack.c.b16 %v593, %v592
  %v827 = vpack.c.b16 %v595, %v594
  %v828 = vpack.c.b16 %v597, %v596
  %v829 = vpack.c.b16 %v599, %v598
  %v830 = vpack.c.b16 %v601, %v600
  %v831 = vpack.c.b16 %v603, %v602
  %v832 = vpack.c.b16 %v605, %v604
  %v833 = vpack.c.b16 %v607, %v606
  %v834 = vpack.c.b16 %v609, %v608
  %v835 = vpack.c.b16 %v611, %v610
  %v836 = vpack.c.b16 %v613, %v612
  %v837 = vpack.c.b16 %v615, %v614
  %v838 = vpack.c.b16 %v617, %v616
  %v839 = vpack.c.b16 %v619, %v618
  %v840 = vpack.c.b16 %v621, %v620
  %v841 = vpack.c.b16 %v623, %v622
  %v842 = vpack.c.b16 %v625, %v624
  %v843 = vpack.c.b16 %v627, %v626
  %v844 = vpack.c.b16 %v629, %v628
  %v845 = vpack.c.b16 %v631, %v630
  %v846 = vpack.c.b16 %v633, %v632
  %v847 = vpack.c.b16 %v635, %v634
  %v848 = vpack.c.b16 %v637, %v636
  %v849 = vpack.c.b16 %v639, %v638
  %v850 = vpack.c.b16 %v641, %v640
  %v851 = vpack.c.b16 %v643, %v642
  %v852 = vpack.c.b16 %v645, %v644
  %v853 = vpack.c.b16 %v647, %v646
  %v854 = vpack.c.b16 %v649, %v648
  %v855 = vpack.c.b16 %v651, %v650
  %v856 = vpack.c.b16 %v653, %v652
  %v857 = vpack.c.b16 %v655, %v654
  %v858 = vpack.c.b16 %v657, %v656
  %v859 = vpack.c.b16 %v659, %v658
  %v860 = vpack.c.b16 %v661, %v660
  %v861 = vpack.c.b16 %v663, %v662
  %v862 = vpack.c.b16 %v665, %v664
  %v863 = vpack.c.b16 %v667, %v666
  %v864 = vpack.c.b16 %v669, %v668
  %v865 = vpack.c.b16 %v671, %v670
  %v866 = vpack.c.b16 %v673, %v672
  %v867 = vpack.c.b16 %v675, %v674
  %v868 = vpack.c.b16 %v677, %v676
  %v869 = vpack.c.b16 %v679, %v678
  %v870 = vpack.c.b16 %v681, %v680
  %v871 = vpack.c.b16 %v683, %v682
  %v872 = vpack.c.b16 %v685, %v684
  %v873 = vpack.c.b16 %v687, %v686
  %v874 = vpack.c.b16 %v689, %v688
  %v875 = vpack.c.b16 %v691, %v690
  %v876 = vpack.c.b16 %v693, %v692
  %v877 = vpack.c.b16 %v695, %v694
  %v878 = vpack.c.b16 %v697, %v696
  %v879 = vpack.c.b16 %v699, %v698
  %v880 = vpack.c.b16 %v701, %v700
  %v881 = vpack.c.b16 %v703, %v702
  %v882 = vpack.c.b16 %v705, %v704
  %v883 = vpack.c.b16 %v707, %v706
  %v884 = vpack.c.b16 %v709, %v708
  %v885 = vpack.c.b16 %v711, %v710
  %v886 = vpack.c.b16 %v713, %v712
  %v887 = vpack.c.b16 %v715, %v714
  %v888 = vpack.c.b16 %v717, %v716
  %v889 = vpack.c.b16 %v719, %v718
  %v890 = vpack.c.b16 %v721, %v720
  %v891 = vpack.c.b16 %v723, %v722
  %v892 = vpack.c.b16 %v725, %v724
  %v893 = vpack.c.b16 %v727, %v726
  %v894 = vpack.c.b16 %v729, %v728
  %v895 = vpack.c.b16 %v731, %v730
  %v896 = vpack.c.b16 %v733, %v732
  %v897 = vpack.c.b16 %v735, %v734
  %v898 = vpack.c.b16 %v737, %v736
  %v899 = vpack.c.b16 %v739, %v738
  %v900 = vpack.c.b16 %v741, %v740
  %v901 = vpack.c.b16 %v743, %v742
  %v902 = vpack.c.b16 %v745, %v744
  %v903 = vpack.c.b16 %v747, %v746
  %v904 = vpack.c.b16 %v749, %v748
  %v905 = vpack.c.b16 %v751, %v750
  %v906 = vpack.c.b16 %v753, %v752
  %v907 = vpack.c.b16 %v755, %v754
  %v908 = vpack.c.b16 %v757, %v756
  %v909 = vpack.c.b16 %v759, %v758
  %v910 = vpack.c.b16 %v761, %v760
  %v911 = vpack.c.b16 %v763, %v762
  %v912 = vpack.c.b16 %v765, %v764
  %v913 = vpack.c.b16 %v767, %v766
  %v914 = vpack.c.b16 %v769, %v768
  %v915 = vpack.c.b16 %v771, %v770
  %v916 = vpack.c.b16 %v773, %v772
  %v917 = vpack.c.b16 %v775, %v774
  %v918 = vpack.c.b16 %v777, %v776
  %v919 = vpack.c.b16 %v779, %v778
  %v920 = vpack.c.b16 %v781, %v780
  %v921 = vpack.c.b16 %v783, %v782
  %v922 = vpack.c.b16 %v785, %v784
  %v923 = vpack.c.b16 %v787, %v786
  %v924 = vpack.c.b16 %v789, %v788
  %v925 = vpack.c.b16 %v791, %v790
  %v926 = vpack.c.b16 %v793, %v792
  %v927 = vpack.c.b16 %v795, %v794
  %v928 = vpack.c.b16 %v797, %v796
  %v929 = vpack.c.b16 %v799, %v798
  %v930 = vpack.c.b16 %v801, %v800
  %v931 = vpack.c.b16 %v803, %v802
  %v1076 = vunpack.c.l.b16 %v274
  %v1077 = vunpack.c.l.b16 %v275
  %v1078 = vunpack.c.l.b16 %v276
  %v1079 = vunpack.c.l.b16 %v277
  %v1080 = vunpack.c.l.b16 %v278
  %v1081 = vunpack.c.l.b16 %v279
  %v1082 = vunpack.c.l.b16 %v280
  %v1083 = vunpack.c.l.b16 %v281
  %v1084 = vunpack.c.l.b16 %v282
  %v1085 = vunpack.c.l.b16 %v283
  %v1086 = vunpack.c.l.b16 %v284
  %v1087 = vunpack.c.l.b16 %v285
  %v1088 = vunpack.c.l.b16 %v286
  %v1089 = vunpack.c.l.b16 %v287
  %v1090 = vunpack.c.l.b16 %v288
  %v1091 = vunpack.c.l.b16 %v289
  %v1092 = vpack.c.b16 %v1077, %v1076
  %v1093 = vpack.c.b16 %v1079, %v1078
  %v1094 = vpack.c.b16 %v1081, %v1080
  %v1095 = vpack.c.b16 %v1083, %v1082
  %v1096 = vpack.c.b16 %v1085, %v1084
  %v1097 = vpack.c.b16 %v1087, %v1086
  %v1098 = vpack.c.b16 %v1089, %v1088
  %v1099 = vpack.c.b16 %v1091, %v1090
  %1108 = vmatprep.subr.bf16.mxu0 0
  %1109 = vmatpush1.bf16.msra.mxu0 %v1092
  %1110 = vmatprep.subr.bf16.mxu0 0
  %1111 = vmatpush1.bf16.msra.mxu0 %v1093
  %1112 = vmatprep.subr.bf16.mxu0 0
  %1113 = vmatpush1.bf16.msra.mxu0 %v1094
  %1114 = vmatprep.subr.bf16.mxu0 0
  %1115 = vmatpush1.bf16.msra.mxu0 %v1095
  %1116 = vmatprep.subr.bf16.mxu0 0
  %1117 = vmatpush1.bf16.msra.mxu0 %v1096
  %1118 = vmatprep.subr.bf16.mxu0 0
  %1119 = vmatpush1.bf16.msra.mxu0 %v1097
  %1120 = vmatprep.subr.bf16.mxu0 0
  %1121 = vmatpush1.bf16.msra.mxu0 %v1098
  %1122 = vmatprep.subr.bf16.mxu0 0
  %1123 = vmatpush1.bf16.msra.mxu0 %v1099
  %1124 = vmatprep.subr.bf16.mxu0 0
  %1125 = vmatpush1.bf16.msra.mxu0 0
  %1126 = vmatprep.subr.bf16.mxu0 0
  %1127 = vmatpush1.bf16.msra.mxu0 0
  %1128 = vmatprep.subr.bf16.mxu0 0
  %1129 = vmatpush1.bf16.msra.mxu0 0
  %1130 = vmatprep.subr.bf16.mxu0 0
  %1131 = vmatpush1.bf16.msra.mxu0 0
  %1132 = vmatprep.subr.bf16.mxu0 0
  %1133 = vmatpush1.bf16.msra.mxu0 0
  %1134 = vmatprep.subr.bf16.mxu0 0
  %1135 = vmatpush1.bf16.msra.mxu0 0
  %1136 = vmatprep.subr.bf16.mxu0 0
  %1137 = vmatpush1.bf16.msra.mxu0 0
  %1138 = vmatprep.subr.bf16.mxu0 0
  %1139 = vmatpush1.bf16.msra.mxu0 0
  %1140 = vmatprep.mubr.bf16.mxu0 0
  %1141 = vmatmul.mubr.bf16.gmra.mrb[0].mxu0 %v804
  %v1142 = vpop.f32.mrb[0].mxu0
  %v1143 = vadd.f32 0.0, %v1142
  %v1144 = vpop.f32.mrb[0].mxu0
  %v1145 = vpop.f32.mrb[0].mxu0
  %v1146 = vadd.f32 0.0, %v1145
  %v1147 = vpop.f32.mrb[0].mxu0
  %1148 = vmatprep.mubr.bf16.mxu0 0
  %1149 = vmatmul.mubr.bf16.gmra.mrb[0].mxu0 %v805
  %v1150 = vpop.f32.mrb[0].mxu0
  %v1151 = vadd.f32 0.0, %v1150
  %v1152 = vpop.f32.mrb[0].mxu0
  %v1153 = vpop.f32.mrb[0].mxu0
  %v1154 = vadd.f32 0.0, %v1153
  %v1155 = vpop.f32.mrb[0].mxu0
  %1156 = vmatprep.mubr.bf16.mxu0 0
  %1157 = vmatmul.mubr.bf16.gmra.mrb[0].mxu0 %v806
  %v1158 = vpop.f32.mrb[0].mxu0
  %v1159 = vadd.f32 0.0, %v1158
  %v1160 = vpop.f32.mrb[0].mxu0
  %v1161 = vpop.f32.mrb[0].mxu0
  %v1162 = vadd.f32 0.0, %v1161
  %v1163 = vpop.f32.mrb[0].mxu0
  %1164 = vmatprep.mubr.bf16.mxu0 0
  %1165 = vmatmul.mubr.bf16.gmra.mrb[0].mxu0 %v807
  %v1166 = vpop.f32.mrb[0].mxu0
  %v1167 = vadd.f32 0.0, %v1166
  %v1168 = vpop.f32.mrb[0].mxu0
  %v1169 = vpop.f32.mrb[0].mxu0
  %v1170 = vadd.f32 0.0, %v1169
  %v1171 = vpop.f32.mrb[0].mxu0
  %1172 = vmatprep.mubr.bf16.mxu0 0
  %1173 = vmatmul.mubr.bf16.gmra.mrb[0].mxu0 %v808
  %v1174 = vpop.f32.mrb[0].mxu0
  %v1175 = vadd.f32 0.0, %v1174
  %v1176 = vpop.f32.mrb[0].mxu0
  %v1177 = vpop.f32.mrb[0].mxu0
  %v1178 = vadd.f32 0.0, %v1177
  %v1179 = vpop.f32.mrb[0].mxu0
  %1180 = vmatprep.mubr.bf16.mxu0 0
  %1181 = vmatmul.mubr.bf16.gmra.mrb[0].mxu0 %v809
  %v1182 = vpop.f32.mrb[0].mxu0
  %v1183 = vadd.f32 0.0, %v1182
  %v1184 = vpop.f32.mrb[0].mxu0
  %v1185 = vpop.f32.mrb[0].mxu0
  %v1186 = vadd.f32 0.0, %v1185
  %v1187 = vpop.f32.mrb[0].mxu0
  %1188 = vmatprep.mubr.bf16.mxu0 0
  %1189 = vmatmul.mubr.bf16.gmra.mrb[0].mxu0 %v810
  %v1190 = vpop.f32.mrb[0].mxu0
  %v1191 = vadd.f32 0.0, %v1190
  %v1192 = vpop.f32.mrb[0].mxu0
  %v1193 = vpop.f32.mrb[0].mxu0
  %v1194 = vadd.f32 0.0, %v1193
  %v1195 = vpop.f32.mrb[0].mxu0
  %1196 = vmatprep.mubr.bf16.mxu0 0
  %1197 = vmatmul.mubr.bf16.gmra.mrb[0].mxu0 %v811
  %v1198 = vpop.f32.mrb[0].mxu0
  %v1199 = vadd.f32 0.0, %v1198
  %v1200 = vpop.f32.mrb[0].mxu0
  %v1201 = vpop.f32.mrb[0].mxu0
  %v1202 = vadd.f32 0.0, %v1201
  %v1203 = vpop.f32.mrb[0].mxu0
  %1204 = vmatprep.mubr.bf16.mxu0 0
  %1205 = vmatmul.mubr.bf16.gmra.mrb[0].mxu0 %v812
  %v1206 = vpop.f32.mrb[0].mxu0
  %v1207 = vadd.f32 0.0, %v1206
  %v1208 = vpop.f32.mrb[0].mxu0
  %v1209 = vpop.f32.mrb[0].mxu0
  %v1210 = vadd.f32 0.0, %v1209
  %v1211 = vpop.f32.mrb[0].mxu0
  %1212 = vmatprep.mubr.bf16.mxu0 0
  %1213 = vmatmul.mubr.bf16.gmra.mrb[0].mxu0 %v813
  %v1214 = vpop.f32.mrb[0].mxu0
  %v1215 = vadd.f32 0.0, %v1214
  %v1216 = vpop.f32.mrb[0].mxu0
  %v1217 = vpop.f32.mrb[0].mxu0
  %v1218 = vadd.f32 0.0, %v1217
  %v1219 = vpop.f32.mrb[0].mxu0
  %1220 = vmatprep.mubr.bf16.mxu0 0
  %1221 = vmatmul.mubr.bf16.gmra.mrb[0].mxu0 %v814
  %v1222 = vpop.f32.mrb[0].mxu0
  %v1223 = vadd.f32 0.0, %v1222
  %v1224 = vpop.f32.mrb[0].mxu0
  %v1225 = vpop.f32.mrb[0].mxu0
  %v1226 = vadd.f32 0.0, %v1225
  %v1227 = vpop.f32.mrb[0].mxu0
  %1228 = vmatprep.mubr.bf16.mxu0 0
  %1229 = vmatmul.mubr.bf16.gmra.mrb[0].mxu0 %v815
  %v1230 = vpop.f32.mrb[0].mxu0
  %v1231 = vadd.f32 0.0, %v1230
  %v1232 = vpop.f32.mrb[0].mxu0
  %v1233 = vpop.f32.mrb[0].mxu0
  %v1234 = vadd.f32 0.0, %v1233
  %v1235 = vpop.f32.mrb[0].mxu0
  %1236 = vmatprep.mubr.bf16.mxu0 0
  %1237 = vmatmul.mubr.bf16.gmra.mrb[0].mxu0 %v816
  %v1238 = vpop.f32.mrb[0].mxu0
  %v1239 = vadd.f32 0.0, %v1238
  %v1240 = vpop.f32.mrb[0].mxu0
  %v1241 = vpop.f32.mrb[0].mxu0
  %v1242 = vadd.f32 0.0, %v1241
  %v1243 = vpop.f32.mrb[0].mxu0
  %1244 = vmatprep.mubr.bf16.mxu0 0
  %1245 = vmatmul.mubr.bf16.gmra.mrb[0].mxu0 %v817
  %v1246 = vpop.f32.mrb[0].mxu0
  %v1247 = vadd.f32 0.0, %v1246
  %v1248 = vpop.f32.mrb[0].mxu0
  %v1249 = vpop.f32.mrb[0].mxu0
  %v1250 = vadd.f32 0.0, %v1249
  %v1251 = vpop.f32.mrb[0].mxu0
  %1252 = vmatprep.mubr.bf16.mxu0 0
  %1253 = vmatmul.mubr.bf16.gmra.mrb[0].mxu0 %v818
  %v1254 = vpop.f32.mrb[0].mxu0
  %v1255 = vadd.f32 0.0, %v1254
  %v1256 = vpop.f32.mrb[0].mxu0
  %v1257 = vpop.f32.mrb[0].mxu0
  %v1258 = vadd.f32 0.0, %v1257
  %v1259 = vpop.f32.mrb[0].mxu0
  %1260 = vmatprep.mubr.bf16.mxu0 0
  %1261 = vmatmul.mubr.bf16.gmra.mrb[0].mxu0 %v819
  %v1262 = vpop.f32.mrb[0].mxu0
  %v1263 = vadd.f32 0.0, %v1262
  %v1264 = vpop.f32.mrb[0].mxu0
  %v1265 = vpop.f32.mrb[0].mxu0
  %v1266 = vadd.f32 0.0, %v1265
  %v1267 = vpop.f32.mrb[0].mxu0
  %1268 = vmatprep.mubr.bf16.mxu0 0
  %1269 = vmatmul.mubr.bf16.gmra.mrb[0].mxu0 %v820
  %v1270 = vpop.f32.mrb[0].mxu0
  %v1271 = vadd.f32 0.0, %v1270
  %v1272 = vpop.f32.mrb[0].mxu0
  %v1273 = vpop.f32.mrb[0].mxu0
  %v1274 = vadd.f32 0.0, %v1273
  %v1275 = vpop.f32.mrb[0].mxu0
  %1276 = vmatprep.mubr.bf16.mxu0 0
  %1277 = vmatmul.mubr.bf16.gmra.mrb[0].mxu0 %v821
  %v1278 = vpop.f32.mrb[0].mxu0
  %v1279 = vadd.f32 0.0, %v1278
  %v1280 = vpop.f32.mrb[0].mxu0
  %v1281 = vpop.f32.mrb[0].mxu0
  %v1282 = vadd.f32 0.0, %v1281
  %v1283 = vpop.f32.mrb[0].mxu0
  %1284 = vmatprep.mubr.bf16.mxu0 0
  %1285 = vmatmul.mubr.bf16.gmra.mrb[0].mxu0 %v822
  %v1286 = vpop.f32.mrb[0].mxu0
  %v1287 = vadd.f32 0.0, %v1286
  %v1288 = vpop.f32.mrb[0].mxu0
  %v1289 = vpop.f32.mrb[0].mxu0
  %v1290 = vadd.f32 0.0, %v1289
  %v1291 = vpop.f32.mrb[0].mxu0
  %1292 = vmatprep.mubr.bf16.mxu0 0
  %1293 = vmatmul.mubr.bf16.gmra.mrb[0].mxu0 %v823
  %v1294 = vpop.f32.mrb[0].mxu0
  %v1295 = vadd.f32 0.0, %v1294
  %v1296 = vpop.f32.mrb[0].mxu0
  %v1297 = vpop.f32.mrb[0].mxu0
  %v1298 = vadd.f32 0.0, %v1297
  %v1299 = vpop.f32.mrb[0].mxu0
  %1300 = vmatprep.mubr.bf16.mxu0 0
  %1301 = vmatmul.mubr.bf16.gmra.mrb[0].mxu0 %v824
  %v1302 = vpop.f32.mrb[0].mxu0
  %v1303 = vadd.f32 0.0, %v1302
  %v1304 = vpop.f32.mrb[0].mxu0
  %v1305 = vpop.f32.mrb[0].mxu0
  %v1306 = vadd.f32 0.0, %v1305
  %v1307 = vpop.f32.mrb[0].mxu0
  %1308 = vmatprep.mubr.bf16.mxu0 0
  %1309 = vmatmul.mubr.bf16.gmra.mrb[0].mxu0 %v825
  %v1310 = vpop.f32.mrb[0].mxu0
  %v1311 = vadd.f32 0.0, %v1310
  %v1312 = vpop.f32.mrb[0].mxu0
  %v1313 = vpop.f32.mrb[0].mxu0
  %v1314 = vadd.f32 0.0, %v1313
  %v1315 = vpop.f32.mrb[0].mxu0
  %1316 = vmatprep.mubr.bf16.mxu0 0
  %1317 = vmatmul.mubr.bf16.gmra.mrb[0].mxu0 %v826
  %v1318 = vpop.f32.mrb[0].mxu0
  %v1319 = vadd.f32 0.0, %v1318
  %v1320 = vpop.f32.mrb[0].mxu0
  %v1321 = vpop.f32.mrb[0].mxu0
  %v1322 = vadd.f32 0.0, %v1321
  %v1323 = vpop.f32.mrb[0].mxu0
  %1324 = vmatprep.mubr.bf16.mxu0 0
  %1325 = vmatmul.mubr.bf16.gmra.mrb[0].mxu0 %v827
  %v1326 = vpop.f32.mrb[0].mxu0
  %v1327 = vadd.f32 0.0, %v1326
  %v1328 = vpop.f32.mrb[0].mxu0
  %v1329 = vpop.f32.mrb[0].mxu0
  %v1330 = vadd.f32 0.0, %v1329
  %v1331 = vpop.f32.mrb[0].mxu0
  %1332 = vmatprep.mubr.bf16.mxu0 0
  %1333 = vmatmul.mubr.bf16.gmra.mrb[0].mxu0 %v828
  %v1334 = vpop.f32.mrb[0].mxu0
  %v1335 = vadd.f32 0.0, %v1334
  %v1336 = vpop.f32.mrb[0].mxu0
  %v1337 = vpop.f32.mrb[0].mxu0
  %v1338 = vadd.f32 0.0, %v1337
  %v1339 = vpop.f32.mrb[0].mxu0
  %1340 = vmatprep.mubr.bf16.mxu0 0
  %1341 = vmatmul.mubr.bf16.gmra.mrb[0].mxu0 %v829
  %v1342 = vpop.f32.mrb[0].mxu0
  %v1343 = vadd.f32 0.0, %v1342
  %v1344 = vpop.f32.mrb[0].mxu0
  %v1345 = vpop.f32.mrb[0].mxu0
  %v1346 = vadd.f32 0.0, %v1345
  %v1347 = vpop.f32.mrb[0].mxu0
  %1348 = vmatprep.mubr.bf16.mxu0 0
  %1349 = vmatmul.mubr.bf16.gmra.mrb[0].mxu0 %v830
  %v1350 = vpop.f32.mrb[0].mxu0
  %v1351 = vadd.f32 0.0, %v1350
  %v1352 = vpop.f32.mrb[0].mxu0
  %v1353 = vpop.f32.mrb[0].mxu0
  %v1354 = vadd.f32 0.0, %v1353
  %v1355 = vpop.f32.mrb[0].mxu0
  %1356 = vmatprep.mubr.bf16.mxu0 0
  %1357 = vmatmul.mubr.bf16.gmra.mrb[0].mxu0 %v831
  %v1358 = vpop.f32.mrb[0].mxu0
  %v1359 = vadd.f32 0.0, %v1358
  %v1360 = vpop.f32.mrb[0].mxu0
  %v1361 = vpop.f32.mrb[0].mxu0
  %v1362 = vadd.f32 0.0, %v1361
  %v1363 = vpop.f32.mrb[0].mxu0
  %1364 = vmatprep.mubr.bf16.mxu0 0
  %1365 = vmatmul.mubr.bf16.gmra.mrb[0].mxu0 %v832
  %v1366 = vpop.f32.mrb[0].mxu0
  %v1367 = vadd.f32 0.0, %v1366
  %v1368 = vpop.f32.mrb[0].mxu0
  %v1369 = vpop.f32.mrb[0].mxu0
  %v1370 = vadd.f32 0.0, %v1369
  %v1371 = vpop.f32.mrb[0].mxu0
  %1372 = vmatprep.mubr.bf16.mxu0 0
  %1373 = vmatmul.mubr.bf16.gmra.mrb[0].mxu0 %v833
  %v1374 = vpop.f32.mrb[0].mxu0
  %v1375 = vadd.f32 0.0, %v1374
  %v1376 = vpop.f32.mrb[0].mxu0
  %v1377 = vpop.f32.mrb[0].mxu0
  %v1378 = vadd.f32 0.0, %v1377
  %v1379 = vpop.f32.mrb[0].mxu0
  %1380 = vmatprep.mubr.bf16.mxu0 0
  %1381 = vmatmul.mubr.bf16.gmra.mrb[0].mxu0 %v834
  %v1382 = vpop.f32.mrb[0].mxu0
  %v1383 = vadd.f32 0.0, %v1382
  %v1384 = vpop.f32.mrb[0].mxu0
  %v1385 = vpop.f32.mrb[0].mxu0
  %v1386 = vadd.f32 0.0, %v1385
  %v1387 = vpop.f32.mrb[0].mxu0
  %1388 = vmatprep.mubr.bf16.mxu0 0
  %1389 = vmatmul.mubr.bf16.gmra.mrb[0].mxu0 %v835
  %v1390 = vpop.f32.mrb[0].mxu0
  %v1391 = vadd.f32 0.0, %v1390
  %v1392 = vpop.f32.mrb[0].mxu0
  %v1393 = vpop.f32.mrb[0].mxu0
  %v1394 = vadd.f32 0.0, %v1393
  %v1395 = vpop.f32.mrb[0].mxu0
  %1396 = vmatprep.mubr.bf16.mxu0 0
  %1397 = vmatmul.mubr.bf16.gmra.mrb[0].mxu0 %v836
  %v1398 = vpop.f32.mrb[0].mxu0
  %v1399 = vadd.f32 0.0, %v1398
  %v1400 = vpop.f32.mrb[0].mxu0
  %v1401 = vpop.f32.mrb[0].mxu0
  %v1402 = vadd.f32 0.0, %v1401
  %v1403 = vpop.f32.mrb[0].mxu0
  %1404 = vmatprep.mubr.bf16.mxu0 0
  %1405 = vmatmul.mubr.bf16.gmra.mrb[0].mxu0 %v837
  %v1406 = vpop.f32.mrb[0].mxu0
  %v1407 = vadd.f32 0.0, %v1406
  %v1408 = vpop.f32.mrb[0].mxu0
  %v1409 = vpop.f32.mrb[0].mxu0
  %v1410 = vadd.f32 0.0, %v1409
  %v1411 = vpop.f32.mrb[0].mxu0
  %1412 = vmatprep.mubr.bf16.mxu0 0
  %1413 = vmatmul.mubr.bf16.gmra.mrb[0].mxu0 %v838
  %v1414 = vpop.f32.mrb[0].mxu0
  %v1415 = vadd.f32 0.0, %v1414
  %v1416 = vpop.f32.mrb[0].mxu0
  %v1417 = vpop.f32.mrb[0].mxu0
  %v1418 = vadd.f32 0.0, %v1417
  %v1419 = vpop.f32.mrb[0].mxu0
  %1420 = vmatprep.mubr.bf16.mxu0 0
  %1421 = vmatmul.mubr.bf16.gmra.mrb[0].mxu0 %v839
  %v1422 = vpop.f32.mrb[0].mxu0
  %v1423 = vadd.f32 0.0, %v1422
  %v1424 = vpop.f32.mrb[0].mxu0
  %v1425 = vpop.f32.mrb[0].mxu0
  %v1426 = vadd.f32 0.0, %v1425
  %v1427 = vpop.f32.mrb[0].mxu0
  %1428 = vmatprep.mubr.bf16.mxu0 0
  %1429 = vmatmul.mubr.bf16.gmra.mrb[0].mxu0 %v840
  %v1430 = vpop.f32.mrb[0].mxu0
  %v1431 = vadd.f32 0.0, %v1430
  %v1432 = vpop.f32.mrb[0].mxu0
  %v1433 = vpop.f32.mrb[0].mxu0
  %v1434 = vadd.f32 0.0, %v1433
  %v1435 = vpop.f32.mrb[0].mxu0
  %1436 = vmatprep.mubr.bf16.mxu0 0
  %1437 = vmatmul.mubr.bf16.gmra.mrb[0].mxu0 %v841
  %v1438 = vpop.f32.mrb[0].mxu0
  %v1439 = vadd.f32 0.0, %v1438
  %v1440 = vpop.f32.mrb[0].mxu0
  %v1441 = vpop.f32.mrb[0].mxu0
  %v1442 = vadd.f32 0.0, %v1441
  %v1443 = vpop.f32.mrb[0].mxu0
  %1444 = vmatprep.mubr.bf16.mxu0 0
  %1445 = vmatmul.mubr.bf16.gmra.mrb[0].mxu0 %v842
  %v1446 = vpop.f32.mrb[0].mxu0
  %v1447 = vadd.f32 0.0, %v1446
  %v1448 = vpop.f32.mrb[0].mxu0
  %v1449 = vpop.f32.mrb[0].mxu0
  %v1450 = vadd.f32 0.0, %v1449
  %v1451 = vpop.f32.mrb[0].mxu0
  %1452 = vmatprep.mubr.bf16.mxu0 0
  %1453 = vmatmul.mubr.bf16.gmra.mrb[0].mxu0 %v843
  %v1454 = vpop.f32.mrb[0].mxu0
  %v1455 = vadd.f32 0.0, %v1454
  %v1456 = vpop.f32.mrb[0].mxu0
  %v1457 = vpop.f32.mrb[0].mxu0
  %v1458 = vadd.f32 0.0, %v1457
  %v1459 = vpop.f32.mrb[0].mxu0
  %1460 = vmatprep.mubr.bf16.mxu0 0
  %1461 = vmatmul.mubr.bf16.gmra.mrb[0].mxu0 %v844
  %v1462 = vpop.f32.mrb[0].mxu0
  %v1463 = vadd.f32 0.0, %v1462
  %v1464 = vpop.f32.mrb[0].mxu0
  %v1465 = vpop.f32.mrb[0].mxu0
  %v1466 = vadd.f32 0.0, %v1465
  %v1467 = vpop.f32.mrb[0].mxu0
  %1468 = vmatprep.mubr.bf16.mxu0 0
  %1469 = vmatmul.mubr.bf16.gmra.mrb[0].mxu0 %v845
  %v1470 = vpop.f32.mrb[0].mxu0
  %v1471 = vadd.f32 0.0, %v1470
  %v1472 = vpop.f32.mrb[0].mxu0
  %v1473 = vpop.f32.mrb[0].mxu0
  %v1474 = vadd.f32 0.0, %v1473
  %v1475 = vpop.f32.mrb[0].mxu0
  %1476 = vmatprep.mubr.bf16.mxu0 0
  %1477 = vmatmul.mubr.bf16.gmra.mrb[0].mxu0 %v846
  %v1478 = vpop.f32.mrb[0].mxu0
  %v1479 = vadd.f32 0.0, %v1478
  %v1480 = vpop.f32.mrb[0].mxu0
  %v1481 = vpop.f32.mrb[0].mxu0
  %v1482 = vadd.f32 0.0, %v1481
  %v1483 = vpop.f32.mrb[0].mxu0
  %1484 = vmatprep.mubr.bf16.mxu0 0
  %1485 = vmatmul.mubr.bf16.gmra.mrb[0].mxu0 %v847
  %v1486 = vpop.f32.mrb[0].mxu0
  %v1487 = vadd.f32 0.0, %v1486
  %v1488 = vpop.f32.mrb[0].mxu0
  %v1489 = vpop.f32.mrb[0].mxu0
  %v1490 = vadd.f32 0.0, %v1489
  %v1491 = vpop.f32.mrb[0].mxu0
  %1492 = vmatprep.mubr.bf16.mxu0 0
  %1493 = vmatmul.mubr.bf16.gmra.mrb[0].mxu0 %v848
  %v1494 = vpop.f32.mrb[0].mxu0
  %v1495 = vadd.f32 0.0, %v1494
  %v1496 = vpop.f32.mrb[0].mxu0
  %v1497 = vpop.f32.mrb[0].mxu0
  %v1498 = vadd.f32 0.0, %v1497
  %v1499 = vpop.f32.mrb[0].mxu0
  %1500 = vmatprep.mubr.bf16.mxu0 0
  %1501 = vmatmul.mubr.bf16.gmra.mrb[0].mxu0 %v849
  %v1502 = vpop.f32.mrb[0].mxu0
  %v1503 = vadd.f32 0.0, %v1502
  %v1504 = vpop.f32.mrb[0].mxu0
  %v1505 = vpop.f32.mrb[0].mxu0
  %v1506 = vadd.f32 0.0, %v1505
  %v1507 = vpop.f32.mrb[0].mxu0
  %1508 = vmatprep.mubr.bf16.mxu0 0
  %1509 = vmatmul.mubr.bf16.gmra.mrb[0].mxu0 %v850
  %v1510 = vpop.f32.mrb[0].mxu0
  %v1511 = vadd.f32 0.0, %v1510
  %v1512 = vpop.f32.mrb[0].mxu0
  %v1513 = vpop.f32.mrb[0].mxu0
  %v1514 = vadd.f32 0.0, %v1513
  %v1515 = vpop.f32.mrb[0].mxu0
  %1516 = vmatprep.mubr.bf16.mxu0 0
  %1517 = vmatmul.mubr.bf16.gmra.mrb[0].mxu0 %v851
  %v1518 = vpop.f32.mrb[0].mxu0
  %v1519 = vadd.f32 0.0, %v1518
  %v1520 = vpop.f32.mrb[0].mxu0
  %v1521 = vpop.f32.mrb[0].mxu0
  %v1522 = vadd.f32 0.0, %v1521
  %v1523 = vpop.f32.mrb[0].mxu0
  %1524 = vmatprep.mubr.bf16.mxu0 0
  %1525 = vmatmul.mubr.bf16.gmra.mrb[0].mxu0 %v852
  %v1526 = vpop.f32.mrb[0].mxu0
  %v1527 = vadd.f32 0.0, %v1526
  %v1528 = vpop.f32.mrb[0].mxu0
  %v1529 = vpop.f32.mrb[0].mxu0
  %v1530 = vadd.f32 0.0, %v1529
  %v1531 = vpop.f32.mrb[0].mxu0
  %1532 = vmatprep.mubr.bf16.mxu0 0
  %1533 = vmatmul.mubr.bf16.gmra.mrb[0].mxu0 %v853
  %v1534 = vpop.f32.mrb[0].mxu0
  %v1535 = vadd.f32 0.0, %v1534
  %v1536 = vpop.f32.mrb[0].mxu0
  %v1537 = vpop.f32.mrb[0].mxu0
  %v1538 = vadd.f32 0.0, %v1537
  %v1539 = vpop.f32.mrb[0].mxu0
  %1540 = vmatprep.mubr.bf16.mxu0 0
  %1541 = vmatmul.mubr.bf16.gmra.mrb[0].mxu0 %v854
  %v1542 = vpop.f32.mrb[0].mxu0
  %v1543 = vadd.f32 0.0, %v1542
  %v1544 = vpop.f32.mrb[0].mxu0
  %v1545 = vpop.f32.mrb[0].mxu0
  %v1546 = vadd.f32 0.0, %v1545
  %v1547 = vpop.f32.mrb[0].mxu0
  %1548 = vmatprep.mubr.bf16.mxu0 0
  %1549 = vmatmul.mubr.bf16.gmra.mrb[0].mxu0 %v855
  %v1550 = vpop.f32.mrb[0].mxu0
  %v1551 = vadd.f32 0.0, %v1550
  %v1552 = vpop.f32.mrb[0].mxu0
  %v1553 = vpop.f32.mrb[0].mxu0
  %v1554 = vadd.f32 0.0, %v1553
  %v1555 = vpop.f32.mrb[0].mxu0
  %1556 = vmatprep.mubr.bf16.mxu0 0
  %1557 = vmatmul.mubr.bf16.gmra.mrb[0].mxu0 %v856
  %v1558 = vpop.f32.mrb[0].mxu0
  %v1559 = vadd.f32 0.0, %v1558
  %v1560 = vpop.f32.mrb[0].mxu0
  %v1561 = vpop.f32.mrb[0].mxu0
  %v1562 = vadd.f32 0.0, %v1561
  %v1563 = vpop.f32.mrb[0].mxu0
  %1564 = vmatprep.mubr.bf16.mxu0 0
  %1565 = vmatmul.mubr.bf16.gmra.mrb[0].mxu0 %v857
  %v1566 = vpop.f32.mrb[0].mxu0
  %v1567 = vadd.f32 0.0, %v1566
  %v1568 = vpop.f32.mrb[0].mxu0
  %v1569 = vpop.f32.mrb[0].mxu0
  %v1570 = vadd.f32 0.0, %v1569
  %v1571 = vpop.f32.mrb[0].mxu0
  %1572 = vmatprep.mubr.bf16.mxu0 0
  %1573 = vmatmul.mubr.bf16.gmra.mrb[0].mxu0 %v858
  %v1574 = vpop.f32.mrb[0].mxu0
  %v1575 = vadd.f32 0.0, %v1574
  %v1576 = vpop.f32.mrb[0].mxu0
  %v1577 = vpop.f32.mrb[0].mxu0
  %v1578 = vadd.f32 0.0, %v1577
  %v1579 = vpop.f32.mrb[0].mxu0
  %1580 = vmatprep.mubr.bf16.mxu0 0
  %1581 = vmatmul.mubr.bf16.gmra.mrb[0].mxu0 %v859
  %v1582 = vpop.f32.mrb[0].mxu0
  %v1583 = vadd.f32 0.0, %v1582
  %v1584 = vpop.f32.mrb[0].mxu0
  %v1585 = vpop.f32.mrb[0].mxu0
  %v1586 = vadd.f32 0.0, %v1585
  %v1587 = vpop.f32.mrb[0].mxu0
  %1588 = vmatprep.mubr.bf16.mxu0 0
  %1589 = vmatmul.mubr.bf16.gmra.mrb[0].mxu0 %v860
  %v1590 = vpop.f32.mrb[0].mxu0
  %v1591 = vadd.f32 0.0, %v1590
  %v1592 = vpop.f32.mrb[0].mxu0
  %v1593 = vpop.f32.mrb[0].mxu0
  %v1594 = vadd.f32 0.0, %v1593
  %v1595 = vpop.f32.mrb[0].mxu0
  %1596 = vmatprep.mubr.bf16.mxu0 0
  %1597 = vmatmul.mubr.bf16.gmra.mrb[0].mxu0 %v861
  %v1598 = vpop.f32.mrb[0].mxu0
  %v1599 = vadd.f32 0.0, %v1598
  %v1600 = vpop.f32.mrb[0].mxu0
  %v1601 = vpop.f32.mrb[0].mxu0
  %v1602 = vadd.f32 0.0, %v1601
  %v1603 = vpop.f32.mrb[0].mxu0
  %1604 = vmatprep.mubr.bf16.mxu0 0
  %1605 = vmatmul.mubr.bf16.gmra.mrb[0].mxu0 %v862
  %v1606 = vpop.f32.mrb[0].mxu0
  %v1607 = vadd.f32 0.0, %v1606
  %v1608 = vpop.f32.mrb[0].mxu0
  %v1609 = vpop.f32.mrb[0].mxu0
  %v1610 = vadd.f32 0.0, %v1609
  %v1611 = vpop.f32.mrb[0].mxu0
  %1612 = vmatprep.mubr.bf16.mxu0 0
  %1613 = vmatmul.mubr.bf16.gmra.mrb[0].mxu0 %v863
  %v1614 = vpop.f32.mrb[0].mxu0
  %v1615 = vadd.f32 0.0, %v1614
  %v1616 = vpop.f32.mrb[0].mxu0
  %v1617 = vpop.f32.mrb[0].mxu0
  %v1618 = vadd.f32 0.0, %v1617
  %v1619 = vpop.f32.mrb[0].mxu0
  %1620 = vmatprep.mubr.bf16.mxu0 0
  %1621 = vmatmul.mubr.bf16.gmra.mrb[0].mxu0 %v864
  %v1622 = vpop.f32.mrb[0].mxu0
  %v1623 = vadd.f32 0.0, %v1622
  %v1624 = vpop.f32.mrb[0].mxu0
  %v1625 = vpop.f32.mrb[0].mxu0
  %v1626 = vadd.f32 0.0, %v1625
  %v1627 = vpop.f32.mrb[0].mxu0
  %1628 = vmatprep.mubr.bf16.mxu0 0
  %1629 = vmatmul.mubr.bf16.gmra.mrb[0].mxu0 %v865
  %v1630 = vpop.f32.mrb[0].mxu0
  %v1631 = vadd.f32 0.0, %v1630
  %v1632 = vpop.f32.mrb[0].mxu0
  %v1633 = vpop.f32.mrb[0].mxu0
  %v1634 = vadd.f32 0.0, %v1633
  %v1635 = vpop.f32.mrb[0].mxu0
  %1636 = vmatprep.mubr.bf16.mxu0 0
  %1637 = vmatmul.mubr.bf16.gmra.mrb[0].mxu0 %v866
  %v1638 = vpop.f32.mrb[0].mxu0
  %v1639 = vadd.f32 0.0, %v1638
  %v1640 = vpop.f32.mrb[0].mxu0
  %v1641 = vpop.f32.mrb[0].mxu0
  %v1642 = vadd.f32 0.0, %v1641
  %v1643 = vpop.f32.mrb[0].mxu0
  %1644 = vmatprep.mubr.bf16.mxu0 0
  %1645 = vmatmul.mubr.bf16.gmra.mrb[0].mxu0 %v867
  %v1646 = vpop.f32.mrb[0].mxu0
  %v1647 = vadd.f32 0.0, %v1646
  %v1648 = vpop.f32.mrb[0].mxu0
  %v1649 = vpop.f32.mrb[0].mxu0
  %v1650 = vadd.f32 0.0, %v1649
  %v1651 = vpop.f32.mrb[0].mxu0
  %1652 = vmatprep.mubr.bf16.mxu0 0
  %1653 = vmatmul.mubr.bf16.gmra.mrb[0].mxu0 %v868
  %v1654 = vpop.f32.mrb[0].mxu0
  %v1655 = vadd.f32 0.0, %v1654
  %v1656 = vpop.f32.mrb[0].mxu0
  %v1657 = vpop.f32.mrb[0].mxu0
  %v1658 = vadd.f32 0.0, %v1657
  %v1659 = vpop.f32.mrb[0].mxu0
  %1660 = vmatprep.mubr.bf16.mxu0 0
  %1661 = vmatmul.mubr.bf16.gmra.mrb[0].mxu0 %v869
  %v1662 = vpop.f32.mrb[0].mxu0
  %v1663 = vadd.f32 0.0, %v1662
  %v1664 = vpop.f32.mrb[0].mxu0
  %v1665 = vpop.f32.mrb[0].mxu0
  %v1666 = vadd.f32 0.0, %v1665
  %v1667 = vpop.f32.mrb[0].mxu0
  %1668 = vmatprep.mubr.bf16.mxu0 0
  %1669 = vmatmul.mubr.bf16.gmra.mrb[0].mxu0 %v870
  %v1670 = vpop.f32.mrb[0].mxu0
  %v1671 = vadd.f32 0.0, %v1670
  %v1672 = vpop.f32.mrb[0].mxu0
  %v1673 = vpop.f32.mrb[0].mxu0
  %v1674 = vadd.f32 0.0, %v1673
  %v1675 = vpop.f32.mrb[0].mxu0
  %1676 = vmatprep.mubr.bf16.mxu0 0
  %1677 = vmatmul.mubr.bf16.gmra.mrb[0].mxu0 %v871
  %v1678 = vpop.f32.mrb[0].mxu0
  %v1679 = vadd.f32 0.0, %v1678
  %v1680 = vpop.f32.mrb[0].mxu0
  %v1681 = vpop.f32.mrb[0].mxu0
  %v1682 = vadd.f32 0.0, %v1681
  %v1683 = vpop.f32.mrb[0].mxu0
  %1684 = vmatprep.mubr.bf16.mxu0 0
  %1685 = vmatmul.mubr.bf16.gmra.mrb[0].mxu0 %v872
  %v1686 = vpop.f32.mrb[0].mxu0
  %v1687 = vadd.f32 0.0, %v1686
  %v1688 = vpop.f32.mrb[0].mxu0
  %v1689 = vpop.f32.mrb[0].mxu0
  %v1690 = vadd.f32 0.0, %v1689
  %v1691 = vpop.f32.mrb[0].mxu0
  %1692 = vmatprep.mubr.bf16.mxu0 0
  %1693 = vmatmul.mubr.bf16.gmra.mrb[0].mxu0 %v873
  %v1694 = vpop.f32.mrb[0].mxu0
  %v1695 = vadd.f32 0.0, %v1694
  %v1696 = vpop.f32.mrb[0].mxu0
  %v1697 = vpop.f32.mrb[0].mxu0
  %v1698 = vadd.f32 0.0, %v1697
  %v1699 = vpop.f32.mrb[0].mxu0
  %1700 = vmatprep.mubr.bf16.mxu0 0
  %1701 = vmatmul.mubr.bf16.gmra.mrb[0].mxu0 %v874
  %v1702 = vpop.f32.mrb[0].mxu0
  %v1703 = vadd.f32 0.0, %v1702
  %v1704 = vpop.f32.mrb[0].mxu0
  %v1705 = vpop.f32.mrb[0].mxu0
  %v1706 = vadd.f32 0.0, %v1705
  %v1707 = vpop.f32.mrb[0].mxu0
  %1708 = vmatprep.mubr.bf16.mxu0 0
  %1709 = vmatmul.mubr.bf16.gmra.mrb[0].mxu0 %v875
  %v1710 = vpop.f32.mrb[0].mxu0
  %v1711 = vadd.f32 0.0, %v1710
  %v1712 = vpop.f32.mrb[0].mxu0
  %v1713 = vpop.f32.mrb[0].mxu0
  %v1714 = vadd.f32 0.0, %v1713
  %v1715 = vpop.f32.mrb[0].mxu0
  %1716 = vmatprep.mubr.bf16.mxu0 0
  %1717 = vmatmul.mubr.bf16.gmra.mrb[0].mxu0 %v876
  %v1718 = vpop.f32.mrb[0].mxu0
  %v1719 = vadd.f32 0.0, %v1718
  %v1720 = vpop.f32.mrb[0].mxu0
  %v1721 = vpop.f32.mrb[0].mxu0
  %v1722 = vadd.f32 0.0, %v1721
  %v1723 = vpop.f32.mrb[0].mxu0
  %1724 = vmatprep.mubr.bf16.mxu0 0
  %1725 = vmatmul.mubr.bf16.gmra.mrb[0].mxu0 %v877
  %v1726 = vpop.f32.mrb[0].mxu0
  %v1727 = vadd.f32 0.0, %v1726
  %v1728 = vpop.f32.mrb[0].mxu0
  %v1729 = vpop.f32.mrb[0].mxu0
  %v1730 = vadd.f32 0.0, %v1729
  %v1731 = vpop.f32.mrb[0].mxu0
  %1732 = vmatprep.mubr.bf16.mxu0 0
  %1733 = vmatmul.mubr.bf16.gmra.mrb[0].mxu0 %v878
  %v1734 = vpop.f32.mrb[0].mxu0
  %v1735 = vadd.f32 0.0, %v1734
  %v1736 = vpop.f32.mrb[0].mxu0
  %v1737 = vpop.f32.mrb[0].mxu0
  %v1738 = vadd.f32 0.0, %v1737
  %v1739 = vpop.f32.mrb[0].mxu0
  %1740 = vmatprep.mubr.bf16.mxu0 0
  %1741 = vmatmul.mubr.bf16.gmra.mrb[0].mxu0 %v879
  %v1742 = vpop.f32.mrb[0].mxu0
  %v1743 = vadd.f32 0.0, %v1742
  %v1744 = vpop.f32.mrb[0].mxu0
  %v1745 = vpop.f32.mrb[0].mxu0
  %v1746 = vadd.f32 0.0, %v1745
  %v1747 = vpop.f32.mrb[0].mxu0
  %1748 = vmatprep.mubr.bf16.mxu0 0
  %1749 = vmatmul.mubr.bf16.gmra.mrb[0].mxu0 %v880
  %v1750 = vpop.f32.mrb[0].mxu0
  %v1751 = vadd.f32 0.0, %v1750
  %v1752 = vpop.f32.mrb[0].mxu0
  %v1753 = vpop.f32.mrb[0].mxu0
  %v1754 = vadd.f32 0.0, %v1753
  %v1755 = vpop.f32.mrb[0].mxu0
  %1756 = vmatprep.mubr.bf16.mxu0 0
  %1757 = vmatmul.mubr.bf16.gmra.mrb[0].mxu0 %v881
  %v1758 = vpop.f32.mrb[0].mxu0
  %v1759 = vadd.f32 0.0, %v1758
  %v1760 = vpop.f32.mrb[0].mxu0
  %v1761 = vpop.f32.mrb[0].mxu0
  %v1762 = vadd.f32 0.0, %v1761
  %v1763 = vpop.f32.mrb[0].mxu0
  %1764 = vmatprep.mubr.bf16.mxu0 0
  %1765 = vmatmul.mubr.bf16.gmra.mrb[0].mxu0 %v882
  %v1766 = vpop.f32.mrb[0].mxu0
  %v1767 = vadd.f32 0.0, %v1766
  %v1768 = vpop.f32.mrb[0].mxu0
  %v1769 = vpop.f32.mrb[0].mxu0
  %v1770 = vadd.f32 0.0, %v1769
  %v1771 = vpop.f32.mrb[0].mxu0
  %1772 = vmatprep.mubr.bf16.mxu0 0
  %1773 = vmatmul.mubr.bf16.gmra.mrb[0].mxu0 %v883
  %v1774 = vpop.f32.mrb[0].mxu0
  %v1775 = vadd.f32 0.0, %v1774
  %v1776 = vpop.f32.mrb[0].mxu0
  %v1777 = vpop.f32.mrb[0].mxu0
  %v1778 = vadd.f32 0.0, %v1777
  %v1779 = vpop.f32.mrb[0].mxu0
  %1780 = vmatprep.mubr.bf16.mxu0 0
  %1781 = vmatmul.mubr.bf16.gmra.mrb[0].mxu0 %v884
  %v1782 = vpop.f32.mrb[0].mxu0
  %v1783 = vadd.f32 0.0, %v1782
  %v1784 = vpop.f32.mrb[0].mxu0
  %v1785 = vpop.f32.mrb[0].mxu0
  %v1786 = vadd.f32 0.0, %v1785
  %v1787 = vpop.f32.mrb[0].mxu0
  %1788 = vmatprep.mubr.bf16.mxu0 0
  %1789 = vmatmul.mubr.bf16.gmra.mrb[0].mxu0 %v885
  %v1790 = vpop.f32.mrb[0].mxu0
  %v1791 = vadd.f32 0.0, %v1790
  %v1792 = vpop.f32.mrb[0].mxu0
  %v1793 = vpop.f32.mrb[0].mxu0
  %v1794 = vadd.f32 0.0, %v1793
  %v1795 = vpop.f32.mrb[0].mxu0
  %1796 = vmatprep.mubr.bf16.mxu0 0
  %1797 = vmatmul.mubr.bf16.gmra.mrb[0].mxu0 %v886
  %v1798 = vpop.f32.mrb[0].mxu0
  %v1799 = vadd.f32 0.0, %v1798
  %v1800 = vpop.f32.mrb[0].mxu0
  %v1801 = vpop.f32.mrb[0].mxu0
  %v1802 = vadd.f32 0.0, %v1801
  %v1803 = vpop.f32.mrb[0].mxu0
  %1804 = vmatprep.mubr.bf16.mxu0 0
  %1805 = vmatmul.mubr.bf16.gmra.mrb[0].mxu0 %v887
  %v1806 = vpop.f32.mrb[0].mxu0
  %v1807 = vadd.f32 0.0, %v1806
  %v1808 = vpop.f32.mrb[0].mxu0
  %v1809 = vpop.f32.mrb[0].mxu0
  %v1810 = vadd.f32 0.0, %v1809
  %v1811 = vpop.f32.mrb[0].mxu0
  %1812 = vmatprep.mubr.bf16.mxu0 0
  %1813 = vmatmul.mubr.bf16.gmra.mrb[0].mxu0 %v888
  %v1814 = vpop.f32.mrb[0].mxu0
  %v1815 = vadd.f32 0.0, %v1814
  %v1816 = vpop.f32.mrb[0].mxu0
  %v1817 = vpop.f32.mrb[0].mxu0
  %v1818 = vadd.f32 0.0, %v1817
  %v1819 = vpop.f32.mrb[0].mxu0
  %1820 = vmatprep.mubr.bf16.mxu0 0
  %1821 = vmatmul.mubr.bf16.gmra.mrb[0].mxu0 %v889
  %v1822 = vpop.f32.mrb[0].mxu0
  %v1823 = vadd.f32 0.0, %v1822
  %v1824 = vpop.f32.mrb[0].mxu0
  %v1825 = vpop.f32.mrb[0].mxu0
  %v1826 = vadd.f32 0.0, %v1825
  %v1827 = vpop.f32.mrb[0].mxu0
  %1828 = vmatprep.mubr.bf16.mxu0 0
  %1829 = vmatmul.mubr.bf16.gmra.mrb[0].mxu0 %v890
  %v1830 = vpop.f32.mrb[0].mxu0
  %v1831 = vadd.f32 0.0, %v1830
  %v1832 = vpop.f32.mrb[0].mxu0
  %v1833 = vpop.f32.mrb[0].mxu0
  %v1834 = vadd.f32 0.0, %v1833
  %v1835 = vpop.f32.mrb[0].mxu0
  %1836 = vmatprep.mubr.bf16.mxu0 0
  %1837 = vmatmul.mubr.bf16.gmra.mrb[0].mxu0 %v891
  %v1838 = vpop.f32.mrb[0].mxu0
  %v1839 = vadd.f32 0.0, %v1838
  %v1840 = vpop.f32.mrb[0].mxu0
  %v1841 = vpop.f32.mrb[0].mxu0
  %v1842 = vadd.f32 0.0, %v1841
  %v1843 = vpop.f32.mrb[0].mxu0
  %1844 = vmatprep.mubr.bf16.mxu0 0
  %1845 = vmatmul.mubr.bf16.gmra.mrb[0].mxu0 %v892
  %v1846 = vpop.f32.mrb[0].mxu0
  %v1847 = vadd.f32 0.0, %v1846
  %v1848 = vpop.f32.mrb[0].mxu0
  %v1849 = vpop.f32.mrb[0].mxu0
  %v1850 = vadd.f32 0.0, %v1849
  %v1851 = vpop.f32.mrb[0].mxu0
  %1852 = vmatprep.mubr.bf16.mxu0 0
  %1853 = vmatmul.mubr.bf16.gmra.mrb[0].mxu0 %v893
  %v1854 = vpop.f32.mrb[0].mxu0
  %v1855 = vadd.f32 0.0, %v1854
  %v1856 = vpop.f32.mrb[0].mxu0
  %v1857 = vpop.f32.mrb[0].mxu0
  %v1858 = vadd.f32 0.0, %v1857
  %v1859 = vpop.f32.mrb[0].mxu0
  %1860 = vmatprep.mubr.bf16.mxu0 0
  %1861 = vmatmul.mubr.bf16.gmra.mrb[0].mxu0 %v894
  %v1862 = vpop.f32.mrb[0].mxu0
  %v1863 = vadd.f32 0.0, %v1862
  %v1864 = vpop.f32.mrb[0].mxu0
  %v1865 = vpop.f32.mrb[0].mxu0
  %v1866 = vadd.f32 0.0, %v1865
  %v1867 = vpop.f32.mrb[0].mxu0
  %1868 = vmatprep.mubr.bf16.mxu0 0
  %1869 = vmatmul.mubr.bf16.gmra.mrb[0].mxu0 %v895
  %v1870 = vpop.f32.mrb[0].mxu0
  %v1871 = vadd.f32 0.0, %v1870
  %v1872 = vpop.f32.mrb[0].mxu0
  %v1873 = vpop.f32.mrb[0].mxu0
  %v1874 = vadd.f32 0.0, %v1873
  %v1875 = vpop.f32.mrb[0].mxu0
  %1876 = vmatprep.mubr.bf16.mxu0 0
  %1877 = vmatmul.mubr.bf16.gmra.mrb[0].mxu0 %v896
  %v1878 = vpop.f32.mrb[0].mxu0
  %v1879 = vadd.f32 0.0, %v1878
  %v1880 = vpop.f32.mrb[0].mxu0
  %v1881 = vpop.f32.mrb[0].mxu0
  %v1882 = vadd.f32 0.0, %v1881
  %v1883 = vpop.f32.mrb[0].mxu0
  %1884 = vmatprep.mubr.bf16.mxu0 0
  %1885 = vmatmul.mubr.bf16.gmra.mrb[0].mxu0 %v897
  %v1886 = vpop.f32.mrb[0].mxu0
  %v1887 = vadd.f32 0.0, %v1886
  %v1888 = vpop.f32.mrb[0].mxu0
  %v1889 = vpop.f32.mrb[0].mxu0
  %v1890 = vadd.f32 0.0, %v1889
  %v1891 = vpop.f32.mrb[0].mxu0
  %1892 = vmatprep.mubr.bf16.mxu0 0
  %1893 = vmatmul.mubr.bf16.gmra.mrb[0].mxu0 %v898
  %v1894 = vpop.f32.mrb[0].mxu0
  %v1895 = vadd.f32 0.0, %v1894
  %v1896 = vpop.f32.mrb[0].mxu0
  %v1897 = vpop.f32.mrb[0].mxu0
  %v1898 = vadd.f32 0.0, %v1897
  %v1899 = vpop.f32.mrb[0].mxu0
  %1900 = vmatprep.mubr.bf16.mxu0 0
  %1901 = vmatmul.mubr.bf16.gmra.mrb[0].mxu0 %v899
  %v1902 = vpop.f32.mrb[0].mxu0
  %v1903 = vadd.f32 0.0, %v1902
  %v1904 = vpop.f32.mrb[0].mxu0
  %v1905 = vpop.f32.mrb[0].mxu0
  %v1906 = vadd.f32 0.0, %v1905
  %v1907 = vpop.f32.mrb[0].mxu0
  %1908 = vmatprep.mubr.bf16.mxu0 0
  %1909 = vmatmul.mubr.bf16.gmra.mrb[0].mxu0 %v900
  %v1910 = vpop.f32.mrb[0].mxu0
  %v1911 = vadd.f32 0.0, %v1910
  %v1912 = vpop.f32.mrb[0].mxu0
  %v1913 = vpop.f32.mrb[0].mxu0
  %v1914 = vadd.f32 0.0, %v1913
  %v1915 = vpop.f32.mrb[0].mxu0
  %1916 = vmatprep.mubr.bf16.mxu0 0
  %1917 = vmatmul.mubr.bf16.gmra.mrb[0].mxu0 %v901
  %v1918 = vpop.f32.mrb[0].mxu0
  %v1919 = vadd.f32 0.0, %v1918
  %v1920 = vpop.f32.mrb[0].mxu0
  %v1921 = vpop.f32.mrb[0].mxu0
  %v1922 = vadd.f32 0.0, %v1921
  %v1923 = vpop.f32.mrb[0].mxu0
  %1924 = vmatprep.mubr.bf16.mxu0 0
  %1925 = vmatmul.mubr.bf16.gmra.mrb[0].mxu0 %v902
  %v1926 = vpop.f32.mrb[0].mxu0
  %v1927 = vadd.f32 0.0, %v1926
  %v1928 = vpop.f32.mrb[0].mxu0
  %v1929 = vpop.f32.mrb[0].mxu0
  %v1930 = vadd.f32 0.0, %v1929
  %v1931 = vpop.f32.mrb[0].mxu0
  %1932 = vmatprep.mubr.bf16.mxu0 0
  %1933 = vmatmul.mubr.bf16.gmra.mrb[0].mxu0 %v903
  %v1934 = vpop.f32.mrb[0].mxu0
  %v1935 = vadd.f32 0.0, %v1934
  %v1936 = vpop.f32.mrb[0].mxu0
  %v1937 = vpop.f32.mrb[0].mxu0
  %v1938 = vadd.f32 0.0, %v1937
  %v1939 = vpop.f32.mrb[0].mxu0
  %1940 = vmatprep.mubr.bf16.mxu0 0
  %1941 = vmatmul.mubr.bf16.gmra.mrb[0].mxu0 %v904
  %v1942 = vpop.f32.mrb[0].mxu0
  %v1943 = vadd.f32 0.0, %v1942
  %v1944 = vpop.f32.mrb[0].mxu0
  %v1945 = vpop.f32.mrb[0].mxu0
  %v1946 = vadd.f32 0.0, %v1945
  %v1947 = vpop.f32.mrb[0].mxu0
  %1948 = vmatprep.mubr.bf16.mxu0 0
  %1949 = vmatmul.mubr.bf16.gmra.mrb[0].mxu0 %v905
  %v1950 = vpop.f32.mrb[0].mxu0
  %v1951 = vadd.f32 0.0, %v1950
  %v1952 = vpop.f32.mrb[0].mxu0
  %v1953 = vpop.f32.mrb[0].mxu0
  %v1954 = vadd.f32 0.0, %v1953
  %v1955 = vpop.f32.mrb[0].mxu0
  %1956 = vmatprep.mubr.bf16.mxu0 0
  %1957 = vmatmul.mubr.bf16.gmra.mrb[0].mxu0 %v906
  %v1958 = vpop.f32.mrb[0].mxu0
  %v1959 = vadd.f32 0.0, %v1958
  %v1960 = vpop.f32.mrb[0].mxu0
  %v1961 = vpop.f32.mrb[0].mxu0
  %v1962 = vadd.f32 0.0, %v1961
  %v1963 = vpop.f32.mrb[0].mxu0
  %1964 = vmatprep.mubr.bf16.mxu0 0
  %1965 = vmatmul.mubr.bf16.gmra.mrb[0].mxu0 %v907
  %v1966 = vpop.f32.mrb[0].mxu0
  %v1967 = vadd.f32 0.0, %v1966
  %v1968 = vpop.f32.mrb[0].mxu0
  %v1969 = vpop.f32.mrb[0].mxu0
  %v1970 = vadd.f32 0.0, %v1969
  %v1971 = vpop.f32.mrb[0].mxu0
  %1972 = vmatprep.mubr.bf16.mxu0 0
  %1973 = vmatmul.mubr.bf16.gmra.mrb[0].mxu0 %v908
  %v1974 = vpop.f32.mrb[0].mxu0
  %v1975 = vadd.f32 0.0, %v1974
  %v1976 = vpop.f32.mrb[0].mxu0
  %v1977 = vpop.f32.mrb[0].mxu0
  %v1978 = vadd.f32 0.0, %v1977
  %v1979 = vpop.f32.mrb[0].mxu0
  %1980 = vmatprep.mubr.bf16.mxu0 0
  %1981 = vmatmul.mubr.bf16.gmra.mrb[0].mxu0 %v909
  %v1982 = vpop.f32.mrb[0].mxu0
  %v1983 = vadd.f32 0.0, %v1982
  %v1984 = vpop.f32.mrb[0].mxu0
  %v1985 = vpop.f32.mrb[0].mxu0
  %v1986 = vadd.f32 0.0, %v1985
  %v1987 = vpop.f32.mrb[0].mxu0
  %1988 = vmatprep.mubr.bf16.mxu0 0
  %1989 = vmatmul.mubr.bf16.gmra.mrb[0].mxu0 %v910
  %v1990 = vpop.f32.mrb[0].mxu0
  %v1991 = vadd.f32 0.0, %v1990
  %v1992 = vpop.f32.mrb[0].mxu0
  %v1993 = vpop.f32.mrb[0].mxu0
  %v1994 = vadd.f32 0.0, %v1993
  %v1995 = vpop.f32.mrb[0].mxu0
  %1996 = vmatprep.mubr.bf16.mxu0 0
  %1997 = vmatmul.mubr.bf16.gmra.mrb[0].mxu0 %v911
  %v1998 = vpop.f32.mrb[0].mxu0
  %v1999 = vadd.f32 0.0, %v1998
  %v2000 = vpop.f32.mrb[0].mxu0
  %v2001 = vpop.f32.mrb[0].mxu0
  %v2002 = vadd.f32 0.0, %v2001
  %v2003 = vpop.f32.mrb[0].mxu0
  %2004 = vmatprep.mubr.bf16.mxu0 0
  %2005 = vmatmul.mubr.bf16.gmra.mrb[0].mxu0 %v912
  %v2006 = vpop.f32.mrb[0].mxu0
  %v2007 = vadd.f32 0.0, %v2006
  %v2008 = vpop.f32.mrb[0].mxu0
  %v2009 = vpop.f32.mrb[0].mxu0
  %v2010 = vadd.f32 0.0, %v2009
  %v2011 = vpop.f32.mrb[0].mxu0
  %2012 = vmatprep.mubr.bf16.mxu0 0
  %2013 = vmatmul.mubr.bf16.gmra.mrb[0].mxu0 %v913
  %v2014 = vpop.f32.mrb[0].mxu0
  %v2015 = vadd.f32 0.0, %v2014
  %v2016 = vpop.f32.mrb[0].mxu0
  %v2017 = vpop.f32.mrb[0].mxu0
  %v2018 = vadd.f32 0.0, %v2017
  %v2019 = vpop.f32.mrb[0].mxu0
  %2020 = vmatprep.mubr.bf16.mxu0 0
  %2021 = vmatmul.mubr.bf16.gmra.mrb[0].mxu0 %v914
  %v2022 = vpop.f32.mrb[0].mxu0
  %v2023 = vadd.f32 0.0, %v2022
  %v2024 = vpop.f32.mrb[0].mxu0
  %v2025 = vpop.f32.mrb[0].mxu0
  %v2026 = vadd.f32 0.0, %v2025
  %v2027 = vpop.f32.mrb[0].mxu0
  %2028 = vmatprep.mubr.bf16.mxu0 0
  %2029 = vmatmul.mubr.bf16.gmra.mrb[0].mxu0 %v915
  %v2030 = vpop.f32.mrb[0].mxu0
  %v2031 = vadd.f32 0.0, %v2030
  %v2032 = vpop.f32.mrb[0].mxu0
  %v2033 = vpop.f32.mrb[0].mxu0
  %v2034 = vadd.f32 0.0, %v2033
  %v2035 = vpop.f32.mrb[0].mxu0
  %2036 = vmatprep.mubr.bf16.mxu0 0
  %2037 = vmatmul.mubr.bf16.gmra.mrb[0].mxu0 %v916
  %v2038 = vpop.f32.mrb[0].mxu0
  %v2039 = vadd.f32 0.0, %v2038
  %v2040 = vpop.f32.mrb[0].mxu0
  %v2041 = vpop.f32.mrb[0].mxu0
  %v2042 = vadd.f32 0.0, %v2041
  %v2043 = vpop.f32.mrb[0].mxu0
  %2044 = vmatprep.mubr.bf16.mxu0 0
  %2045 = vmatmul.mubr.bf16.gmra.mrb[0].mxu0 %v917
  %v2046 = vpop.f32.mrb[0].mxu0
  %v2047 = vadd.f32 0.0, %v2046
  %v2048 = vpop.f32.mrb[0].mxu0
  %v2049 = vpop.f32.mrb[0].mxu0
  %v2050 = vadd.f32 0.0, %v2049
  %v2051 = vpop.f32.mrb[0].mxu0
  %2052 = vmatprep.mubr.bf16.mxu0 0
  %2053 = vmatmul.mubr.bf16.gmra.mrb[0].mxu0 %v918
  %v2054 = vpop.f32.mrb[0].mxu0
  %v2055 = vadd.f32 0.0, %v2054
  %v2056 = vpop.f32.mrb[0].mxu0
  %v2057 = vpop.f32.mrb[0].mxu0
  %v2058 = vadd.f32 0.0, %v2057
  %v2059 = vpop.f32.mrb[0].mxu0
  %2060 = vmatprep.mubr.bf16.mxu0 0
  %2061 = vmatmul.mubr.bf16.gmra.mrb[0].mxu0 %v919
  %v2062 = vpop.f32.mrb[0].mxu0
  %v2063 = vadd.f32 0.0, %v2062
  %v2064 = vpop.f32.mrb[0].mxu0
  %v2065 = vpop.f32.mrb[0].mxu0
  %v2066 = vadd.f32 0.0, %v2065
  %v2067 = vpop.f32.mrb[0].mxu0
  %2068 = vmatprep.mubr.bf16.mxu0 0
  %2069 = vmatmul.mubr.bf16.gmra.mrb[0].mxu0 %v920
  %v2070 = vpop.f32.mrb[0].mxu0
  %v2071 = vadd.f32 0.0, %v2070
  %v2072 = vpop.f32.mrb[0].mxu0
  %v2073 = vpop.f32.mrb[0].mxu0
  %v2074 = vadd.f32 0.0, %v2073
  %v2075 = vpop.f32.mrb[0].mxu0
  %2076 = vmatprep.mubr.bf16.mxu0 0
  %2077 = vmatmul.mubr.bf16.gmra.mrb[0].mxu0 %v921
  %v2078 = vpop.f32.mrb[0].mxu0
  %v2079 = vadd.f32 0.0, %v2078
  %v2080 = vpop.f32.mrb[0].mxu0
  %v2081 = vpop.f32.mrb[0].mxu0
  %v2082 = vadd.f32 0.0, %v2081
  %v2083 = vpop.f32.mrb[0].mxu0
  %2084 = vmatprep.mubr.bf16.mxu0 0
  %2085 = vmatmul.mubr.bf16.gmra.mrb[0].mxu0 %v922
  %v2086 = vpop.f32.mrb[0].mxu0
  %v2087 = vadd.f32 0.0, %v2086
  %v2088 = vpop.f32.mrb[0].mxu0
  %v2089 = vpop.f32.mrb[0].mxu0
  %v2090 = vadd.f32 0.0, %v2089
  %v2091 = vpop.f32.mrb[0].mxu0
  %2092 = vmatprep.mubr.bf16.mxu0 0
  %2093 = vmatmul.mubr.bf16.gmra.mrb[0].mxu0 %v923
  %v2094 = vpop.f32.mrb[0].mxu0
  %v2095 = vadd.f32 0.0, %v2094
  %v2096 = vpop.f32.mrb[0].mxu0
  %v2097 = vpop.f32.mrb[0].mxu0
  %v2098 = vadd.f32 0.0, %v2097
  %v2099 = vpop.f32.mrb[0].mxu0
  %2100 = vmatprep.mubr.bf16.mxu0 0
  %2101 = vmatmul.mubr.bf16.gmra.mrb[0].mxu0 %v924
  %v2102 = vpop.f32.mrb[0].mxu0
  %v2103 = vadd.f32 0.0, %v2102
  %v2104 = vpop.f32.mrb[0].mxu0
  %v2105 = vpop.f32.mrb[0].mxu0
  %v2106 = vadd.f32 0.0, %v2105
  %v2107 = vpop.f32.mrb[0].mxu0
  %2108 = vmatprep.mubr.bf16.mxu0 0
  %2109 = vmatmul.mubr.bf16.gmra.mrb[0].mxu0 %v925
  %v2110 = vpop.f32.mrb[0].mxu0
  %v2111 = vadd.f32 0.0, %v2110
  %v2112 = vpop.f32.mrb[0].mxu0
  %v2113 = vpop.f32.mrb[0].mxu0
  %v2114 = vadd.f32 0.0, %v2113
  %v2115 = vpop.f32.mrb[0].mxu0
  %2116 = vmatprep.mubr.bf16.mxu0 0
  %2117 = vmatmul.mubr.bf16.gmra.mrb[0].mxu0 %v926
  %v2118 = vpop.f32.mrb[0].mxu0
  %v2119 = vadd.f32 0.0, %v2118
  %v2120 = vpop.f32.mrb[0].mxu0
  %v2121 = vpop.f32.mrb[0].mxu0
  %v2122 = vadd.f32 0.0, %v2121
  %v2123 = vpop.f32.mrb[0].mxu0
  %2124 = vmatprep.mubr.bf16.mxu0 0
  %2125 = vmatmul.mubr.bf16.gmra.mrb[0].mxu0 %v927
  %v2126 = vpop.f32.mrb[0].mxu0
  %v2127 = vadd.f32 0.0, %v2126
  %v2128 = vpop.f32.mrb[0].mxu0
  %v2129 = vpop.f32.mrb[0].mxu0
  %v2130 = vadd.f32 0.0, %v2129
  %v2131 = vpop.f32.mrb[0].mxu0
  %2132 = vmatprep.mubr.bf16.mxu0 0
  %2133 = vmatmul.mubr.bf16.gmra.mrb[0].mxu0 %v928
  %v2134 = vpop.f32.mrb[0].mxu0
  %v2135 = vadd.f32 0.0, %v2134
  %v2136 = vpop.f32.mrb[0].mxu0
  %v2137 = vpop.f32.mrb[0].mxu0
  %v2138 = vadd.f32 0.0, %v2137
  %v2139 = vpop.f32.mrb[0].mxu0
  %2140 = vmatprep.mubr.bf16.mxu0 0
  %2141 = vmatmul.mubr.bf16.gmra.mrb[0].mxu0 %v929
  %v2142 = vpop.f32.mrb[0].mxu0
  %v2143 = vadd.f32 0.0, %v2142
  %v2144 = vpop.f32.mrb[0].mxu0
  %v2145 = vpop.f32.mrb[0].mxu0
  %v2146 = vadd.f32 0.0, %v2145
  %v2147 = vpop.f32.mrb[0].mxu0
  %2148 = vmatprep.mubr.bf16.mxu0 0
  %2149 = vmatmul.mubr.bf16.gmra.mrb[0].mxu0 %v930
  %v2150 = vpop.f32.mrb[0].mxu0
  %v2151 = vadd.f32 0.0, %v2150
  %v2152 = vpop.f32.mrb[0].mxu0
  %v2153 = vpop.f32.mrb[0].mxu0
  %v2154 = vadd.f32 0.0, %v2153
  %v2155 = vpop.f32.mrb[0].mxu0
  %2156 = vmatprep.mubr.bf16.mxu0 0
  %2157 = vmatmul.mubr.bf16.gmra.mrb[0].mxu0 %v931
  %v2158 = vpop.f32.mrb[0].mxu0
  %v2159 = vadd.f32 0.0, %v2158
  %v2160 = vpop.f32.mrb[0].mxu0
  %v2161 = vpop.f32.mrb[0].mxu0
  %v2162 = vadd.f32 0.0, %v2161
  %v2163 = vpop.f32.mrb[0].mxu0
  %2164 = vdwg.mxu0
  %v2166 = vlaneseq
  %v2167 = vshrl.u32 %v2166, 7
  %v2168 = vsub.s32 0, %v2167
  %v2169 = vrot.slane %v290, %v2168
  %v2171 = vmul.f32 %v1143, %v2169
  %v2172 = vmul.f32 %v1146, %v2169
  %v2173 = vmul.f32 %v1151, %v2169
  %v2174 = vmul.f32 %v1154, %v2169
  %v2175 = vmul.f32 %v1159, %v2169
  %v2176 = vmul.f32 %v1162, %v2169
  %v2177 = vmul.f32 %v1167, %v2169
  %v2178 = vmul.f32 %v1170, %v2169
  %v2179 = vmul.f32 %v1175, %v2169
  %v2180 = vmul.f32 %v1178, %v2169
  %v2181 = vmul.f32 %v1183, %v2169
  %v2182 = vmul.f32 %v1186, %v2169
  %v2183 = vmul.f32 %v1191, %v2169
  %v2184 = vmul.f32 %v1194, %v2169
  %v2185 = vmul.f32 %v1199, %v2169
  %v2186 = vmul.f32 %v1202, %v2169
  %v2187 = vmul.f32 %v1207, %v2169
  %v2188 = vmul.f32 %v1210, %v2169
  %v2189 = vmul.f32 %v1215, %v2169
  %v2190 = vmul.f32 %v1218, %v2169
  %v2191 = vmul.f32 %v1223, %v2169
  %v2192 = vmul.f32 %v1226, %v2169
  %v2193 = vmul.f32 %v1231, %v2169
  %v2194 = vmul.f32 %v1234, %v2169
  %v2195 = vmul.f32 %v1239, %v2169
  %v2196 = vmul.f32 %v1242, %v2169
  %v2197 = vmul.f32 %v1247, %v2169
  %v2198 = vmul.f32 %v1250, %v2169
  %v2199 = vmul.f32 %v1255, %v2169
  %v2200 = vmul.f32 %v1258, %v2169
  %v2201 = vmul.f32 %v1263, %v2169
  %v2202 = vmul.f32 %v1266, %v2169
  %v2203 = vmul.f32 %v1271, %v2169
  %v2204 = vmul.f32 %v1274, %v2169
  %v2205 = vmul.f32 %v1279, %v2169
  %v2206 = vmul.f32 %v1282, %v2169
  %v2207 = vmul.f32 %v1287, %v2169
  %v2208 = vmul.f32 %v1290, %v2169
  %v2209 = vmul.f32 %v1295, %v2169
  %v2210 = vmul.f32 %v1298, %v2169
  %v2211 = vmul.f32 %v1303, %v2169
  %v2212 = vmul.f32 %v1306, %v2169
  %v2213 = vmul.f32 %v1311, %v2169
  %v2214 = vmul.f32 %v1314, %v2169
  %v2215 = vmul.f32 %v1319, %v2169
  %v2216 = vmul.f32 %v1322, %v2169
  %v2217 = vmul.f32 %v1327, %v2169
  %v2218 = vmul.f32 %v1330, %v2169
  %v2219 = vmul.f32 %v1335, %v2169
  %v2220 = vmul.f32 %v1338, %v2169
  %v2221 = vmul.f32 %v1343, %v2169
  %v2222 = vmul.f32 %v1346, %v2169
  %v2223 = vmul.f32 %v1351, %v2169
  %v2224 = vmul.f32 %v1354, %v2169
  %v2225 = vmul.f32 %v1359, %v2169
  %v2226 = vmul.f32 %v1362, %v2169
  %v2227 = vmul.f32 %v1367, %v2169
  %v2228 = vmul.f32 %v1370, %v2169
  %v2229 = vmul.f32 %v1375, %v2169
  %v2230 = vmul.f32 %v1378, %v2169
  %v2231 = vmul.f32 %v1383, %v2169
  %v2232 = vmul.f32 %v1386, %v2169
  %v2233 = vmul.f32 %v1391, %v2169
  %v2234 = vmul.f32 %v1394, %v2169
  %v2235 = vmul.f32 %v1399, %v2169
  %v2236 = vmul.f32 %v1402, %v2169
  %v2237 = vmul.f32 %v1407, %v2169
  %v2238 = vmul.f32 %v1410, %v2169
  %v2239 = vmul.f32 %v1415, %v2169
  %v2240 = vmul.f32 %v1418, %v2169
  %v2241 = vmul.f32 %v1423, %v2169
  %v2242 = vmul.f32 %v1426, %v2169
  %v2243 = vmul.f32 %v1431, %v2169
  %v2244 = vmul.f32 %v1434, %v2169
  %v2245 = vmul.f32 %v1439, %v2169
  %v2246 = vmul.f32 %v1442, %v2169
  %v2247 = vmul.f32 %v1447, %v2169
  %v2248 = vmul.f32 %v1450, %v2169
  %v2249 = vmul.f32 %v1455, %v2169
  %v2250 = vmul.f32 %v1458, %v2169
  %v2251 = vmul.f32 %v1463, %v2169
  %v2252 = vmul.f32 %v1466, %v2169
  %v2253 = vmul.f32 %v1471, %v2169
  %v2254 = vmul.f32 %v1474, %v2169
  %v2255 = vmul.f32 %v1479, %v2169
  %v2256 = vmul.f32 %v1482, %v2169
  %v2257 = vmul.f32 %v1487, %v2169
  %v2258 = vmul.f32 %v1490, %v2169
  %v2259 = vmul.f32 %v1495, %v2169
  %v2260 = vmul.f32 %v1498, %v2169
  %v2261 = vmul.f32 %v1503, %v2169
  %v2262 = vmul.f32 %v1506, %v2169
  %v2263 = vmul.f32 %v1511, %v2169
  %v2264 = vmul.f32 %v1514, %v2169
  %v2265 = vmul.f32 %v1519, %v2169
  %v2266 = vmul.f32 %v1522, %v2169
  %v2267 = vmul.f32 %v1527, %v2169
  %v2268 = vmul.f32 %v1530, %v2169
  %v2269 = vmul.f32 %v1535, %v2169
  %v2270 = vmul.f32 %v1538, %v2169
  %v2271 = vmul.f32 %v1543, %v2169
  %v2272 = vmul.f32 %v1546, %v2169
  %v2273 = vmul.f32 %v1551, %v2169
  %v2274 = vmul.f32 %v1554, %v2169
  %v2275 = vmul.f32 %v1559, %v2169
  %v2276 = vmul.f32 %v1562, %v2169
  %v2277 = vmul.f32 %v1567, %v2169
  %v2278 = vmul.f32 %v1570, %v2169
  %v2279 = vmul.f32 %v1575, %v2169
  %v2280 = vmul.f32 %v1578, %v2169
  %v2281 = vmul.f32 %v1583, %v2169
  %v2282 = vmul.f32 %v1586, %v2169
  %v2283 = vmul.f32 %v1591, %v2169
  %v2284 = vmul.f32 %v1594, %v2169
  %v2285 = vmul.f32 %v1599, %v2169
  %v2286 = vmul.f32 %v1602, %v2169
  %v2287 = vmul.f32 %v1607, %v2169
  %v2288 = vmul.f32 %v1610, %v2169
  %v2289 = vmul.f32 %v1615, %v2169
  %v2290 = vmul.f32 %v1618, %v2169
  %v2291 = vmul.f32 %v1623, %v2169
  %v2292 = vmul.f32 %v1626, %v2169
  %v2293 = vmul.f32 %v1631, %v2169
  %v2294 = vmul.f32 %v1634, %v2169
  %v2295 = vmul.f32 %v1639, %v2169
  %v2296 = vmul.f32 %v1642, %v2169
  %v2297 = vmul.f32 %v1647, %v2169
  %v2298 = vmul.f32 %v1650, %v2169
  %v2299 = vmul.f32 %v1655, %v2169
  %v2300 = vmul.f32 %v1658, %v2169
  %v2301 = vmul.f32 %v1663, %v2169
  %v2302 = vmul.f32 %v1666, %v2169
  %v2303 = vmul.f32 %v1671, %v2169
  %v2304 = vmul.f32 %v1674, %v2169
  %v2305 = vmul.f32 %v1679, %v2169
  %v2306 = vmul.f32 %v1682, %v2169
  %v2307 = vmul.f32 %v1687, %v2169
  %v2308 = vmul.f32 %v1690, %v2169
  %v2309 = vmul.f32 %v1695, %v2169
  %v2310 = vmul.f32 %v1698, %v2169
  %v2311 = vmul.f32 %v1703, %v2169
  %v2312 = vmul.f32 %v1706, %v2169
  %v2313 = vmul.f32 %v1711, %v2169
  %v2314 = vmul.f32 %v1714, %v2169
  %v2315 = vmul.f32 %v1719, %v2169
  %v2316 = vmul.f32 %v1722, %v2169
  %v2317 = vmul.f32 %v1727, %v2169
  %v2318 = vmul.f32 %v1730, %v2169
  %v2319 = vmul.f32 %v1735, %v2169
  %v2320 = vmul.f32 %v1738, %v2169
  %v2321 = vmul.f32 %v1743, %v2169
  %v2322 = vmul.f32 %v1746, %v2169
  %v2323 = vmul.f32 %v1751, %v2169
  %v2324 = vmul.f32 %v1754, %v2169
  %v2325 = vmul.f32 %v1759, %v2169
  %v2326 = vmul.f32 %v1762, %v2169
  %v2327 = vmul.f32 %v1767, %v2169
  %v2328 = vmul.f32 %v1770, %v2169
  %v2329 = vmul.f32 %v1775, %v2169
  %v2330 = vmul.f32 %v1778, %v2169
  %v2331 = vmul.f32 %v1783, %v2169
  %v2332 = vmul.f32 %v1786, %v2169
  %v2333 = vmul.f32 %v1791, %v2169
  %v2334 = vmul.f32 %v1794, %v2169
  %v2335 = vmul.f32 %v1799, %v2169
  %v2336 = vmul.f32 %v1802, %v2169
  %v2337 = vmul.f32 %v1807, %v2169
  %v2338 = vmul.f32 %v1810, %v2169
  %v2339 = vmul.f32 %v1815, %v2169
  %v2340 = vmul.f32 %v1818, %v2169
  %v2341 = vmul.f32 %v1823, %v2169
  %v2342 = vmul.f32 %v1826, %v2169
  %v2343 = vmul.f32 %v1831, %v2169
  %v2344 = vmul.f32 %v1834, %v2169
  %v2345 = vmul.f32 %v1839, %v2169
  %v2346 = vmul.f32 %v1842, %v2169
  %v2347 = vmul.f32 %v1847, %v2169
  %v2348 = vmul.f32 %v1850, %v2169
  %v2349 = vmul.f32 %v1855, %v2169
  %v2350 = vmul.f32 %v1858, %v2169
  %v2351 = vmul.f32 %v1863, %v2169
  %v2352 = vmul.f32 %v1866, %v2169
  %v2353 = vmul.f32 %v1871, %v2169
  %v2354 = vmul.f32 %v1874, %v2169
  %v2355 = vmul.f32 %v1879, %v2169
  %v2356 = vmul.f32 %v1882, %v2169
  %v2357 = vmul.f32 %v1887, %v2169
  %v2358 = vmul.f32 %v1890, %v2169
  %v2359 = vmul.f32 %v1895, %v2169
  %v2360 = vmul.f32 %v1898, %v2169
  %v2361 = vmul.f32 %v1903, %v2169
  %v2362 = vmul.f32 %v1906, %v2169
  %v2363 = vmul.f32 %v1911, %v2169
  %v2364 = vmul.f32 %v1914, %v2169
  %v2365 = vmul.f32 %v1919, %v2169
  %v2366 = vmul.f32 %v1922, %v2169
  %v2367 = vmul.f32 %v1927, %v2169
  %v2368 = vmul.f32 %v1930, %v2169
  %v2369 = vmul.f32 %v1935, %v2169
  %v2370 = vmul.f32 %v1938, %v2169
  %v2371 = vmul.f32 %v1943, %v2169
  %v2372 = vmul.f32 %v1946, %v2169
  %v2373 = vmul.f32 %v1951, %v2169
  %v2374 = vmul.f32 %v1954, %v2169
  %v2375 = vmul.f32 %v1959, %v2169
  %v2376 = vmul.f32 %v1962, %v2169
  %v2377 = vmul.f32 %v1967, %v2169
  %v2378 = vmul.f32 %v1970, %v2169
  %v2379 = vmul.f32 %v1975, %v2169
  %v2380 = vmul.f32 %v1978, %v2169
  %v2381 = vmul.f32 %v1983, %v2169
  %v2382 = vmul.f32 %v1986, %v2169
  %v2383 = vmul.f32 %v1991, %v2169
  %v2384 = vmul.f32 %v1994, %v2169
  %v2385 = vmul.f32 %v1999, %v2169
  %v2386 = vmul.f32 %v2002, %v2169
  %v2387 = vmul.f32 %v2007, %v2169
  %v2388 = vmul.f32 %v2010, %v2169
  %v2389 = vmul.f32 %v2015, %v2169
  %v2390 = vmul.f32 %v2018, %v2169
  %v2391 = vmul.f32 %v2023, %v2169
  %v2392 = vmul.f32 %v2026, %v2169
  %v2393 = vmul.f32 %v2031, %v2169
  %v2394 = vmul.f32 %v2034, %v2169
  %v2395 = vmul.f32 %v2039, %v2169
  %v2396 = vmul.f32 %v2042, %v2169
  %v2397 = vmul.f32 %v2047, %v2169
  %v2398 = vmul.f32 %v2050, %v2169
  %v2399 = vmul.f32 %v2055, %v2169
  %v2400 = vmul.f32 %v2058, %v2169
  %v2401 = vmul.f32 %v2063, %v2169
  %v2402 = vmul.f32 %v2066, %v2169
  %v2403 = vmul.f32 %v2071, %v2169
  %v2404 = vmul.f32 %v2074, %v2169
  %v2405 = vmul.f32 %v2079, %v2169
  %v2406 = vmul.f32 %v2082, %v2169
  %v2407 = vmul.f32 %v2087, %v2169
  %v2408 = vmul.f32 %v2090, %v2169
  %v2409 = vmul.f32 %v2095, %v2169
  %v2410 = vmul.f32 %v2098, %v2169
  %v2411 = vmul.f32 %v2103, %v2169
  %v2412 = vmul.f32 %v2106, %v2169
  %v2413 = vmul.f32 %v2111, %v2169
  %v2414 = vmul.f32 %v2114, %v2169
  %v2415 = vmul.f32 %v2119, %v2169
  %v2416 = vmul.f32 %v2122, %v2169
  %v2417 = vmul.f32 %v2127, %v2169
  %v2418 = vmul.f32 %v2130, %v2169
  %v2419 = vmul.f32 %v2135, %v2169
  %v2420 = vmul.f32 %v2138, %v2169
  %v2421 = vmul.f32 %v2143, %v2169
  %v2422 = vmul.f32 %v2146, %v2169
  %v2423 = vmul.f32 %v2151, %v2169
  %v2424 = vmul.f32 %v2154, %v2169
  %v2425 = vmul.f32 %v2159, %v2169
  %v2426 = vmul.f32 %v2162, %v2169
  %v2428 = vlaneseq
  %v2429 = vshrl.u32 %v2428, 7
  %v2430 = vsub.s32 0, %v2429
  %v2431 = vrot.slane %v291, %v2430
  %v2433 = vadd.f32 %v2171, %v2431
  %v2434 = vadd.f32 %v2172, %v2431
  %v2435 = vadd.f32 %v2173, %v2431
  %v2436 = vadd.f32 %v2174, %v2431
  %v2437 = vadd.f32 %v2175, %v2431
  %v2438 = vadd.f32 %v2176, %v2431
  %v2439 = vadd.f32 %v2177, %v2431
  %v2440 = vadd.f32 %v2178, %v2431
  %v2441 = vadd.f32 %v2179, %v2431
  %v2442 = vadd.f32 %v2180, %v2431
  %v2443 = vadd.f32 %v2181, %v2431
  %v2444 = vadd.f32 %v2182, %v2431
  %v2445 = vadd.f32 %v2183, %v2431
  %v2446 = vadd.f32 %v2184, %v2431
  %v2447 = vadd.f32 %v2185, %v2431
  %v2448 = vadd.f32 %v2186, %v2431
  %v2449 = vadd.f32 %v2187, %v2431
  %v2450 = vadd.f32 %v2188, %v2431
  %v2451 = vadd.f32 %v2189, %v2431
  %v2452 = vadd.f32 %v2190, %v2431
  %v2453 = vadd.f32 %v2191, %v2431
  %v2454 = vadd.f32 %v2192, %v2431
  %v2455 = vadd.f32 %v2193, %v2431
  %v2456 = vadd.f32 %v2194, %v2431
  %v2457 = vadd.f32 %v2195, %v2431
  %v2458 = vadd.f32 %v2196, %v2431
  %v2459 = vadd.f32 %v2197, %v2431
  %v2460 = vadd.f32 %v2198, %v2431
  %v2461 = vadd.f32 %v2199, %v2431
  %v2462 = vadd.f32 %v2200, %v2431
  %v2463 = vadd.f32 %v2201, %v2431
  %v2464 = vadd.f32 %v2202, %v2431
  %v2465 = vadd.f32 %v2203, %v2431
  %v2466 = vadd.f32 %v2204, %v2431
  %v2467 = vadd.f32 %v2205, %v2431
  %v2468 = vadd.f32 %v2206, %v2431
  %v2469 = vadd.f32 %v2207, %v2431
  %v2470 = vadd.f32 %v2208, %v2431
  %v2471 = vadd.f32 %v2209, %v2431
  %v2472 = vadd.f32 %v2210, %v2431
  %v2473 = vadd.f32 %v2211, %v2431
  %v2474 = vadd.f32 %v2212, %v2431
  %v2475 = vadd.f32 %v2213, %v2431
  %v2476 = vadd.f32 %v2214, %v2431
  %v2477 = vadd.f32 %v2215, %v2431
  %v2478 = vadd.f32 %v2216, %v2431
  %v2479 = vadd.f32 %v2217, %v2431
  %v2480 = vadd.f32 %v2218, %v2431
  %v2481 = vadd.f32 %v2219, %v2431
  %v2482 = vadd.f32 %v2220, %v2431
  %v2483 = vadd.f32 %v2221, %v2431
  %v2484 = vadd.f32 %v2222, %v2431
  %v2485 = vadd.f32 %v2223, %v2431
  %v2486 = vadd.f32 %v2224, %v2431
  %v2487 = vadd.f32 %v2225, %v2431
  %v2488 = vadd.f32 %v2226, %v2431
  %v2489 = vadd.f32 %v2227, %v2431
  %v2490 = vadd.f32 %v2228, %v2431
  %v2491 = vadd.f32 %v2229, %v2431
  %v2492 = vadd.f32 %v2230, %v2431
  %v2493 = vadd.f32 %v2231, %v2431
  %v2494 = vadd.f32 %v2232, %v2431
  %v2495 = vadd.f32 %v2233, %v2431
  %v2496 = vadd.f32 %v2234, %v2431
  %v2497 = vadd.f32 %v2235, %v2431
  %v2498 = vadd.f32 %v2236, %v2431
  %v2499 = vadd.f32 %v2237, %v2431
  %v2500 = vadd.f32 %v2238, %v2431
  %v2501 = vadd.f32 %v2239, %v2431
  %v2502 = vadd.f32 %v2240, %v2431
  %v2503 = vadd.f32 %v2241, %v2431
  %v2504 = vadd.f32 %v2242, %v2431
  %v2505 = vadd.f32 %v2243, %v2431
  %v2506 = vadd.f32 %v2244, %v2431
  %v2507 = vadd.f32 %v2245, %v2431
  %v2508 = vadd.f32 %v2246, %v2431
  %v2509 = vadd.f32 %v2247, %v2431
  %v2510 = vadd.f32 %v2248, %v2431
  %v2511 = vadd.f32 %v2249, %v2431
  %v2512 = vadd.f32 %v2250, %v2431
  %v2513 = vadd.f32 %v2251, %v2431
  %v2514 = vadd.f32 %v2252, %v2431
  %v2515 = vadd.f32 %v2253, %v2431
  %v2516 = vadd.f32 %v2254, %v2431
  %v2517 = vadd.f32 %v2255, %v2431
  %v2518 = vadd.f32 %v2256, %v2431
  %v2519 = vadd.f32 %v2257, %v2431
  %v2520 = vadd.f32 %v2258, %v2431
  %v2521 = vadd.f32 %v2259, %v2431
  %v2522 = vadd.f32 %v2260, %v2431
  %v2523 = vadd.f32 %v2261, %v2431
  %v2524 = vadd.f32 %v2262, %v2431
  %v2525 = vadd.f32 %v2263, %v2431
  %v2526 = vadd.f32 %v2264, %v2431
  %v2527 = vadd.f32 %v2265, %v2431
  %v2528 = vadd.f32 %v2266, %v2431
  %v2529 = vadd.f32 %v2267, %v2431
  %v2530 = vadd.f32 %v2268, %v2431
  %v2531 = vadd.f32 %v2269, %v2431
  %v2532 = vadd.f32 %v2270, %v2431
  %v2533 = vadd.f32 %v2271, %v2431
  %v2534 = vadd.f32 %v2272, %v2431
  %v2535 = vadd.f32 %v2273, %v2431
  %v2536 = vadd.f32 %v2274, %v2431
  %v2537 = vadd.f32 %v2275, %v2431
  %v2538 = vadd.f32 %v2276, %v2431
  %v2539 = vadd.f32 %v2277, %v2431
  %v2540 = vadd.f32 %v2278, %v2431
  %v2541 = vadd.f32 %v2279, %v2431
  %v2542 = vadd.f32 %v2280, %v2431
  %v2543 = vadd.f32 %v2281, %v2431
  %v2544 = vadd.f32 %v2282, %v2431
  %v2545 = vadd.f32 %v2283, %v2431
  %v2546 = vadd.f32 %v2284, %v2431
  %v2547 = vadd.f32 %v2285, %v2431
  %v2548 = vadd.f32 %v2286, %v2431
  %v2549 = vadd.f32 %v2287, %v2431
  %v2550 = vadd.f32 %v2288, %v2431
  %v2551 = vadd.f32 %v2289, %v2431
  %v2552 = vadd.f32 %v2290, %v2431
  %v2553 = vadd.f32 %v2291, %v2431
  %v2554 = vadd.f32 %v2292, %v2431
  %v2555 = vadd.f32 %v2293, %v2431
  %v2556 = vadd.f32 %v2294, %v2431
  %v2557 = vadd.f32 %v2295, %v2431
  %v2558 = vadd.f32 %v2296, %v2431
  %v2559 = vadd.f32 %v2297, %v2431
  %v2560 = vadd.f32 %v2298, %v2431
  %v2561 = vadd.f32 %v2299, %v2431
  %v2562 = vadd.f32 %v2300, %v2431
  %v2563 = vadd.f32 %v2301, %v2431
  %v2564 = vadd.f32 %v2302, %v2431
  %v2565 = vadd.f32 %v2303, %v2431
  %v2566 = vadd.f32 %v2304, %v2431
  %v2567 = vadd.f32 %v2305, %v2431
  %v2568 = vadd.f32 %v2306, %v2431
  %v2569 = vadd.f32 %v2307, %v2431
  %v2570 = vadd.f32 %v2308, %v2431
  %v2571 = vadd.f32 %v2309, %v2431
  %v2572 = vadd.f32 %v2310, %v2431
  %v2573 = vadd.f32 %v2311, %v2431
  %v2574 = vadd.f32 %v2312, %v2431
  %v2575 = vadd.f32 %v2313, %v2431
  %v2576 = vadd.f32 %v2314, %v2431
  %v2577 = vadd.f32 %v2315, %v2431
  %v2578 = vadd.f32 %v2316, %v2431
  %v2579 = vadd.f32 %v2317, %v2431
  %v2580 = vadd.f32 %v2318, %v2431
  %v2581 = vadd.f32 %v2319, %v2431
  %v2582 = vadd.f32 %v2320, %v2431
  %v2583 = vadd.f32 %v2321, %v2431
  %v2584 = vadd.f32 %v2322, %v2431
  %v2585 = vadd.f32 %v2323, %v2431
  %v2586 = vadd.f32 %v2324, %v2431
  %v2587 = vadd.f32 %v2325, %v2431
  %v2588 = vadd.f32 %v2326, %v2431
  %v2589 = vadd.f32 %v2327, %v2431
  %v2590 = vadd.f32 %v2328, %v2431
  %v2591 = vadd.f32 %v2329, %v2431
  %v2592 = vadd.f32 %v2330, %v2431
  %v2593 = vadd.f32 %v2331, %v2431
  %v2594 = vadd.f32 %v2332, %v2431
  %v2595 = vadd.f32 %v2333, %v2431
  %v2596 = vadd.f32 %v2334, %v2431
  %v2597 = vadd.f32 %v2335, %v2431
  %v2598 = vadd.f32 %v2336, %v2431
  %v2599 = vadd.f32 %v2337, %v2431
  %v2600 = vadd.f32 %v2338, %v2431
  %v2601 = vadd.f32 %v2339, %v2431
  %v2602 = vadd.f32 %v2340, %v2431
  %v2603 = vadd.f32 %v2341, %v2431
  %v2604 = vadd.f32 %v2342, %v2431
  %v2605 = vadd.f32 %v2343, %v2431
  %v2606 = vadd.f32 %v2344, %v2431
  %v2607 = vadd.f32 %v2345, %v2431
  %v2608 = vadd.f32 %v2346, %v2431
  %v2609 = vadd.f32 %v2347, %v2431
  %v2610 = vadd.f32 %v2348, %v2431
  %v2611 = vadd.f32 %v2349, %v2431
  %v2612 = vadd.f32 %v2350, %v2431
  %v2613 = vadd.f32 %v2351, %v2431
  %v2614 = vadd.f32 %v2352, %v2431
  %v2615 = vadd.f32 %v2353, %v2431
  %v2616 = vadd.f32 %v2354, %v2431
  %v2617 = vadd.f32 %v2355, %v2431
  %v2618 = vadd.f32 %v2356, %v2431
  %v2619 = vadd.f32 %v2357, %v2431
  %v2620 = vadd.f32 %v2358, %v2431
  %v2621 = vadd.f32 %v2359, %v2431
  %v2622 = vadd.f32 %v2360, %v2431
  %v2623 = vadd.f32 %v2361, %v2431
  %v2624 = vadd.f32 %v2362, %v2431
  %v2625 = vadd.f32 %v2363, %v2431
  %v2626 = vadd.f32 %v2364, %v2431
  %v2627 = vadd.f32 %v2365, %v2431
  %v2628 = vadd.f32 %v2366, %v2431
  %v2629 = vadd.f32 %v2367, %v2431
  %v2630 = vadd.f32 %v2368, %v2431
  %v2631 = vadd.f32 %v2369, %v2431
  %v2632 = vadd.f32 %v2370, %v2431
  %v2633 = vadd.f32 %v2371, %v2431
  %v2634 = vadd.f32 %v2372, %v2431
  %v2635 = vadd.f32 %v2373, %v2431
  %v2636 = vadd.f32 %v2374, %v2431
  %v2637 = vadd.f32 %v2375, %v2431
  %v2638 = vadd.f32 %v2376, %v2431
  %v2639 = vadd.f32 %v2377, %v2431
  %v2640 = vadd.f32 %v2378, %v2431
  %v2641 = vadd.f32 %v2379, %v2431
  %v2642 = vadd.f32 %v2380, %v2431
  %v2643 = vadd.f32 %v2381, %v2431
  %v2644 = vadd.f32 %v2382, %v2431
  %v2645 = vadd.f32 %v2383, %v2431
  %v2646 = vadd.f32 %v2384, %v2431
  %v2647 = vadd.f32 %v2385, %v2431
  %v2648 = vadd.f32 %v2386, %v2431
  %v2649 = vadd.f32 %v2387, %v2431
  %v2650 = vadd.f32 %v2388, %v2431
  %v2651 = vadd.f32 %v2389, %v2431
  %v2652 = vadd.f32 %v2390, %v2431
  %v2653 = vadd.f32 %v2391, %v2431
  %v2654 = vadd.f32 %v2392, %v2431
  %v2655 = vadd.f32 %v2393, %v2431
  %v2656 = vadd.f32 %v2394, %v2431
  %v2657 = vadd.f32 %v2395, %v2431
  %v2658 = vadd.f32 %v2396, %v2431
  %v2659 = vadd.f32 %v2397, %v2431
  %v2660 = vadd.f32 %v2398, %v2431
  %v2661 = vadd.f32 %v2399, %v2431
  %v2662 = vadd.f32 %v2400, %v2431
  %v2663 = vadd.f32 %v2401, %v2431
  %v2664 = vadd.f32 %v2402, %v2431
  %v2665 = vadd.f32 %v2403, %v2431
  %v2666 = vadd.f32 %v2404, %v2431
  %v2667 = vadd.f32 %v2405, %v2431
  %v2668 = vadd.f32 %v2406, %v2431
  %v2669 = vadd.f32 %v2407, %v2431
  %v2670 = vadd.f32 %v2408, %v2431
  %v2671 = vadd.f32 %v2409, %v2431
  %v2672 = vadd.f32 %v2410, %v2431
  %v2673 = vadd.f32 %v2411, %v2431
  %v2674 = vadd.f32 %v2412, %v2431
  %v2675 = vadd.f32 %v2413, %v2431
  %v2676 = vadd.f32 %v2414, %v2431
  %v2677 = vadd.f32 %v2415, %v2431
  %v2678 = vadd.f32 %v2416, %v2431
  %v2679 = vadd.f32 %v2417, %v2431
  %v2680 = vadd.f32 %v2418, %v2431
  %v2681 = vadd.f32 %v2419, %v2431
  %v2682 = vadd.f32 %v2420, %v2431
  %v2683 = vadd.f32 %v2421, %v2431
  %v2684 = vadd.f32 %v2422, %v2431
  %v2685 = vadd.f32 %v2423, %v2431
  %v2686 = vadd.f32 %v2424, %v2431
  %v2687 = vadd.f32 %v2425, %v2431
  %v2688 = vadd.f32 %v2426, %v2431
  %v2689 = vmul.f32 %v2433, 0.5
  %v2690 = vmul.f32 %v2434, 0.5
  %v2691 = vmul.f32 %v2435, 0.5
  %v2692 = vmul.f32 %v2436, 0.5
  %v2693 = vmul.f32 %v2437, 0.5
  %v2694 = vmul.f32 %v2438, 0.5
  %v2695 = vmul.f32 %v2439, 0.5
  %v2696 = vmul.f32 %v2440, 0.5
  %v2697 = vmul.f32 %v2441, 0.5
  %v2698 = vmul.f32 %v2442, 0.5
  %v2699 = vmul.f32 %v2443, 0.5
  %v2700 = vmul.f32 %v2444, 0.5
  %v2701 = vmul.f32 %v2445, 0.5
  %v2702 = vmul.f32 %v2446, 0.5
  %v2703 = vmul.f32 %v2447, 0.5
  %v2704 = vmul.f32 %v2448, 0.5
  %v2705 = vmul.f32 %v2449, 0.5
  %v2706 = vmul.f32 %v2450, 0.5
  %v2707 = vmul.f32 %v2451, 0.5
  %v2708 = vmul.f32 %v2452, 0.5
  %v2709 = vmul.f32 %v2453, 0.5
  %v2710 = vmul.f32 %v2454, 0.5
  %v2711 = vmul.f32 %v2455, 0.5
  %v2712 = vmul.f32 %v2456, 0.5
  %v2713 = vmul.f32 %v2457, 0.5
  %v2714 = vmul.f32 %v2458, 0.5
  %v2715 = vmul.f32 %v2459, 0.5
  %v2716 = vmul.f32 %v2460, 0.5
  %v2717 = vmul.f32 %v2461, 0.5
  %v2718 = vmul.f32 %v2462, 0.5
  %v2719 = vmul.f32 %v2463, 0.5
  %v2720 = vmul.f32 %v2464, 0.5
  %v2721 = vmul.f32 %v2465, 0.5
  %v2722 = vmul.f32 %v2466, 0.5
  %v2723 = vmul.f32 %v2467, 0.5
  %v2724 = vmul.f32 %v2468, 0.5
  %v2725 = vmul.f32 %v2469, 0.5
  %v2726 = vmul.f32 %v2470, 0.5
  %v2727 = vmul.f32 %v2471, 0.5
  %v2728 = vmul.f32 %v2472, 0.5
  %v2729 = vmul.f32 %v2473, 0.5
  %v2730 = vmul.f32 %v2474, 0.5
  %v2731 = vmul.f32 %v2475, 0.5
  %v2732 = vmul.f32 %v2476, 0.5
  %v2733 = vmul.f32 %v2477, 0.5
  %v2734 = vmul.f32 %v2478, 0.5
  %v2735 = vmul.f32 %v2479, 0.5
  %v2736 = vmul.f32 %v2480, 0.5
  %v2737 = vmul.f32 %v2481, 0.5
  %v2738 = vmul.f32 %v2482, 0.5
  %v2739 = vmul.f32 %v2483, 0.5
  %v2740 = vmul.f32 %v2484, 0.5
  %v2741 = vmul.f32 %v2485, 0.5
  %v2742 = vmul.f32 %v2486, 0.5
  %v2743 = vmul.f32 %v2487, 0.5
  %v2744 = vmul.f32 %v2488, 0.5
  %v2745 = vmul.f32 %v2489, 0.5
  %v2746 = vmul.f32 %v2490, 0.5
  %v2747 = vmul.f32 %v2491, 0.5
  %v2748 = vmul.f32 %v2492, 0.5
  %v2749 = vmul.f32 %v2493, 0.5
  %v2750 = vmul.f32 %v2494, 0.5
  %v2751 = vmul.f32 %v2495, 0.5
  %v2752 = vmul.f32 %v2496, 0.5
  %v2753 = vmul.f32 %v2497, 0.5
  %v2754 = vmul.f32 %v2498, 0.5
  %v2755 = vmul.f32 %v2499, 0.5
  %v2756 = vmul.f32 %v2500, 0.5
  %v2757 = vmul.f32 %v2501, 0.5
  %v2758 = vmul.f32 %v2502, 0.5
  %v2759 = vmul.f32 %v2503, 0.5
  %v2760 = vmul.f32 %v2504, 0.5
  %v2761 = vmul.f32 %v2505, 0.5
  %v2762 = vmul.f32 %v2506, 0.5
  %v2763 = vmul.f32 %v2507, 0.5
  %v2764 = vmul.f32 %v2508, 0.5
  %v2765 = vmul.f32 %v2509, 0.5
  %v2766 = vmul.f32 %v2510, 0.5
  %v2767 = vmul.f32 %v2511, 0.5
  %v2768 = vmul.f32 %v2512, 0.5
  %v2769 = vmul.f32 %v2513, 0.5
  %v2770 = vmul.f32 %v2514, 0.5
  %v2771 = vmul.f32 %v2515, 0.5
  %v2772 = vmul.f32 %v2516, 0.5
  %v2773 = vmul.f32 %v2517, 0.5
  %v2774 = vmul.f32 %v2518, 0.5
  %v2775 = vmul.f32 %v2519, 0.5
  %v2776 = vmul.f32 %v2520, 0.5
  %v2777 = vmul.f32 %v2521, 0.5
  %v2778 = vmul.f32 %v2522, 0.5
  %v2779 = vmul.f32 %v2523, 0.5
  %v2780 = vmul.f32 %v2524, 0.5
  %v2781 = vmul.f32 %v2525, 0.5
  %v2782 = vmul.f32 %v2526, 0.5
  %v2783 = vmul.f32 %v2527, 0.5
  %v2784 = vmul.f32 %v2528, 0.5
  %v2785 = vmul.f32 %v2529, 0.5
  %v2786 = vmul.f32 %v2530, 0.5
  %v2787 = vmul.f32 %v2531, 0.5
  %v2788 = vmul.f32 %v2532, 0.5
  %v2789 = vmul.f32 %v2533, 0.5
  %v2790 = vmul.f32 %v2534, 0.5
  %v2791 = vmul.f32 %v2535, 0.5
  %v2792 = vmul.f32 %v2536, 0.5
  %v2793 = vmul.f32 %v2537, 0.5
  %v2794 = vmul.f32 %v2538, 0.5
  %v2795 = vmul.f32 %v2539, 0.5
  %v2796 = vmul.f32 %v2540, 0.5
  %v2797 = vmul.f32 %v2541, 0.5
  %v2798 = vmul.f32 %v2542, 0.5
  %v2799 = vmul.f32 %v2543, 0.5
  %v2800 = vmul.f32 %v2544, 0.5
  %v2801 = vmul.f32 %v2545, 0.5
  %v2802 = vmul.f32 %v2546, 0.5
  %v2803 = vmul.f32 %v2547, 0.5
  %v2804 = vmul.f32 %v2548, 0.5
  %v2805 = vmul.f32 %v2549, 0.5
  %v2806 = vmul.f32 %v2550, 0.5
  %v2807 = vmul.f32 %v2551, 0.5
  %v2808 = vmul.f32 %v2552, 0.5
  %v2809 = vmul.f32 %v2553, 0.5
  %v2810 = vmul.f32 %v2554, 0.5
  %v2811 = vmul.f32 %v2555, 0.5
  %v2812 = vmul.f32 %v2556, 0.5
  %v2813 = vmul.f32 %v2557, 0.5
  %v2814 = vmul.f32 %v2558, 0.5
  %v2815 = vmul.f32 %v2559, 0.5
  %v2816 = vmul.f32 %v2560, 0.5
  %v2817 = vmul.f32 %v2561, 0.5
  %v2818 = vmul.f32 %v2562, 0.5
  %v2819 = vmul.f32 %v2563, 0.5
  %v2820 = vmul.f32 %v2564, 0.5
  %v2821 = vmul.f32 %v2565, 0.5
  %v2822 = vmul.f32 %v2566, 0.5
  %v2823 = vmul.f32 %v2567, 0.5
  %v2824 = vmul.f32 %v2568, 0.5
  %v2825 = vmul.f32 %v2569, 0.5
  %v2826 = vmul.f32 %v2570, 0.5
  %v2827 = vmul.f32 %v2571, 0.5
  %v2828 = vmul.f32 %v2572, 0.5
  %v2829 = vmul.f32 %v2573, 0.5
  %v2830 = vmul.f32 %v2574, 0.5
  %v2831 = vmul.f32 %v2575, 0.5
  %v2832 = vmul.f32 %v2576, 0.5
  %v2833 = vmul.f32 %v2577, 0.5
  %v2834 = vmul.f32 %v2578, 0.5
  %v2835 = vmul.f32 %v2579, 0.5
  %v2836 = vmul.f32 %v2580, 0.5
  %v2837 = vmul.f32 %v2581, 0.5
  %v2838 = vmul.f32 %v2582, 0.5
  %v2839 = vmul.f32 %v2583, 0.5
  %v2840 = vmul.f32 %v2584, 0.5
  %v2841 = vmul.f32 %v2585, 0.5
  %v2842 = vmul.f32 %v2586, 0.5
  %v2843 = vmul.f32 %v2587, 0.5
  %v2844 = vmul.f32 %v2588, 0.5
  %v2845 = vmul.f32 %v2589, 0.5
  %v2846 = vmul.f32 %v2590, 0.5
  %v2847 = vmul.f32 %v2591, 0.5
  %v2848 = vmul.f32 %v2592, 0.5
  %v2849 = vmul.f32 %v2593, 0.5
  %v2850 = vmul.f32 %v2594, 0.5
  %v2851 = vmul.f32 %v2595, 0.5
  %v2852 = vmul.f32 %v2596, 0.5
  %v2853 = vmul.f32 %v2597, 0.5
  %v2854 = vmul.f32 %v2598, 0.5
  %v2855 = vmul.f32 %v2599, 0.5
  %v2856 = vmul.f32 %v2600, 0.5
  %v2857 = vmul.f32 %v2601, 0.5
  %v2858 = vmul.f32 %v2602, 0.5
  %v2859 = vmul.f32 %v2603, 0.5
  %v2860 = vmul.f32 %v2604, 0.5
  %v2861 = vmul.f32 %v2605, 0.5
  %v2862 = vmul.f32 %v2606, 0.5
  %v2863 = vmul.f32 %v2607, 0.5
  %v2864 = vmul.f32 %v2608, 0.5
  %v2865 = vmul.f32 %v2609, 0.5
  %v2866 = vmul.f32 %v2610, 0.5
  %v2867 = vmul.f32 %v2611, 0.5
  %v2868 = vmul.f32 %v2612, 0.5
  %v2869 = vmul.f32 %v2613, 0.5
  %v2870 = vmul.f32 %v2614, 0.5
  %v2871 = vmul.f32 %v2615, 0.5
  %v2872 = vmul.f32 %v2616, 0.5
  %v2873 = vmul.f32 %v2617, 0.5
  %v2874 = vmul.f32 %v2618, 0.5
  %v2875 = vmul.f32 %v2619, 0.5
  %v2876 = vmul.f32 %v2620, 0.5
  %v2877 = vmul.f32 %v2621, 0.5
  %v2878 = vmul.f32 %v2622, 0.5
  %v2879 = vmul.f32 %v2623, 0.5
  %v2880 = vmul.f32 %v2624, 0.5
  %v2881 = vmul.f32 %v2625, 0.5
  %v2882 = vmul.f32 %v2626, 0.5
  %v2883 = vmul.f32 %v2627, 0.5
  %v2884 = vmul.f32 %v2628, 0.5
  %v2885 = vmul.f32 %v2629, 0.5
  %v2886 = vmul.f32 %v2630, 0.5
  %v2887 = vmul.f32 %v2631, 0.5
  %v2888 = vmul.f32 %v2632, 0.5
  %v2889 = vmul.f32 %v2633, 0.5
  %v2890 = vmul.f32 %v2634, 0.5
  %v2891 = vmul.f32 %v2635, 0.5
  %v2892 = vmul.f32 %v2636, 0.5
  %v2893 = vmul.f32 %v2637, 0.5
  %v2894 = vmul.f32 %v2638, 0.5
  %v2895 = vmul.f32 %v2639, 0.5
  %v2896 = vmul.f32 %v2640, 0.5
  %v2897 = vmul.f32 %v2641, 0.5
  %v2898 = vmul.f32 %v2642, 0.5
  %v2899 = vmul.f32 %v2643, 0.5
  %v2900 = vmul.f32 %v2644, 0.5
  %v2901 = vmul.f32 %v2645, 0.5
  %v2902 = vmul.f32 %v2646, 0.5
  %v2903 = vmul.f32 %v2647, 0.5
  %v2904 = vmul.f32 %v2648, 0.5
  %v2905 = vmul.f32 %v2649, 0.5
  %v2906 = vmul.f32 %v2650, 0.5
  %v2907 = vmul.f32 %v2651, 0.5
  %v2908 = vmul.f32 %v2652, 0.5
  %v2909 = vmul.f32 %v2653, 0.5
  %v2910 = vmul.f32 %v2654, 0.5
  %v2911 = vmul.f32 %v2655, 0.5
  %v2912 = vmul.f32 %v2656, 0.5
  %v2913 = vmul.f32 %v2657, 0.5
  %v2914 = vmul.f32 %v2658, 0.5
  %v2915 = vmul.f32 %v2659, 0.5
  %v2916 = vmul.f32 %v2660, 0.5
  %v2917 = vmul.f32 %v2661, 0.5
  %v2918 = vmul.f32 %v2662, 0.5
  %v2919 = vmul.f32 %v2663, 0.5
  %v2920 = vmul.f32 %v2664, 0.5
  %v2921 = vmul.f32 %v2665, 0.5
  %v2922 = vmul.f32 %v2666, 0.5
  %v2923 = vmul.f32 %v2667, 0.5
  %v2924 = vmul.f32 %v2668, 0.5
  %v2925 = vmul.f32 %v2669, 0.5
  %v2926 = vmul.f32 %v2670, 0.5
  %v2927 = vmul.f32 %v2671, 0.5
  %v2928 = vmul.f32 %v2672, 0.5
  %v2929 = vmul.f32 %v2673, 0.5
  %v2930 = vmul.f32 %v2674, 0.5
  %v2931 = vmul.f32 %v2675, 0.5
  %v2932 = vmul.f32 %v2676, 0.5
  %v2933 = vmul.f32 %v2677, 0.5
  %v2934 = vmul.f32 %v2678, 0.5
  %v2935 = vmul.f32 %v2679, 0.5
  %v2936 = vmul.f32 %v2680, 0.5
  %v2937 = vmul.f32 %v2681, 0.5
  %v2938 = vmul.f32 %v2682, 0.5
  %v2939 = vmul.f32 %v2683, 0.5
  %v2940 = vmul.f32 %v2684, 0.5
  %v2941 = vmul.f32 %v2685, 0.5
  %v2942 = vmul.f32 %v2686, 0.5
  %v2943 = vmul.f32 %v2687, 0.5
  %v2944 = vmul.f32 %v2688, 0.5
  %v2945 = vtanh.pop %v2689
  %v2946 = vtanh.pop %v2690
  %v2947 = vtanh.pop %v2691
  %v2948 = vtanh.pop %v2692
  %v2949 = vtanh.pop %v2693
  %v2950 = vtanh.pop %v2694
  %v2951 = vtanh.pop %v2695
  %v2952 = vtanh.pop %v2696
  %v2953 = vtanh.pop %v2697
  %v2954 = vtanh.pop %v2698
  %v2955 = vtanh.pop %v2699
  %v2956 = vtanh.pop %v2700
  %v2957 = vtanh.pop %v2701
  %v2958 = vtanh.pop %v2702
  %v2959 = vtanh.pop %v2703
  %v2960 = vtanh.pop %v2704
  %v2961 = vtanh.pop %v2705
  %v2962 = vtanh.pop %v2706
  %v2963 = vtanh.pop %v2707
  %v2964 = vtanh.pop %v2708
  %v2965 = vtanh.pop %v2709
  %v2966 = vtanh.pop %v2710
  %v2967 = vtanh.pop %v2711
  %v2968 = vtanh.pop %v2712
  %v2969 = vtanh.pop %v2713
  %v2970 = vtanh.pop %v2714
  %v2971 = vtanh.pop %v2715
  %v2972 = vtanh.pop %v2716
  %v2973 = vtanh.pop %v2717
  %v2974 = vtanh.pop %v2718
  %v2975 = vtanh.pop %v2719
  %v2976 = vtanh.pop %v2720
  %v2977 = vtanh.pop %v2721
  %v2978 = vtanh.pop %v2722
  %v2979 = vtanh.pop %v2723
  %v2980 = vtanh.pop %v2724
  %v2981 = vtanh.pop %v2725
  %v2982 = vtanh.pop %v2726
  %v2983 = vtanh.pop %v2727
  %v2984 = vtanh.pop %v2728
  %v2985 = vtanh.pop %v2729
  %v2986 = vtanh.pop %v2730
  %v2987 = vtanh.pop %v2731
  %v2988 = vtanh.pop %v2732
  %v2989 = vtanh.pop %v2733
  %v2990 = vtanh.pop %v2734
  %v2991 = vtanh.pop %v2735
  %v2992 = vtanh.pop %v2736
  %v2993 = vtanh.pop %v2737
  %v2994 = vtanh.pop %v2738
  %v2995 = vtanh.pop %v2739
  %v2996 = vtanh.pop %v2740
  %v2997 = vtanh.pop %v2741
  %v2998 = vtanh.pop %v2742
  %v2999 = vtanh.pop %v2743
  %v3000 = vtanh.pop %v2744
  %v3001 = vtanh.pop %v2745
  %v3002 = vtanh.pop %v2746
  %v3003 = vtanh.pop %v2747
  %v3004 = vtanh.pop %v2748
  %v3005 = vtanh.pop %v2749
  %v3006 = vtanh.pop %v2750
  %v3007 = vtanh.pop %v2751
  %v3008 = vtanh.pop %v2752
  %v3009 = vtanh.pop %v2753
  %v3010 = vtanh.pop %v2754
  %v3011 = vtanh.pop %v2755
  %v3012 = vtanh.pop %v2756
  %v3013 = vtanh.pop %v2757
  %v3014 = vtanh.pop %v2758
  %v3015 = vtanh.pop %v2759
  %v3016 = vtanh.pop %v2760
  %v3017 = vtanh.pop %v2761
  %v3018 = vtanh.pop %v2762
  %v3019 = vtanh.pop %v2763
  %v3020 = vtanh.pop %v2764
  %v3021 = vtanh.pop %v2765
  %v3022 = vtanh.pop %v2766
  %v3023 = vtanh.pop %v2767
  %v3024 = vtanh.pop %v2768
  %v3025 = vtanh.pop %v2769
  %v3026 = vtanh.pop %v2770
  %v3027 = vtanh.pop %v2771
  %v3028 = vtanh.pop %v2772
  %v3029 = vtanh.pop %v2773
  %v3030 = vtanh.pop %v2774
  %v3031 = vtanh.pop %v2775
  %v3032 = vtanh.pop %v2776
  %v3033 = vtanh.pop %v2777
  %v3034 = vtanh.pop %v2778
  %v3035 = vtanh.pop %v2779
  %v3036 = vtanh.pop %v2780
  %v3037 = vtanh.pop %v2781
  %v3038 = vtanh.pop %v2782
  %v3039 = vtanh.pop %v2783
  %v3040 = vtanh.pop %v2784
  %v3041 = vtanh.pop %v2785
  %v3042 = vtanh.pop %v2786
  %v3043 = vtanh.pop %v2787
  %v3044 = vtanh.pop %v2788
  %v3045 = vtanh.pop %v2789
  %v3046 = vtanh.pop %v2790
  %v3047 = vtanh.pop %v2791
  %v3048 = vtanh.pop %v2792
  %v3049 = vtanh.pop %v2793
  %v3050 = vtanh.pop %v2794
  %v3051 = vtanh.pop %v2795
  %v3052 = vtanh.pop %v2796
  %v3053 = vtanh.pop %v2797
  %v3054 = vtanh.pop %v2798
  %v3055 = vtanh.pop %v2799
  %v3056 = vtanh.pop %v2800
  %v3057 = vtanh.pop %v2801
  %v3058 = vtanh.pop %v2802
  %v3059 = vtanh.pop %v2803
  %v3060 = vtanh.pop %v2804
  %v3061 = vtanh.pop %v2805
  %v3062 = vtanh.pop %v2806
  %v3063 = vtanh.pop %v2807
  %v3064 = vtanh.pop %v2808
  %v3065 = vtanh.pop %v2809
  %v3066 = vtanh.pop %v2810
  %v3067 = vtanh.pop %v2811
  %v3068 = vtanh.pop %v2812
  %v3069 = vtanh.pop %v2813
  %v3070 = vtanh.pop %v2814
  %v3071 = vtanh.pop %v2815
  %v3072 = vtanh.pop %v2816
  %v3073 = vtanh.pop %v2817
  %v3074 = vtanh.pop %v2818
  %v3075 = vtanh.pop %v2819
  %v3076 = vtanh.pop %v2820
  %v3077 = vtanh.pop %v2821
  %v3078 = vtanh.pop %v2822
  %v3079 = vtanh.pop %v2823
  %v3080 = vtanh.pop %v2824
  %v3081 = vtanh.pop %v2825
  %v3082 = vtanh.pop %v2826
  %v3083 = vtanh.pop %v2827
  %v3084 = vtanh.pop %v2828
  %v3085 = vtanh.pop %v2829
  %v3086 = vtanh.pop %v2830
  %v3087 = vtanh.pop %v2831
  %v3088 = vtanh.pop %v2832
  %v3089 = vtanh.pop %v2833
  %v3090 = vtanh.pop %v2834
  %v3091 = vtanh.pop %v2835
  %v3092 = vtanh.pop %v2836
  %v3093 = vtanh.pop %v2837
  %v3094 = vtanh.pop %v2838
  %v3095 = vtanh.pop %v2839
  %v3096 = vtanh.pop %v2840
  %v3097 = vtanh.pop %v2841
  %v3098 = vtanh.pop %v2842
  %v3099 = vtanh.pop %v2843
  %v3100 = vtanh.pop %v2844
  %v3101 = vtanh.pop %v2845
  %v3102 = vtanh.pop %v2846
  %v3103 = vtanh.pop %v2847
  %v3104 = vtanh.pop %v2848
  %v3105 = vtanh.pop %v2849
  %v3106 = vtanh.pop %v2850
  %v3107 = vtanh.pop %v2851
  %v3108 = vtanh.pop %v2852
  %v3109 = vtanh.pop %v2853
  %v3110 = vtanh.pop %v2854
  %v3111 = vtanh.pop %v2855
  %v3112 = vtanh.pop %v2856
  %v3113 = vtanh.pop %v2857
  %v3114 = vtanh.pop %v2858
  %v3115 = vtanh.pop %v2859
  %v3116 = vtanh.pop %v2860
  %v3117 = vtanh.pop %v2861
  %v3118 = vtanh.pop %v2862
  %v3119 = vtanh.pop %v2863
  %v3120 = vtanh.pop %v2864
  %v3121 = vtanh.pop %v2865
  %v3122 = vtanh.pop %v2866
  %v3123 = vtanh.pop %v2867
  %v3124 = vtanh.pop %v2868
  %v3125 = vtanh.pop %v2869
  %v3126 = vtanh.pop %v2870
  %v3127 = vtanh.pop %v2871
  %v3128 = vtanh.pop %v2872
  %v3129 = vtanh.pop %v2873
  %v3130 = vtanh.pop %v2874
  %v3131 = vtanh.pop %v2875
  %v3132 = vtanh.pop %v2876
  %v3133 = vtanh.pop %v2877
  %v3134 = vtanh.pop %v2878
  %v3135 = vtanh.pop %v2879
  %v3136 = vtanh.pop %v2880
  %v3137 = vtanh.pop %v2881
  %v3138 = vtanh.pop %v2882
  %v3139 = vtanh.pop %v2883
  %v3140 = vtanh.pop %v2884
  %v3141 = vtanh.pop %v2885
  %v3142 = vtanh.pop %v2886
  %v3143 = vtanh.pop %v2887
  %v3144 = vtanh.pop %v2888
  %v3145 = vtanh.pop %v2889
  %v3146 = vtanh.pop %v2890
  %v3147 = vtanh.pop %v2891
  %v3148 = vtanh.pop %v2892
  %v3149 = vtanh.pop %v2893
  %v3150 = vtanh.pop %v2894
  %v3151 = vtanh.pop %v2895
  %v3152 = vtanh.pop %v2896
  %v3153 = vtanh.pop %v2897
  %v3154 = vtanh.pop %v2898
  %v3155 = vtanh.pop %v2899
  %v3156 = vtanh.pop %v2900
  %v3157 = vtanh.pop %v2901
  %v3158 = vtanh.pop %v2902
  %v3159 = vtanh.pop %v2903
  %v3160 = vtanh.pop %v2904
  %v3161 = vtanh.pop %v2905
  %v3162 = vtanh.pop %v2906
  %v3163 = vtanh.pop %v2907
  %v3164 = vtanh.pop %v2908
  %v3165 = vtanh.pop %v2909
  %v3166 = vtanh.pop %v2910
  %v3167 = vtanh.pop %v2911
  %v3168 = vtanh.pop %v2912
  %v3169 = vtanh.pop %v2913
  %v3170 = vtanh.pop %v2914
  %v3171 = vtanh.pop %v2915
  %v3172 = vtanh.pop %v2916
  %v3173 = vtanh.pop %v2917
  %v3174 = vtanh.pop %v2918
  %v3175 = vtanh.pop %v2919
  %v3176 = vtanh.pop %v2920
  %v3177 = vtanh.pop %v2921
  %v3178 = vtanh.pop %v2922
  %v3179 = vtanh.pop %v2923
  %v3180 = vtanh.pop %v2924
  %v3181 = vtanh.pop %v2925
  %v3182 = vtanh.pop %v2926
  %v3183 = vtanh.pop %v2927
  %v3184 = vtanh.pop %v2928
  %v3185 = vtanh.pop %v2929
  %v3186 = vtanh.pop %v2930
  %v3187 = vtanh.pop %v2931
  %v3188 = vtanh.pop %v2932
  %v3189 = vtanh.pop %v2933
  %v3190 = vtanh.pop %v2934
  %v3191 = vtanh.pop %v2935
  %v3192 = vtanh.pop %v2936
  %v3193 = vtanh.pop %v2937
  %v3194 = vtanh.pop %v2938
  %v3195 = vtanh.pop %v2939
  %v3196 = vtanh.pop %v2940
  %v3197 = vtanh.pop %v2941
  %v3198 = vtanh.pop %v2942
  %v3199 = vtanh.pop %v2943
  %v3200 = vtanh.pop %v2944
  %v3201 = vadd.f32 %v2945, 1.0
  %v3202 = vadd.f32 %v2946, 1.0
  %v3203 = vadd.f32 %v2947, 1.0
  %v3204 = vadd.f32 %v2948, 1.0
  %v3205 = vadd.f32 %v2949, 1.0
  %v3206 = vadd.f32 %v2950, 1.0
  %v3207 = vadd.f32 %v2951, 1.0
  %v3208 = vadd.f32 %v2952, 1.0
  %v3209 = vadd.f32 %v2953, 1.0
  %v3210 = vadd.f32 %v2954, 1.0
  %v3211 = vadd.f32 %v2955, 1.0
  %v3212 = vadd.f32 %v2956, 1.0
  %v3213 = vadd.f32 %v2957, 1.0
  %v3214 = vadd.f32 %v2958, 1.0
  %v3215 = vadd.f32 %v2959, 1.0
  %v3216 = vadd.f32 %v2960, 1.0
  %v3217 = vadd.f32 %v2961, 1.0
  %v3218 = vadd.f32 %v2962, 1.0
  %v3219 = vadd.f32 %v2963, 1.0
  %v3220 = vadd.f32 %v2964, 1.0
  %v3221 = vadd.f32 %v2965, 1.0
  %v3222 = vadd.f32 %v2966, 1.0
  %v3223 = vadd.f32 %v2967, 1.0
  %v3224 = vadd.f32 %v2968, 1.0
  %v3225 = vadd.f32 %v2969, 1.0
  %v3226 = vadd.f32 %v2970, 1.0
  %v3227 = vadd.f32 %v2971, 1.0
  %v3228 = vadd.f32 %v2972, 1.0
  %v3229 = vadd.f32 %v2973, 1.0
  %v3230 = vadd.f32 %v2974, 1.0
  %v3231 = vadd.f32 %v2975, 1.0
  %v3232 = vadd.f32 %v2976, 1.0
  %v3233 = vadd.f32 %v2977, 1.0
  %v3234 = vadd.f32 %v2978, 1.0
  %v3235 = vadd.f32 %v2979, 1.0
  %v3236 = vadd.f32 %v2980, 1.0
  %v3237 = vadd.f32 %v2981, 1.0
  %v3238 = vadd.f32 %v2982, 1.0
  %v3239 = vadd.f32 %v2983, 1.0
  %v3240 = vadd.f32 %v2984, 1.0
  %v3241 = vadd.f32 %v2985, 1.0
  %v3242 = vadd.f32 %v2986, 1.0
  %v3243 = vadd.f32 %v2987, 1.0
  %v3244 = vadd.f32 %v2988, 1.0
  %v3245 = vadd.f32 %v2989, 1.0
  %v3246 = vadd.f32 %v2990, 1.0
  %v3247 = vadd.f32 %v2991, 1.0
  %v3248 = vadd.f32 %v2992, 1.0
  %v3249 = vadd.f32 %v2993, 1.0
  %v3250 = vadd.f32 %v2994, 1.0
  %v3251 = vadd.f32 %v2995, 1.0
  %v3252 = vadd.f32 %v2996, 1.0
  %v3253 = vadd.f32 %v2997, 1.0
  %v3254 = vadd.f32 %v2998, 1.0
  %v3255 = vadd.f32 %v2999, 1.0
  %v3256 = vadd.f32 %v3000, 1.0
  %v3257 = vadd.f32 %v3001, 1.0
  %v3258 = vadd.f32 %v3002, 1.0
  %v3259 = vadd.f32 %v3003, 1.0
  %v3260 = vadd.f32 %v3004, 1.0
  %v3261 = vadd.f32 %v3005, 1.0
  %v3262 = vadd.f32 %v3006, 1.0
  %v3263 = vadd.f32 %v3007, 1.0
  %v3264 = vadd.f32 %v3008, 1.0
  %v3265 = vadd.f32 %v3009, 1.0
  %v3266 = vadd.f32 %v3010, 1.0
  %v3267 = vadd.f32 %v3011, 1.0
  %v3268 = vadd.f32 %v3012, 1.0
  %v3269 = vadd.f32 %v3013, 1.0
  %v3270 = vadd.f32 %v3014, 1.0
  %v3271 = vadd.f32 %v3015, 1.0
  %v3272 = vadd.f32 %v3016, 1.0
  %v3273 = vadd.f32 %v3017, 1.0
  %v3274 = vadd.f32 %v3018, 1.0
  %v3275 = vadd.f32 %v3019, 1.0
  %v3276 = vadd.f32 %v3020, 1.0
  %v3277 = vadd.f32 %v3021, 1.0
  %v3278 = vadd.f32 %v3022, 1.0
  %v3279 = vadd.f32 %v3023, 1.0
  %v3280 = vadd.f32 %v3024, 1.0
  %v3281 = vadd.f32 %v3025, 1.0
  %v3282 = vadd.f32 %v3026, 1.0
  %v3283 = vadd.f32 %v3027, 1.0
  %v3284 = vadd.f32 %v3028, 1.0
  %v3285 = vadd.f32 %v3029, 1.0
  %v3286 = vadd.f32 %v3030, 1.0
  %v3287 = vadd.f32 %v3031, 1.0
  %v3288 = vadd.f32 %v3032, 1.0
  %v3289 = vadd.f32 %v3033, 1.0
  %v3290 = vadd.f32 %v3034, 1.0
  %v3291 = vadd.f32 %v3035, 1.0
  %v3292 = vadd.f32 %v3036, 1.0
  %v3293 = vadd.f32 %v3037, 1.0
  %v3294 = vadd.f32 %v3038, 1.0
  %v3295 = vadd.f32 %v3039, 1.0
  %v3296 = vadd.f32 %v3040, 1.0
  %v3297 = vadd.f32 %v3041, 1.0
  %v3298 = vadd.f32 %v3042, 1.0
  %v3299 = vadd.f32 %v3043, 1.0
  %v3300 = vadd.f32 %v3044, 1.0
  %v3301 = vadd.f32 %v3045, 1.0
  %v3302 = vadd.f32 %v3046, 1.0
  %v3303 = vadd.f32 %v3047, 1.0
  %v3304 = vadd.f32 %v3048, 1.0
  %v3305 = vadd.f32 %v3049, 1.0
  %v3306 = vadd.f32 %v3050, 1.0
  %v3307 = vadd.f32 %v3051, 1.0
  %v3308 = vadd.f32 %v3052, 1.0
  %v3309 = vadd.f32 %v3053, 1.0
  %v3310 = vadd.f32 %v3054, 1.0
  %v3311 = vadd.f32 %v3055, 1.0
  %v3312 = vadd.f32 %v3056, 1.0
  %v3313 = vadd.f32 %v3057, 1.0
  %v3314 = vadd.f32 %v3058, 1.0
  %v3315 = vadd.f32 %v3059, 1.0
  %v3316 = vadd.f32 %v3060, 1.0
  %v3317 = vadd.f32 %v3061, 1.0
  %v3318 = vadd.f32 %v3062, 1.0
  %v3319 = vadd.f32 %v3063, 1.0
  %v3320 = vadd.f32 %v3064, 1.0
  %v3321 = vadd.f32 %v3065, 1.0
  %v3322 = vadd.f32 %v3066, 1.0
  %v3323 = vadd.f32 %v3067, 1.0
  %v3324 = vadd.f32 %v3068, 1.0
  %v3325 = vadd.f32 %v3069, 1.0
  %v3326 = vadd.f32 %v3070, 1.0
  %v3327 = vadd.f32 %v3071, 1.0
  %v3328 = vadd.f32 %v3072, 1.0
  %v3329 = vadd.f32 %v3073, 1.0
  %v3330 = vadd.f32 %v3074, 1.0
  %v3331 = vadd.f32 %v3075, 1.0
  %v3332 = vadd.f32 %v3076, 1.0
  %v3333 = vadd.f32 %v3077, 1.0
  %v3334 = vadd.f32 %v3078, 1.0
  %v3335 = vadd.f32 %v3079, 1.0
  %v3336 = vadd.f32 %v3080, 1.0
  %v3337 = vadd.f32 %v3081, 1.0
  %v3338 = vadd.f32 %v3082, 1.0
  %v3339 = vadd.f32 %v3083, 1.0
  %v3340 = vadd.f32 %v3084, 1.0
  %v3341 = vadd.f32 %v3085, 1.0
  %v3342 = vadd.f32 %v3086, 1.0
  %v3343 = vadd.f32 %v3087, 1.0
  %v3344 = vadd.f32 %v3088, 1.0
  %v3345 = vadd.f32 %v3089, 1.0
  %v3346 = vadd.f32 %v3090, 1.0
  %v3347 = vadd.f32 %v3091, 1.0
  %v3348 = vadd.f32 %v3092, 1.0
  %v3349 = vadd.f32 %v3093, 1.0
  %v3350 = vadd.f32 %v3094, 1.0
  %v3351 = vadd.f32 %v3095, 1.0
  %v3352 = vadd.f32 %v3096, 1.0
  %v3353 = vadd.f32 %v3097, 1.0
  %v3354 = vadd.f32 %v3098, 1.0
  %v3355 = vadd.f32 %v3099, 1.0
  %v3356 = vadd.f32 %v3100, 1.0
  %v3357 = vadd.f32 %v3101, 1.0
  %v3358 = vadd.f32 %v3102, 1.0
  %v3359 = vadd.f32 %v3103, 1.0
  %v3360 = vadd.f32 %v3104, 1.0
  %v3361 = vadd.f32 %v3105, 1.0
  %v3362 = vadd.f32 %v3106, 1.0
  %v3363 = vadd.f32 %v3107, 1.0
  %v3364 = vadd.f32 %v3108, 1.0
  %v3365 = vadd.f32 %v3109, 1.0
  %v3366 = vadd.f32 %v3110, 1.0
  %v3367 = vadd.f32 %v3111, 1.0
  %v3368 = vadd.f32 %v3112, 1.0
  %v3369 = vadd.f32 %v3113, 1.0
  %v3370 = vadd.f32 %v3114, 1.0
  %v3371 = vadd.f32 %v3115, 1.0
  %v3372 = vadd.f32 %v3116, 1.0
  %v3373 = vadd.f32 %v3117, 1.0
  %v3374 = vadd.f32 %v3118, 1.0
  %v3375 = vadd.f32 %v3119, 1.0
  %v3376 = vadd.f32 %v3120, 1.0
  %v3377 = vadd.f32 %v3121, 1.0
  %v3378 = vadd.f32 %v3122, 1.0
  %v3379 = vadd.f32 %v3123, 1.0
  %v3380 = vadd.f32 %v3124, 1.0
  %v3381 = vadd.f32 %v3125, 1.0
  %v3382 = vadd.f32 %v3126, 1.0
  %v3383 = vadd.f32 %v3127, 1.0
  %v3384 = vadd.f32 %v3128, 1.0
  %v3385 = vadd.f32 %v3129, 1.0
  %v3386 = vadd.f32 %v3130, 1.0
  %v3387 = vadd.f32 %v3131, 1.0
  %v3388 = vadd.f32 %v3132, 1.0
  %v3389 = vadd.f32 %v3133, 1.0
  %v3390 = vadd.f32 %v3134, 1.0
  %v3391 = vadd.f32 %v3135, 1.0
  %v3392 = vadd.f32 %v3136, 1.0
  %v3393 = vadd.f32 %v3137, 1.0
  %v3394 = vadd.f32 %v3138, 1.0
  %v3395 = vadd.f32 %v3139, 1.0
  %v3396 = vadd.f32 %v3140, 1.0
  %v3397 = vadd.f32 %v3141, 1.0
  %v3398 = vadd.f32 %v3142, 1.0
  %v3399 = vadd.f32 %v3143, 1.0
  %v3400 = vadd.f32 %v3144, 1.0
  %v3401 = vadd.f32 %v3145, 1.0
  %v3402 = vadd.f32 %v3146, 1.0
  %v3403 = vadd.f32 %v3147, 1.0
  %v3404 = vadd.f32 %v3148, 1.0
  %v3405 = vadd.f32 %v3149, 1.0
  %v3406 = vadd.f32 %v3150, 1.0
  %v3407 = vadd.f32 %v3151, 1.0
  %v3408 = vadd.f32 %v3152, 1.0
  %v3409 = vadd.f32 %v3153, 1.0
  %v3410 = vadd.f32 %v3154, 1.0
  %v3411 = vadd.f32 %v3155, 1.0
  %v3412 = vadd.f32 %v3156, 1.0
  %v3413 = vadd.f32 %v3157, 1.0
  %v3414 = vadd.f32 %v3158, 1.0
  %v3415 = vadd.f32 %v3159, 1.0
  %v3416 = vadd.f32 %v3160, 1.0
  %v3417 = vadd.f32 %v3161, 1.0
  %v3418 = vadd.f32 %v3162, 1.0
  %v3419 = vadd.f32 %v3163, 1.0
  %v3420 = vadd.f32 %v3164, 1.0
  %v3421 = vadd.f32 %v3165, 1.0
  %v3422 = vadd.f32 %v3166, 1.0
  %v3423 = vadd.f32 %v3167, 1.0
  %v3424 = vadd.f32 %v3168, 1.0
  %v3425 = vadd.f32 %v3169, 1.0
  %v3426 = vadd.f32 %v3170, 1.0
  %v3427 = vadd.f32 %v3171, 1.0
  %v3428 = vadd.f32 %v3172, 1.0
  %v3429 = vadd.f32 %v3173, 1.0
  %v3430 = vadd.f32 %v3174, 1.0
  %v3431 = vadd.f32 %v3175, 1.0
  %v3432 = vadd.f32 %v3176, 1.0
  %v3433 = vadd.f32 %v3177, 1.0
  %v3434 = vadd.f32 %v3178, 1.0
  %v3435 = vadd.f32 %v3179, 1.0
  %v3436 = vadd.f32 %v3180, 1.0
  %v3437 = vadd.f32 %v3181, 1.0
  %v3438 = vadd.f32 %v3182, 1.0
  %v3439 = vadd.f32 %v3183, 1.0
  %v3440 = vadd.f32 %v3184, 1.0
  %v3441 = vadd.f32 %v3185, 1.0
  %v3442 = vadd.f32 %v3186, 1.0
  %v3443 = vadd.f32 %v3187, 1.0
  %v3444 = vadd.f32 %v3188, 1.0
  %v3445 = vadd.f32 %v3189, 1.0
  %v3446 = vadd.f32 %v3190, 1.0
  %v3447 = vadd.f32 %v3191, 1.0
  %v3448 = vadd.f32 %v3192, 1.0
  %v3449 = vadd.f32 %v3193, 1.0
  %v3450 = vadd.f32 %v3194, 1.0
  %v3451 = vadd.f32 %v3195, 1.0
  %v3452 = vadd.f32 %v3196, 1.0
  %v3453 = vadd.f32 %v3197, 1.0
  %v3454 = vadd.f32 %v3198, 1.0
  %v3455 = vadd.f32 %v3199, 1.0
  %v3456 = vadd.f32 %v3200, 1.0
  %v3457 = vmul.f32 %v3201, 0.5
  %v3458 = vmul.f32 %v3202, 0.5
  %v3459 = vmul.f32 %v3203, 0.5
  %v3460 = vmul.f32 %v3204, 0.5
  %v3461 = vmul.f32 %v3205, 0.5
  %v3462 = vmul.f32 %v3206, 0.5
  %v3463 = vmul.f32 %v3207, 0.5
  %v3464 = vmul.f32 %v3208, 0.5
  %v3465 = vmul.f32 %v3209, 0.5
  %v3466 = vmul.f32 %v3210, 0.5
  %v3467 = vmul.f32 %v3211, 0.5
  %v3468 = vmul.f32 %v3212, 0.5
  %v3469 = vmul.f32 %v3213, 0.5
  %v3470 = vmul.f32 %v3214, 0.5
  %v3471 = vmul.f32 %v3215, 0.5
  %v3472 = vmul.f32 %v3216, 0.5
  %v3473 = vmul.f32 %v3217, 0.5
  %v3474 = vmul.f32 %v3218, 0.5
  %v3475 = vmul.f32 %v3219, 0.5
  %v3476 = vmul.f32 %v3220, 0.5
  %v3477 = vmul.f32 %v3221, 0.5
  %v3478 = vmul.f32 %v3222, 0.5
  %v3479 = vmul.f32 %v3223, 0.5
  %v3480 = vmul.f32 %v3224, 0.5
  %v3481 = vmul.f32 %v3225, 0.5
  %v3482 = vmul.f32 %v3226, 0.5
  %v3483 = vmul.f32 %v3227, 0.5
  %v3484 = vmul.f32 %v3228, 0.5
  %v3485 = vmul.f32 %v3229, 0.5
  %v3486 = vmul.f32 %v3230, 0.5
  %v3487 = vmul.f32 %v3231, 0.5
  %v3488 = vmul.f32 %v3232, 0.5
  %v3489 = vmul.f32 %v3233, 0.5
  %v3490 = vmul.f32 %v3234, 0.5
  %v3491 = vmul.f32 %v3235, 0.5
  %v3492 = vmul.f32 %v3236, 0.5
  %v3493 = vmul.f32 %v3237, 0.5
  %v3494 = vmul.f32 %v3238, 0.5
  %v3495 = vmul.f32 %v3239, 0.5
  %v3496 = vmul.f32 %v3240, 0.5
  %v3497 = vmul.f32 %v3241, 0.5
  %v3498 = vmul.f32 %v3242, 0.5
  %v3499 = vmul.f32 %v3243, 0.5
  %v3500 = vmul.f32 %v3244, 0.5
  %v3501 = vmul.f32 %v3245, 0.5
  %v3502 = vmul.f32 %v3246, 0.5
  %v3503 = vmul.f32 %v3247, 0.5
  %v3504 = vmul.f32 %v3248, 0.5
  %v3505 = vmul.f32 %v3249, 0.5
  %v3506 = vmul.f32 %v3250, 0.5
  %v3507 = vmul.f32 %v3251, 0.5
  %v3508 = vmul.f32 %v3252, 0.5
  %v3509 = vmul.f32 %v3253, 0.5
  %v3510 = vmul.f32 %v3254, 0.5
  %v3511 = vmul.f32 %v3255, 0.5
  %v3512 = vmul.f32 %v3256, 0.5
  %v3513 = vmul.f32 %v3257, 0.5
  %v3514 = vmul.f32 %v3258, 0.5
  %v3515 = vmul.f32 %v3259, 0.5
  %v3516 = vmul.f32 %v3260, 0.5
  %v3517 = vmul.f32 %v3261, 0.5
  %v3518 = vmul.f32 %v3262, 0.5
  %v3519 = vmul.f32 %v3263, 0.5
  %v3520 = vmul.f32 %v3264, 0.5
  %v3521 = vmul.f32 %v3265, 0.5
  %v3522 = vmul.f32 %v3266, 0.5
  %v3523 = vmul.f32 %v3267, 0.5
  %v3524 = vmul.f32 %v3268, 0.5
  %v3525 = vmul.f32 %v3269, 0.5
  %v3526 = vmul.f32 %v3270, 0.5
  %v3527 = vmul.f32 %v3271, 0.5
  %v3528 = vmul.f32 %v3272, 0.5
  %v3529 = vmul.f32 %v3273, 0.5
  %v3530 = vmul.f32 %v3274, 0.5
  %v3531 = vmul.f32 %v3275, 0.5
  %v3532 = vmul.f32 %v3276, 0.5
  %v3533 = vmul.f32 %v3277, 0.5
  %v3534 = vmul.f32 %v3278, 0.5
  %v3535 = vmul.f32 %v3279, 0.5
  %v3536 = vmul.f32 %v3280, 0.5
  %v3537 = vmul.f32 %v3281, 0.5
  %v3538 = vmul.f32 %v3282, 0.5
  %v3539 = vmul.f32 %v3283, 0.5
  %v3540 = vmul.f32 %v3284, 0.5
  %v3541 = vmul.f32 %v3285, 0.5
  %v3542 = vmul.f32 %v3286, 0.5
  %v3543 = vmul.f32 %v3287, 0.5
  %v3544 = vmul.f32 %v3288, 0.5
  %v3545 = vmul.f32 %v3289, 0.5
  %v3546 = vmul.f32 %v3290, 0.5
  %v3547 = vmul.f32 %v3291, 0.5
  %v3548 = vmul.f32 %v3292, 0.5
  %v3549 = vmul.f32 %v3293, 0.5
  %v3550 = vmul.f32 %v3294, 0.5
  %v3551 = vmul.f32 %v3295, 0.5
  %v3552 = vmul.f32 %v3296, 0.5
  %v3553 = vmul.f32 %v3297, 0.5
  %v3554 = vmul.f32 %v3298, 0.5
  %v3555 = vmul.f32 %v3299, 0.5
  %v3556 = vmul.f32 %v3300, 0.5
  %v3557 = vmul.f32 %v3301, 0.5
  %v3558 = vmul.f32 %v3302, 0.5
  %v3559 = vmul.f32 %v3303, 0.5
  %v3560 = vmul.f32 %v3304, 0.5
  %v3561 = vmul.f32 %v3305, 0.5
  %v3562 = vmul.f32 %v3306, 0.5
  %v3563 = vmul.f32 %v3307, 0.5
  %v3564 = vmul.f32 %v3308, 0.5
  %v3565 = vmul.f32 %v3309, 0.5
  %v3566 = vmul.f32 %v3310, 0.5
  %v3567 = vmul.f32 %v3311, 0.5
  %v3568 = vmul.f32 %v3312, 0.5
  %v3569 = vmul.f32 %v3313, 0.5
  %v3570 = vmul.f32 %v3314, 0.5
  %v3571 = vmul.f32 %v3315, 0.5
  %v3572 = vmul.f32 %v3316, 0.5
  %v3573 = vmul.f32 %v3317, 0.5
  %v3574 = vmul.f32 %v3318, 0.5
  %v3575 = vmul.f32 %v3319, 0.5
  %v3576 = vmul.f32 %v3320, 0.5
  %v3577 = vmul.f32 %v3321, 0.5
  %v3578 = vmul.f32 %v3322, 0.5
  %v3579 = vmul.f32 %v3323, 0.5
  %v3580 = vmul.f32 %v3324, 0.5
  %v3581 = vmul.f32 %v3325, 0.5
  %v3582 = vmul.f32 %v3326, 0.5
  %v3583 = vmul.f32 %v3327, 0.5
  %v3584 = vmul.f32 %v3328, 0.5
  %v3585 = vmul.f32 %v3329, 0.5
  %v3586 = vmul.f32 %v3330, 0.5
  %v3587 = vmul.f32 %v3331, 0.5
  %v3588 = vmul.f32 %v3332, 0.5
  %v3589 = vmul.f32 %v3333, 0.5
  %v3590 = vmul.f32 %v3334, 0.5
  %v3591 = vmul.f32 %v3335, 0.5
  %v3592 = vmul.f32 %v3336, 0.5
  %v3593 = vmul.f32 %v3337, 0.5
  %v3594 = vmul.f32 %v3338, 0.5
  %v3595 = vmul.f32 %v3339, 0.5
  %v3596 = vmul.f32 %v3340, 0.5
  %v3597 = vmul.f32 %v3341, 0.5
  %v3598 = vmul.f32 %v3342, 0.5
  %v3599 = vmul.f32 %v3343, 0.5
  %v3600 = vmul.f32 %v3344, 0.5
  %v3601 = vmul.f32 %v3345, 0.5
  %v3602 = vmul.f32 %v3346, 0.5
  %v3603 = vmul.f32 %v3347, 0.5
  %v3604 = vmul.f32 %v3348, 0.5
  %v3605 = vmul.f32 %v3349, 0.5
  %v3606 = vmul.f32 %v3350, 0.5
  %v3607 = vmul.f32 %v3351, 0.5
  %v3608 = vmul.f32 %v3352, 0.5
  %v3609 = vmul.f32 %v3353, 0.5
  %v3610 = vmul.f32 %v3354, 0.5
  %v3611 = vmul.f32 %v3355, 0.5
  %v3612 = vmul.f32 %v3356, 0.5
  %v3613 = vmul.f32 %v3357, 0.5
  %v3614 = vmul.f32 %v3358, 0.5
  %v3615 = vmul.f32 %v3359, 0.5
  %v3616 = vmul.f32 %v3360, 0.5
  %v3617 = vmul.f32 %v3361, 0.5
  %v3618 = vmul.f32 %v3362, 0.5
  %v3619 = vmul.f32 %v3363, 0.5
  %v3620 = vmul.f32 %v3364, 0.5
  %v3621 = vmul.f32 %v3365, 0.5
  %v3622 = vmul.f32 %v3366, 0.5
  %v3623 = vmul.f32 %v3367, 0.5
  %v3624 = vmul.f32 %v3368, 0.5
  %v3625 = vmul.f32 %v3369, 0.5
  %v3626 = vmul.f32 %v3370, 0.5
  %v3627 = vmul.f32 %v3371, 0.5
  %v3628 = vmul.f32 %v3372, 0.5
  %v3629 = vmul.f32 %v3373, 0.5
  %v3630 = vmul.f32 %v3374, 0.5
  %v3631 = vmul.f32 %v3375, 0.5
  %v3632 = vmul.f32 %v3376, 0.5
  %v3633 = vmul.f32 %v3377, 0.5
  %v3634 = vmul.f32 %v3378, 0.5
  %v3635 = vmul.f32 %v3379, 0.5
  %v3636 = vmul.f32 %v3380, 0.5
  %v3637 = vmul.f32 %v3381, 0.5
  %v3638 = vmul.f32 %v3382, 0.5
  %v3639 = vmul.f32 %v3383, 0.5
  %v3640 = vmul.f32 %v3384, 0.5
  %v3641 = vmul.f32 %v3385, 0.5
  %v3642 = vmul.f32 %v3386, 0.5
  %v3643 = vmul.f32 %v3387, 0.5
  %v3644 = vmul.f32 %v3388, 0.5
  %v3645 = vmul.f32 %v3389, 0.5
  %v3646 = vmul.f32 %v3390, 0.5
  %v3647 = vmul.f32 %v3391, 0.5
  %v3648 = vmul.f32 %v3392, 0.5
  %v3649 = vmul.f32 %v3393, 0.5
  %v3650 = vmul.f32 %v3394, 0.5
  %v3651 = vmul.f32 %v3395, 0.5
  %v3652 = vmul.f32 %v3396, 0.5
  %v3653 = vmul.f32 %v3397, 0.5
  %v3654 = vmul.f32 %v3398, 0.5
  %v3655 = vmul.f32 %v3399, 0.5
  %v3656 = vmul.f32 %v3400, 0.5
  %v3657 = vmul.f32 %v3401, 0.5
  %v3658 = vmul.f32 %v3402, 0.5
  %v3659 = vmul.f32 %v3403, 0.5
  %v3660 = vmul.f32 %v3404, 0.5
  %v3661 = vmul.f32 %v3405, 0.5
  %v3662 = vmul.f32 %v3406, 0.5
  %v3663 = vmul.f32 %v3407, 0.5
  %v3664 = vmul.f32 %v3408, 0.5
  %v3665 = vmul.f32 %v3409, 0.5
  %v3666 = vmul.f32 %v3410, 0.5
  %v3667 = vmul.f32 %v3411, 0.5
  %v3668 = vmul.f32 %v3412, 0.5
  %v3669 = vmul.f32 %v3413, 0.5
  %v3670 = vmul.f32 %v3414, 0.5
  %v3671 = vmul.f32 %v3415, 0.5
  %v3672 = vmul.f32 %v3416, 0.5
  %v3673 = vmul.f32 %v3417, 0.5
  %v3674 = vmul.f32 %v3418, 0.5
  %v3675 = vmul.f32 %v3419, 0.5
  %v3676 = vmul.f32 %v3420, 0.5
  %v3677 = vmul.f32 %v3421, 0.5
  %v3678 = vmul.f32 %v3422, 0.5
  %v3679 = vmul.f32 %v3423, 0.5
  %v3680 = vmul.f32 %v3424, 0.5
  %v3681 = vmul.f32 %v3425, 0.5
  %v3682 = vmul.f32 %v3426, 0.5
  %v3683 = vmul.f32 %v3427, 0.5
  %v3684 = vmul.f32 %v3428, 0.5
  %v3685 = vmul.f32 %v3429, 0.5
  %v3686 = vmul.f32 %v3430, 0.5
  %v3687 = vmul.f32 %v3431, 0.5
  %v3688 = vmul.f32 %v3432, 0.5
  %v3689 = vmul.f32 %v3433, 0.5
  %v3690 = vmul.f32 %v3434, 0.5
  %v3691 = vmul.f32 %v3435, 0.5
  %v3692 = vmul.f32 %v3436, 0.5
  %v3693 = vmul.f32 %v3437, 0.5
  %v3694 = vmul.f32 %v3438, 0.5
  %v3695 = vmul.f32 %v3439, 0.5
  %v3696 = vmul.f32 %v3440, 0.5
  %v3697 = vmul.f32 %v3441, 0.5
  %v3698 = vmul.f32 %v3442, 0.5
  %v3699 = vmul.f32 %v3443, 0.5
  %v3700 = vmul.f32 %v3444, 0.5
  %v3701 = vmul.f32 %v3445, 0.5
  %v3702 = vmul.f32 %v3446, 0.5
  %v3703 = vmul.f32 %v3447, 0.5
  %v3704 = vmul.f32 %v3448, 0.5
  %v3705 = vmul.f32 %v3449, 0.5
  %v3706 = vmul.f32 %v3450, 0.5
  %v3707 = vmul.f32 %v3451, 0.5
  %v3708 = vmul.f32 %v3452, 0.5
  %v3709 = vmul.f32 %v3453, 0.5
  %v3710 = vmul.f32 %v3454, 0.5
  %v3711 = vmul.f32 %v3455, 0.5
  %v3712 = vmul.f32 %v3456, 0.5
  %v3713 = vmul.f32 %v2433, %v3457
  %v3714 = vmul.f32 %v2434, %v3458
  %v3715 = vmul.f32 %v2435, %v3459
  %v3716 = vmul.f32 %v2436, %v3460
  %v3717 = vmul.f32 %v2437, %v3461
  %v3718 = vmul.f32 %v2438, %v3462
  %v3719 = vmul.f32 %v2439, %v3463
  %v3720 = vmul.f32 %v2440, %v3464
  %v3721 = vmul.f32 %v2441, %v3465
  %v3722 = vmul.f32 %v2442, %v3466
  %v3723 = vmul.f32 %v2443, %v3467
  %v3724 = vmul.f32 %v2444, %v3468
  %v3725 = vmul.f32 %v2445, %v3469
  %v3726 = vmul.f32 %v2446, %v3470
  %v3727 = vmul.f32 %v2447, %v3471
  %v3728 = vmul.f32 %v2448, %v3472
  %v3729 = vmul.f32 %v2449, %v3473
  %v3730 = vmul.f32 %v2450, %v3474
  %v3731 = vmul.f32 %v2451, %v3475
  %v3732 = vmul.f32 %v2452, %v3476
  %v3733 = vmul.f32 %v2453, %v3477
  %v3734 = vmul.f32 %v2454, %v3478
  %v3735 = vmul.f32 %v2455, %v3479
  %v3736 = vmul.f32 %v2456, %v3480
  %v3737 = vmul.f32 %v2457, %v3481
  %v3738 = vmul.f32 %v2458, %v3482
  %v3739 = vmul.f32 %v2459, %v3483
  %v3740 = vmul.f32 %v2460, %v3484
  %v3741 = vmul.f32 %v2461, %v3485
  %v3742 = vmul.f32 %v2462, %v3486
  %v3743 = vmul.f32 %v2463, %v3487
  %v3744 = vmul.f32 %v2464, %v3488
  %v3745 = vmul.f32 %v2465, %v3489
  %v3746 = vmul.f32 %v2466, %v3490
  %v3747 = vmul.f32 %v2467, %v3491
  %v3748 = vmul.f32 %v2468, %v3492
  %v3749 = vmul.f32 %v2469, %v3493
  %v3750 = vmul.f32 %v2470, %v3494
  %v3751 = vmul.f32 %v2471, %v3495
  %v3752 = vmul.f32 %v2472, %v3496
  %v3753 = vmul.f32 %v2473, %v3497
  %v3754 = vmul.f32 %v2474, %v3498
  %v3755 = vmul.f32 %v2475, %v3499
  %v3756 = vmul.f32 %v2476, %v3500
  %v3757 = vmul.f32 %v2477, %v3501
  %v3758 = vmul.f32 %v2478, %v3502
  %v3759 = vmul.f32 %v2479, %v3503
  %v3760 = vmul.f32 %v2480, %v3504
  %v3761 = vmul.f32 %v2481, %v3505
  %v3762 = vmul.f32 %v2482, %v3506
  %v3763 = vmul.f32 %v2483, %v3507
  %v3764 = vmul.f32 %v2484, %v3508
  %v3765 = vmul.f32 %v2485, %v3509
  %v3766 = vmul.f32 %v2486, %v3510
  %v3767 = vmul.f32 %v2487, %v3511
  %v3768 = vmul.f32 %v2488, %v3512
  %v3769 = vmul.f32 %v2489, %v3513
  %v3770 = vmul.f32 %v2490, %v3514
  %v3771 = vmul.f32 %v2491, %v3515
  %v3772 = vmul.f32 %v2492, %v3516
  %v3773 = vmul.f32 %v2493, %v3517
  %v3774 = vmul.f32 %v2494, %v3518
  %v3775 = vmul.f32 %v2495, %v3519
  %v3776 = vmul.f32 %v2496, %v3520
  %v3777 = vmul.f32 %v2497, %v3521
  %v3778 = vmul.f32 %v2498, %v3522
  %v3779 = vmul.f32 %v2499, %v3523
  %v3780 = vmul.f32 %v2500, %v3524
  %v3781 = vmul.f32 %v2501, %v3525
  %v3782 = vmul.f32 %v2502, %v3526
  %v3783 = vmul.f32 %v2503, %v3527
  %v3784 = vmul.f32 %v2504, %v3528
  %v3785 = vmul.f32 %v2505, %v3529
  %v3786 = vmul.f32 %v2506, %v3530
  %v3787 = vmul.f32 %v2507, %v3531
  %v3788 = vmul.f32 %v2508, %v3532
  %v3789 = vmul.f32 %v2509, %v3533
  %v3790 = vmul.f32 %v2510, %v3534
  %v3791 = vmul.f32 %v2511, %v3535
  %v3792 = vmul.f32 %v2512, %v3536
  %v3793 = vmul.f32 %v2513, %v3537
  %v3794 = vmul.f32 %v2514, %v3538
  %v3795 = vmul.f32 %v2515, %v3539
  %v3796 = vmul.f32 %v2516, %v3540
  %v3797 = vmul.f32 %v2517, %v3541
  %v3798 = vmul.f32 %v2518, %v3542
  %v3799 = vmul.f32 %v2519, %v3543
  %v3800 = vmul.f32 %v2520, %v3544
  %v3801 = vmul.f32 %v2521, %v3545
  %v3802 = vmul.f32 %v2522, %v3546
  %v3803 = vmul.f32 %v2523, %v3547
  %v3804 = vmul.f32 %v2524, %v3548
  %v3805 = vmul.f32 %v2525, %v3549
  %v3806 = vmul.f32 %v2526, %v3550
  %v3807 = vmul.f32 %v2527, %v3551
  %v3808 = vmul.f32 %v2528, %v3552
  %v3809 = vmul.f32 %v2529, %v3553
  %v3810 = vmul.f32 %v2530, %v3554
  %v3811 = vmul.f32 %v2531, %v3555
  %v3812 = vmul.f32 %v2532, %v3556
  %v3813 = vmul.f32 %v2533, %v3557
  %v3814 = vmul.f32 %v2534, %v3558
  %v3815 = vmul.f32 %v2535, %v3559
  %v3816 = vmul.f32 %v2536, %v3560
  %v3817 = vmul.f32 %v2537, %v3561
  %v3818 = vmul.f32 %v2538, %v3562
  %v3819 = vmul.f32 %v2539, %v3563
  %v3820 = vmul.f32 %v2540, %v3564
  %v3821 = vmul.f32 %v2541, %v3565
  %v3822 = vmul.f32 %v2542, %v3566
  %v3823 = vmul.f32 %v2543, %v3567
  %v3824 = vmul.f32 %v2544, %v3568
  %v3825 = vmul.f32 %v2545, %v3569
  %v3826 = vmul.f32 %v2546, %v3570
  %v3827 = vmul.f32 %v2547, %v3571
  %v3828 = vmul.f32 %v2548, %v3572
  %v3829 = vmul.f32 %v2549, %v3573
  %v3830 = vmul.f32 %v2550, %v3574
  %v3831 = vmul.f32 %v2551, %v3575
  %v3832 = vmul.f32 %v2552, %v3576
  %v3833 = vmul.f32 %v2553, %v3577
  %v3834 = vmul.f32 %v2554, %v3578
  %v3835 = vmul.f32 %v2555, %v3579
  %v3836 = vmul.f32 %v2556, %v3580
  %v3837 = vmul.f32 %v2557, %v3581
  %v3838 = vmul.f32 %v2558, %v3582
  %v3839 = vmul.f32 %v2559, %v3583
  %v3840 = vmul.f32 %v2560, %v3584
  %v3841 = vmul.f32 %v2561, %v3585
  %v3842 = vmul.f32 %v2562, %v3586
  %v3843 = vmul.f32 %v2563, %v3587
  %v3844 = vmul.f32 %v2564, %v3588
  %v3845 = vmul.f32 %v2565, %v3589
  %v3846 = vmul.f32 %v2566, %v3590
  %v3847 = vmul.f32 %v2567, %v3591
  %v3848 = vmul.f32 %v2568, %v3592
  %v3849 = vmul.f32 %v2569, %v3593
  %v3850 = vmul.f32 %v2570, %v3594
  %v3851 = vmul.f32 %v2571, %v3595
  %v3852 = vmul.f32 %v2572, %v3596
  %v3853 = vmul.f32 %v2573, %v3597
  %v3854 = vmul.f32 %v2574, %v3598
  %v3855 = vmul.f32 %v2575, %v3599
  %v3856 = vmul.f32 %v2576, %v3600
  %v3857 = vmul.f32 %v2577, %v3601
  %v3858 = vmul.f32 %v2578, %v3602
  %v3859 = vmul.f32 %v2579, %v3603
  %v3860 = vmul.f32 %v2580, %v3604
  %v3861 = vmul.f32 %v2581, %v3605
  %v3862 = vmul.f32 %v2582, %v3606
  %v3863 = vmul.f32 %v2583, %v3607
  %v3864 = vmul.f32 %v2584, %v3608
  %v3865 = vmul.f32 %v2585, %v3609
  %v3866 = vmul.f32 %v2586, %v3610
  %v3867 = vmul.f32 %v2587, %v3611
  %v3868 = vmul.f32 %v2588, %v3612
  %v3869 = vmul.f32 %v2589, %v3613
  %v3870 = vmul.f32 %v2590, %v3614
  %v3871 = vmul.f32 %v2591, %v3615
  %v3872 = vmul.f32 %v2592, %v3616
  %v3873 = vmul.f32 %v2593, %v3617
  %v3874 = vmul.f32 %v2594, %v3618
  %v3875 = vmul.f32 %v2595, %v3619
  %v3876 = vmul.f32 %v2596, %v3620
  %v3877 = vmul.f32 %v2597, %v3621
  %v3878 = vmul.f32 %v2598, %v3622
  %v3879 = vmul.f32 %v2599, %v3623
  %v3880 = vmul.f32 %v2600, %v3624
  %v3881 = vmul.f32 %v2601, %v3625
  %v3882 = vmul.f32 %v2602, %v3626
  %v3883 = vmul.f32 %v2603, %v3627
  %v3884 = vmul.f32 %v2604, %v3628
  %v3885 = vmul.f32 %v2605, %v3629
  %v3886 = vmul.f32 %v2606, %v3630
  %v3887 = vmul.f32 %v2607, %v3631
  %v3888 = vmul.f32 %v2608, %v3632
  %v3889 = vmul.f32 %v2609, %v3633
  %v3890 = vmul.f32 %v2610, %v3634
  %v3891 = vmul.f32 %v2611, %v3635
  %v3892 = vmul.f32 %v2612, %v3636
  %v3893 = vmul.f32 %v2613, %v3637
  %v3894 = vmul.f32 %v2614, %v3638
  %v3895 = vmul.f32 %v2615, %v3639
  %v3896 = vmul.f32 %v2616, %v3640
  %v3897 = vmul.f32 %v2617, %v3641
  %v3898 = vmul.f32 %v2618, %v3642
  %v3899 = vmul.f32 %v2619, %v3643
  %v3900 = vmul.f32 %v2620, %v3644
  %v3901 = vmul.f32 %v2621, %v3645
  %v3902 = vmul.f32 %v2622, %v3646
  %v3903 = vmul.f32 %v2623, %v3647
  %v3904 = vmul.f32 %v2624, %v3648
  %v3905 = vmul.f32 %v2625, %v3649
  %v3906 = vmul.f32 %v2626, %v3650
  %v3907 = vmul.f32 %v2627, %v3651
  %v3908 = vmul.f32 %v2628, %v3652
  %v3909 = vmul.f32 %v2629, %v3653
  %v3910 = vmul.f32 %v2630, %v3654
  %v3911 = vmul.f32 %v2631, %v3655
  %v3912 = vmul.f32 %v2632, %v3656
  %v3913 = vmul.f32 %v2633, %v3657
  %v3914 = vmul.f32 %v2634, %v3658
  %v3915 = vmul.f32 %v2635, %v3659
  %v3916 = vmul.f32 %v2636, %v3660
  %v3917 = vmul.f32 %v2637, %v3661
  %v3918 = vmul.f32 %v2638, %v3662
  %v3919 = vmul.f32 %v2639, %v3663
  %v3920 = vmul.f32 %v2640, %v3664
  %v3921 = vmul.f32 %v2641, %v3665
  %v3922 = vmul.f32 %v2642, %v3666
  %v3923 = vmul.f32 %v2643, %v3667
  %v3924 = vmul.f32 %v2644, %v3668
  %v3925 = vmul.f32 %v2645, %v3669
  %v3926 = vmul.f32 %v2646, %v3670
  %v3927 = vmul.f32 %v2647, %v3671
  %v3928 = vmul.f32 %v2648, %v3672
  %v3929 = vmul.f32 %v2649, %v3673
  %v3930 = vmul.f32 %v2650, %v3674
  %v3931 = vmul.f32 %v2651, %v3675
  %v3932 = vmul.f32 %v2652, %v3676
  %v3933 = vmul.f32 %v2653, %v3677
  %v3934 = vmul.f32 %v2654, %v3678
  %v3935 = vmul.f32 %v2655, %v3679
  %v3936 = vmul.f32 %v2656, %v3680
  %v3937 = vmul.f32 %v2657, %v3681
  %v3938 = vmul.f32 %v2658, %v3682
  %v3939 = vmul.f32 %v2659, %v3683
  %v3940 = vmul.f32 %v2660, %v3684
  %v3941 = vmul.f32 %v2661, %v3685
  %v3942 = vmul.f32 %v2662, %v3686
  %v3943 = vmul.f32 %v2663, %v3687
  %v3944 = vmul.f32 %v2664, %v3688
  %v3945 = vmul.f32 %v2665, %v3689
  %v3946 = vmul.f32 %v2666, %v3690
  %v3947 = vmul.f32 %v2667, %v3691
  %v3948 = vmul.f32 %v2668, %v3692
  %v3949 = vmul.f32 %v2669, %v3693
  %v3950 = vmul.f32 %v2670, %v3694
  %v3951 = vmul.f32 %v2671, %v3695
  %v3952 = vmul.f32 %v2672, %v3696
  %v3953 = vmul.f32 %v2673, %v3697
  %v3954 = vmul.f32 %v2674, %v3698
  %v3955 = vmul.f32 %v2675, %v3699
  %v3956 = vmul.f32 %v2676, %v3700
  %v3957 = vmul.f32 %v2677, %v3701
  %v3958 = vmul.f32 %v2678, %v3702
  %v3959 = vmul.f32 %v2679, %v3703
  %v3960 = vmul.f32 %v2680, %v3704
  %v3961 = vmul.f32 %v2681, %v3705
  %v3962 = vmul.f32 %v2682, %v3706
  %v3963 = vmul.f32 %v2683, %v3707
  %v3964 = vmul.f32 %v2684, %v3708
  %v3965 = vmul.f32 %v2685, %v3709
  %v3966 = vmul.f32 %v2686, %v3710
  %v3967 = vmul.f32 %v2687, %v3711
  %v3968 = vmul.f32 %v2688, %v3712
  %v3969 = vmax.f32 %v3713, %v3777
  %v3970 = vmax.f32 %v3714, %v3778
  %v3971 = vmax.f32 %v3715, %v3779
  %v3972 = vmax.f32 %v3716, %v3780
  %v3973 = vmax.f32 %v3717, %v3781
  %v3974 = vmax.f32 %v3718, %v3782
  %v3975 = vmax.f32 %v3719, %v3783
  %v3976 = vmax.f32 %v3720, %v3784
  %v3977 = vmax.f32 %v3721, %v3785
  %v3978 = vmax.f32 %v3722, %v3786
  %v3979 = vmax.f32 %v3723, %v3787
  %v3980 = vmax.f32 %v3724, %v3788
  %v3981 = vmax.f32 %v3725, %v3789
  %v3982 = vmax.f32 %v3726, %v3790
  %v3983 = vmax.f32 %v3727, %v3791
  %v3984 = vmax.f32 %v3728, %v3792
  %v3985 = vmax.f32 %v3729, %v3793
  %v3986 = vmax.f32 %v3730, %v3794
  %v3987 = vmax.f32 %v3731, %v3795
  %v3988 = vmax.f32 %v3732, %v3796
  %v3989 = vmax.f32 %v3733, %v3797
  %v3990 = vmax.f32 %v3734, %v3798
  %v3991 = vmax.f32 %v3735, %v3799
  %v3992 = vmax.f32 %v3736, %v3800
  %v3993 = vmax.f32 %v3737, %v3801
  %v3994 = vmax.f32 %v3738, %v3802
  %v3995 = vmax.f32 %v3739, %v3803
  %v3996 = vmax.f32 %v3740, %v3804
  %v3997 = vmax.f32 %v3741, %v3805
  %v3998 = vmax.f32 %v3742, %v3806
  %v3999 = vmax.f32 %v3743, %v3807
  %v4000 = vmax.f32 %v3744, %v3808
  %v4001 = vmax.f32 %v3745, %v3809
  %v4002 = vmax.f32 %v3746, %v3810
  %v4003 = vmax.f32 %v3747, %v3811
  %v4004 = vmax.f32 %v3748, %v3812
  %v4005 = vmax.f32 %v3749, %v3813
  %v4006 = vmax.f32 %v3750, %v3814
  %v4007 = vmax.f32 %v3751, %v3815
  %v4008 = vmax.f32 %v3752, %v3816
  %v4009 = vmax.f32 %v3753, %v3817
  %v4010 = vmax.f32 %v3754, %v3818
  %v4011 = vmax.f32 %v3755, %v3819
  %v4012 = vmax.f32 %v3756, %v3820
  %v4013 = vmax.f32 %v3757, %v3821
  %v4014 = vmax.f32 %v3758, %v3822
  %v4015 = vmax.f32 %v3759, %v3823
  %v4016 = vmax.f32 %v3760, %v3824
  %v4017 = vmax.f32 %v3761, %v3825
  %v4018 = vmax.f32 %v3762, %v3826
  %v4019 = vmax.f32 %v3763, %v3827
  %v4020 = vmax.f32 %v3764, %v3828
  %v4021 = vmax.f32 %v3765, %v3829
  %v4022 = vmax.f32 %v3766, %v3830
  %v4023 = vmax.f32 %v3767, %v3831
  %v4024 = vmax.f32 %v3768, %v3832
  %v4025 = vmax.f32 %v3769, %v3833
  %v4026 = vmax.f32 %v3770, %v3834
  %v4027 = vmax.f32 %v3771, %v3835
  %v4028 = vmax.f32 %v3772, %v3836
  %v4029 = vmax.f32 %v3773, %v3837
  %v4030 = vmax.f32 %v3774, %v3838
  %v4031 = vmax.f32 %v3775, %v3839
  %v4032 = vmax.f32 %v3776, %v3840
  %v4033 = vmax.f32 %v3841, %v3905
  %v4034 = vmax.f32 %v3842, %v3906
  %v4035 = vmax.f32 %v3843, %v3907
  %v4036 = vmax.f32 %v3844, %v3908
  %v4037 = vmax.f32 %v3845, %v3909
  %v4038 = vmax.f32 %v3846, %v3910
  %v4039 = vmax.f32 %v3847, %v3911
  %v4040 = vmax.f32 %v3848, %v3912
  %v4041 = vmax.f32 %v3849, %v3913
  %v4042 = vmax.f32 %v3850, %v3914
  %v4043 = vmax.f32 %v3851, %v3915
  %v4044 = vmax.f32 %v3852, %v3916
  %v4045 = vmax.f32 %v3853, %v3917
  %v4046 = vmax.f32 %v3854, %v3918
  %v4047 = vmax.f32 %v3855, %v3919
  %v4048 = vmax.f32 %v3856, %v3920
  %v4049 = vmax.f32 %v3857, %v3921
  %v4050 = vmax.f32 %v3858, %v3922
  %v4051 = vmax.f32 %v3859, %v3923
  %v4052 = vmax.f32 %v3860, %v3924
  %v4053 = vmax.f32 %v3861, %v3925
  %v4054 = vmax.f32 %v3862, %v3926
  %v4055 = vmax.f32 %v3863, %v3927
  %v4056 = vmax.f32 %v3864, %v3928
  %v4057 = vmax.f32 %v3865, %v3929
  %v4058 = vmax.f32 %v3866, %v3930
  %v4059 = vmax.f32 %v3867, %v3931
  %v4060 = vmax.f32 %v3868, %v3932
  %v4061 = vmax.f32 %v3869, %v3933
  %v4062 = vmax.f32 %v3870, %v3934
  %v4063 = vmax.f32 %v3871, %v3935
  %v4064 = vmax.f32 %v3872, %v3936
  %v4065 = vmax.f32 %v3873, %v3937
  %v4066 = vmax.f32 %v3874, %v3938
  %v4067 = vmax.f32 %v3875, %v3939
  %v4068 = vmax.f32 %v3876, %v3940
  %v4069 = vmax.f32 %v3877, %v3941
  %v4070 = vmax.f32 %v3878, %v3942
  %v4071 = vmax.f32 %v3879, %v3943
  %v4072 = vmax.f32 %v3880, %v3944
  %v4073 = vmax.f32 %v3881, %v3945
  %v4074 = vmax.f32 %v3882, %v3946
  %v4075 = vmax.f32 %v3883, %v3947
  %v4076 = vmax.f32 %v3884, %v3948
  %v4077 = vmax.f32 %v3885, %v3949
  %v4078 = vmax.f32 %v3886, %v3950
  %v4079 = vmax.f32 %v3887, %v3951
  %v4080 = vmax.f32 %v3888, %v3952
  %v4081 = vmax.f32 %v3889, %v3953
  %v4082 = vmax.f32 %v3890, %v3954
  %v4083 = vmax.f32 %v3891, %v3955
  %v4084 = vmax.f32 %v3892, %v3956
  %v4085 = vmax.f32 %v3893, %v3957
  %v4086 = vmax.f32 %v3894, %v3958
  %v4087 = vmax.f32 %v3895, %v3959
  %v4088 = vmax.f32 %v3896, %v3960
  %v4089 = vmax.f32 %v3897, %v3961
  %v4090 = vmax.f32 %v3898, %v3962
  %v4091 = vmax.f32 %v3899, %v3963
  %v4092 = vmax.f32 %v3900, %v3964
  %v4093 = vmax.f32 %v3901, %v3965
  %v4094 = vmax.f32 %v3902, %v3966
  %v4095 = vmax.f32 %v3903, %v3967
  %v4096 = vmax.f32 %v3904, %v3968
  %v4097 = vmax.f32 %v3969, %v4033
  %v4098 = vmax.f32 %v3970, %v4034
  %v4099 = vmax.f32 %v3971, %v4035
  %v4100 = vmax.f32 %v3972, %v4036
  %v4101 = vmax.f32 %v3973, %v4037
  %v4102 = vmax.f32 %v3974, %v4038
  %v4103 = vmax.f32 %v3975, %v4039
  %v4104 = vmax.f32 %v3976, %v4040
  %v4105 = vmax.f32 %v3977, %v4041
  %v4106 = vmax.f32 %v3978, %v4042
  %v4107 = vmax.f32 %v3979, %v4043
  %v4108 = vmax.f32 %v3980, %v4044
  %v4109 = vmax.f32 %v3981, %v4045
  %v4110 = vmax.f32 %v3982, %v4046
  %v4111 = vmax.f32 %v3983, %v4047
  %v4112 = vmax.f32 %v3984, %v4048
  %v4113 = vmax.f32 %v3985, %v4049
  %v4114 = vmax.f32 %v3986, %v4050
  %v4115 = vmax.f32 %v3987, %v4051
  %v4116 = vmax.f32 %v3988, %v4052
  %v4117 = vmax.f32 %v3989, %v4053
  %v4118 = vmax.f32 %v3990, %v4054
  %v4119 = vmax.f32 %v3991, %v4055
  %v4120 = vmax.f32 %v3992, %v4056
  %v4121 = vmax.f32 %v3993, %v4057
  %v4122 = vmax.f32 %v3994, %v4058
  %v4123 = vmax.f32 %v3995, %v4059
  %v4124 = vmax.f32 %v3996, %v4060
  %v4125 = vmax.f32 %v3997, %v4061
  %v4126 = vmax.f32 %v3998, %v4062
  %v4127 = vmax.f32 %v3999, %v4063
  %v4128 = vmax.f32 %v4000, %v4064
  %v4129 = vmax.f32 %v4001, %v4065
  %v4130 = vmax.f32 %v4002, %v4066
  %v4131 = vmax.f32 %v4003, %v4067
  %v4132 = vmax.f32 %v4004, %v4068
  %v4133 = vmax.f32 %v4005, %v4069
  %v4134 = vmax.f32 %v4006, %v4070
  %v4135 = vmax.f32 %v4007, %v4071
  %v4136 = vmax.f32 %v4008, %v4072
  %v4137 = vmax.f32 %v4009, %v4073
  %v4138 = vmax.f32 %v4010, %v4074
  %v4139 = vmax.f32 %v4011, %v4075
  %v4140 = vmax.f32 %v4012, %v4076
  %v4141 = vmax.f32 %v4013, %v4077
  %v4142 = vmax.f32 %v4014, %v4078
  %v4143 = vmax.f32 %v4015, %v4079
  %v4144 = vmax.f32 %v4016, %v4080
  %v4145 = vmax.f32 %v4017, %v4081
  %v4146 = vmax.f32 %v4018, %v4082
  %v4147 = vmax.f32 %v4019, %v4083
  %v4148 = vmax.f32 %v4020, %v4084
  %v4149 = vmax.f32 %v4021, %v4085
  %v4150 = vmax.f32 %v4022, %v4086
  %v4151 = vmax.f32 %v4023, %v4087
  %v4152 = vmax.f32 %v4024, %v4088
  %v4153 = vmax.f32 %v4025, %v4089
  %v4154 = vmax.f32 %v4026, %v4090
  %v4155 = vmax.f32 %v4027, %v4091
  %v4156 = vmax.f32 %v4028, %v4092
  %v4157 = vmax.f32 %v4029, %v4093
  %v4158 = vmax.f32 %v4030, %v4094
  %v4159 = vmax.f32 %v4031, %v4095
  %v4160 = vmax.f32 %v4032, %v4096
  %v4161 = vpack.c.bf16 %v4098, %v4097
  %v4162 = vpack.c.bf16 %v4100, %v4099
  %v4163 = vpack.c.bf16 %v4102, %v4101
  %v4164 = vpack.c.bf16 %v4104, %v4103
  %v4165 = vpack.c.bf16 %v4106, %v4105
  %v4166 = vpack.c.bf16 %v4108, %v4107
  %v4167 = vpack.c.bf16 %v4110, %v4109
  %v4168 = vpack.c.bf16 %v4112, %v4111
  %v4169 = vpack.c.bf16 %v4114, %v4113
  %v4170 = vpack.c.bf16 %v4116, %v4115
  %v4171 = vpack.c.bf16 %v4118, %v4117
  %v4172 = vpack.c.bf16 %v4120, %v4119
  %v4173 = vpack.c.bf16 %v4122, %v4121
  %v4174 = vpack.c.bf16 %v4124, %v4123
  %v4175 = vpack.c.bf16 %v4126, %v4125
  %v4176 = vpack.c.bf16 %v4128, %v4127
  %v4177 = vpack.c.bf16 %v4130, %v4129
  %v4178 = vpack.c.bf16 %v4132, %v4131
  %v4179 = vpack.c.bf16 %v4134, %v4133
  %v4180 = vpack.c.bf16 %v4136, %v4135
  %v4181 = vpack.c.bf16 %v4138, %v4137
  %v4182 = vpack.c.bf16 %v4140, %v4139
  %v4183 = vpack.c.bf16 %v4142, %v4141
  %v4184 = vpack.c.bf16 %v4144, %v4143
  %v4185 = vpack.c.bf16 %v4146, %v4145
  %v4186 = vpack.c.bf16 %v4148, %v4147
  %v4187 = vpack.c.bf16 %v4150, %v4149
  %v4188 = vpack.c.bf16 %v4152, %v4151
  %v4189 = vpack.c.bf16 %v4154, %v4153
  %v4190 = vpack.c.bf16 %v4156, %v4155
  %v4191 = vpack.c.bf16 %v4158, %v4157
  %v4192 = vpack.c.bf16 %v4160, %v4159
  %v4225 = vunpack.c.l.b16 %v4161
  %v4226 = vunpack.c.h.b16 %v4161
  %v4227 = vunpack.c.l.b16 %v4162
  %v4228 = vunpack.c.h.b16 %v4162
  %v4229 = vunpack.c.l.b16 %v4163
  %v4230 = vunpack.c.h.b16 %v4163
  %v4231 = vunpack.c.l.b16 %v4164
  %v4232 = vunpack.c.h.b16 %v4164
  %v4233 = vunpack.c.l.b16 %v4165
  %v4234 = vunpack.c.h.b16 %v4165
  %v4235 = vunpack.c.l.b16 %v4166
  %v4236 = vunpack.c.h.b16 %v4166
  %v4237 = vunpack.c.l.b16 %v4167
  %v4238 = vunpack.c.h.b16 %v4167
  %v4239 = vunpack.c.l.b16 %v4168
  %v4240 = vunpack.c.h.b16 %v4168
  %v4241 = vunpack.c.l.b16 %v4169
  %v4242 = vunpack.c.h.b16 %v4169
  %v4243 = vunpack.c.l.b16 %v4170
  %v4244 = vunpack.c.h.b16 %v4170
  %v4245 = vunpack.c.l.b16 %v4171
  %v4246 = vunpack.c.h.b16 %v4171
  %v4247 = vunpack.c.l.b16 %v4172
  %v4248 = vunpack.c.h.b16 %v4172
  %v4249 = vunpack.c.l.b16 %v4173
  %v4250 = vunpack.c.h.b16 %v4173
  %v4251 = vunpack.c.l.b16 %v4174
  %v4252 = vunpack.c.h.b16 %v4174
  %v4253 = vunpack.c.l.b16 %v4175
  %v4254 = vunpack.c.h.b16 %v4175
  %v4255 = vunpack.c.l.b16 %v4176
  %v4256 = vunpack.c.h.b16 %v4176
  %v4257 = vunpack.c.l.b16 %v4177
  %v4258 = vunpack.c.h.b16 %v4177
  %v4259 = vunpack.c.l.b16 %v4178
  %v4260 = vunpack.c.h.b16 %v4178
  %v4261 = vunpack.c.l.b16 %v4179
  %v4262 = vunpack.c.h.b16 %v4179
  %v4263 = vunpack.c.l.b16 %v4180
  %v4264 = vunpack.c.h.b16 %v4180
  %v4265 = vunpack.c.l.b16 %v4181
  %v4266 = vunpack.c.h.b16 %v4181
  %v4267 = vunpack.c.l.b16 %v4182
  %v4268 = vunpack.c.h.b16 %v4182
  %v4269 = vunpack.c.l.b16 %v4183
  %v4270 = vunpack.c.h.b16 %v4183
  %v4271 = vunpack.c.l.b16 %v4184
  %v4272 = vunpack.c.h.b16 %v4184
  %v4273 = vunpack.c.l.b16 %v4185
  %v4274 = vunpack.c.h.b16 %v4185
  %v4275 = vunpack.c.l.b16 %v4186
  %v4276 = vunpack.c.h.b16 %v4186
  %v4277 = vunpack.c.l.b16 %v4187
  %v4278 = vunpack.c.h.b16 %v4187
  %v4279 = vunpack.c.l.b16 %v4188
  %v4280 = vunpack.c.h.b16 %v4188
  %v4281 = vunpack.c.l.b16 %v4189
  %v4282 = vunpack.c.h.b16 %v4189
  %v4283 = vunpack.c.l.b16 %v4190
  %v4284 = vunpack.c.h.b16 %v4190
  %v4285 = vunpack.c.l.b16 %v4191
  %v4286 = vunpack.c.h.b16 %v4191
  %v4287 = vunpack.c.l.b16 %v4192
  %v4288 = vunpack.c.h.b16 %v4192
  %v4289 = vpack.c.b16 %v4225, %v4225
  %v4290 = vpack.c.b16 %v4226, %v4226
  %v4291 = vpack.c.b16 %v4227, %v4227
  %v4292 = vpack.c.b16 %v4228, %v4228
  %v4293 = vpack.c.b16 %v4229, %v4229
  %v4294 = vpack.c.b16 %v4230, %v4230
  %v4295 = vpack.c.b16 %v4231, %v4231
  %v4296 = vpack.c.b16 %v4232, %v4232
  %v4297 = vpack.c.b16 %v4233, %v4233
  %v4298 = vpack.c.b16 %v4234, %v4234
  %v4299 = vpack.c.b16 %v4235, %v4235
  %v4300 = vpack.c.b16 %v4236, %v4236
  %v4301 = vpack.c.b16 %v4237, %v4237
  %v4302 = vpack.c.b16 %v4238, %v4238
  %v4303 = vpack.c.b16 %v4239, %v4239
  %v4304 = vpack.c.b16 %v4240, %v4240
  %v4305 = vpack.c.b16 %v4241, %v4241
  %v4306 = vpack.c.b16 %v4242, %v4242
  %v4307 = vpack.c.b16 %v4243, %v4243
  %v4308 = vpack.c.b16 %v4244, %v4244
  %v4309 = vpack.c.b16 %v4245, %v4245
  %v4310 = vpack.c.b16 %v4246, %v4246
  %v4311 = vpack.c.b16 %v4247, %v4247
  %v4312 = vpack.c.b16 %v4248, %v4248
  %v4313 = vpack.c.b16 %v4249, %v4249
  %v4314 = vpack.c.b16 %v4250, %v4250
  %v4315 = vpack.c.b16 %v4251, %v4251
  %v4316 = vpack.c.b16 %v4252, %v4252
  %v4317 = vpack.c.b16 %v4253, %v4253
  %v4318 = vpack.c.b16 %v4254, %v4254
  %v4319 = vpack.c.b16 %v4255, %v4255
  %v4320 = vpack.c.b16 %v4256, %v4256
  %v4321 = vpack.c.b16 %v4257, %v4257
  %v4322 = vpack.c.b16 %v4258, %v4258
  %v4323 = vpack.c.b16 %v4259, %v4259
  %v4324 = vpack.c.b16 %v4260, %v4260
  %v4325 = vpack.c.b16 %v4261, %v4261
  %v4326 = vpack.c.b16 %v4262, %v4262
  %v4327 = vpack.c.b16 %v4263, %v4263
  %v4328 = vpack.c.b16 %v4264, %v4264
  %v4329 = vpack.c.b16 %v4265, %v4265
  %v4330 = vpack.c.b16 %v4266, %v4266
  %v4331 = vpack.c.b16 %v4267, %v4267
  %v4332 = vpack.c.b16 %v4268, %v4268
  %v4333 = vpack.c.b16 %v4269, %v4269
  %v4334 = vpack.c.b16 %v4270, %v4270
  %v4335 = vpack.c.b16 %v4271, %v4271
  %v4336 = vpack.c.b16 %v4272, %v4272
  %v4337 = vpack.c.b16 %v4273, %v4273
  %v4338 = vpack.c.b16 %v4274, %v4274
  %v4339 = vpack.c.b16 %v4275, %v4275
  %v4340 = vpack.c.b16 %v4276, %v4276
  %v4341 = vpack.c.b16 %v4277, %v4277
  %v4342 = vpack.c.b16 %v4278, %v4278
  %v4343 = vpack.c.b16 %v4279, %v4279
  %v4344 = vpack.c.b16 %v4280, %v4280
  %v4345 = vpack.c.b16 %v4281, %v4281
  %v4346 = vpack.c.b16 %v4282, %v4282
  %v4347 = vpack.c.b16 %v4283, %v4283
  %v4348 = vpack.c.b16 %v4284, %v4284
  %v4349 = vpack.c.b16 %v4285, %v4285
  %v4350 = vpack.c.b16 %v4286, %v4286
  %v4351 = vpack.c.b16 %v4287, %v4287
  %v4352 = vpack.c.b16 %v4288, %v4288
  %4417 = vst [vmem:[%s4] sm:$0xf] %v4289
  %4418 = vst [vmem:[%s4 + $0x4] sm:$0xf] %v4290
  %4419 = vst [vmem:[%s4 + $0x8] sm:$0xf] %v4291
  %4420 = vst [vmem:[%s4 + $0xc] sm:$0xf] %v4292
  %4421 = vst [vmem:[%s4 + $0x10] sm:$0xf] %v4293
  %4422 = vst [vmem:[%s4 + $0x14] sm:$0xf] %v4294
  %4423 = vst [vmem:[%s4 + $0x18] sm:$0xf] %v4295
  %4424 = vst [vmem:[%s4 + $0x1c] sm:$0xf] %v4296
  %4425 = vst [vmem:[%s4 + $0x20] sm:$0xf] %v4297
  %4426 = vst [vmem:[%s4 + $0x24] sm:$0xf] %v4298
  %4427 = vst [vmem:[%s4 + $0x28] sm:$0xf] %v4299
  %4428 = vst [vmem:[%s4 + $0x2c] sm:$0xf] %v4300
  %4429 = vst [vmem:[%s4 + $0x30] sm:$0xf] %v4301
  %4430 = vst [vmem:[%s4 + $0x34] sm:$0xf] %v4302
  %4431 = vst [vmem:[%s4 + $0x38] sm:$0xf] %v4303
  %4432 = vst [vmem:[%s4 + $0x3c] sm:$0xf] %v4304
  %4433 = vst [vmem:[%s4 + $0x40] sm:$0xf] %v4305
  %4434 = vst [vmem:[%s4 + $0x44] sm:$0xf] %v4306
  %4435 = vst [vmem:[%s4 + $0x48] sm:$0xf] %v4307
  %4436 = vst [vmem:[%s4 + $0x4c] sm:$0xf] %v4308
  %4437 = vst [vmem:[%s4 + $0x50] sm:$0xf] %v4309
  %4438 = vst [vmem:[%s4 + $0x54] sm:$0xf] %v4310
  %4439 = vst [vmem:[%s4 + $0x58] sm:$0xf] %v4311
  %4440 = vst [vmem:[%s4 + $0x5c] sm:$0xf] %v4312
  %4441 = vst [vmem:[%s4 + $0x60] sm:$0xf] %v4313
  %4442 = vst [vmem:[%s4 + $0x64] sm:$0xf] %v4314
  %4443 = vst [vmem:[%s4 + $0x68] sm:$0xf] %v4315
  %4444 = vst [vmem:[%s4 + $0x6c] sm:$0xf] %v4316
  %4445 = vst [vmem:[%s4 + $0x70] sm:$0xf] %v4317
  %4446 = vst [vmem:[%s4 + $0x74] sm:$0xf] %v4318
  %4447 = vst [vmem:[%s4 + $0x78] sm:$0xf] %v4319
  %4448 = vst [vmem:[%s4 + $0x7c] sm:$0xf] %v4320
  %4449 = vst [vmem:[%s4 + $0x80] sm:$0xf] %v4321
  %4450 = vst [vmem:[%s4 + $0x84] sm:$0xf] %v4322
  %4451 = vst [vmem:[%s4 + $0x88] sm:$0xf] %v4323
  %4452 = vst [vmem:[%s4 + $0x8c] sm:$0xf] %v4324
  %4453 = vst [vmem:[%s4 + $0x90] sm:$0xf] %v4325
  %4454 = vst [vmem:[%s4 + $0x94] sm:$0xf] %v4326
  %4455 = vst [vmem:[%s4 + $0x98] sm:$0xf] %v4327
  %4456 = vst [vmem:[%s4 + $0x9c] sm:$0xf] %v4328
  %4457 = vst [vmem:[%s4 + $0xa0] sm:$0xf] %v4329
  %4458 = vst [vmem:[%s4 + $0xa4] sm:$0xf] %v4330
  %4459 = vst [vmem:[%s4 + $0xa8] sm:$0xf] %v4331
  %4460 = vst [vmem:[%s4 + $0xac] sm:$0xf] %v4332
  %4461 = vst [vmem:[%s4 + $0xb0] sm:$0xf] %v4333
  %4462 = vst [vmem:[%s4 + $0xb4] sm:$0xf] %v4334
  %4463 = vst [vmem:[%s4 + $0xb8] sm:$0xf] %v4335
  %4464 = vst [vmem:[%s4 + $0xbc] sm:$0xf] %v4336
  %4465 = vst [vmem:[%s4 + $0xc0] sm:$0xf] %v4337
  %4466 = vst [vmem:[%s4 + $0xc4] sm:$0xf] %v4338
  %4467 = vst [vmem:[%s4 + $0xc8] sm:$0xf] %v4339
  %4468 = vst [vmem:[%s4 + $0xcc] sm:$0xf] %v4340
  %4469 = vst [vmem:[%s4 + $0xd0] sm:$0xf] %v4341
  %4470 = vst [vmem:[%s4 + $0xd4] sm:$0xf] %v4342
  %4471 = vst [vmem:[%s4 + $0xd8] sm:$0xf] %v4343
  %4472 = vst [vmem:[%s4 + $0xdc] sm:$0xf] %v4344
  %4473 = vst [vmem:[%s4 + $0xe0] sm:$0xf] %v4345
  %4474 = vst [vmem:[%s4 + $0xe4] sm:$0xf] %v4346
  %4475 = vst [vmem:[%s4 + $0xe8] sm:$0xf] %v4347
  %4476 = vst [vmem:[%s4 + $0xec] sm:$0xf] %v4348
  %4477 = vst [vmem:[%s4 + $0xf0] sm:$0xf] %v4349
  %4478 = vst [vmem:[%s4 + $0xf4] sm:$0xf] %v4350
  %4479 = vst [vmem:[%s4 + $0xf8] sm:$0xf] %v4351
  %4480 = vst [vmem:[%s4 + $0xfc] sm:$0xf] %v4352
  // Predicated region
  $region18: #{forward.2} parent=0 // pred_check
    _
  $region19: #{forward.2} parent=0 // pred_check_branch
    %4482 = sbr.rel (0) target = $region21
  $region20: #{forward.2} parent=0 // pred_region
    _
  $region21: #{forward.2} parent=0 // pred_fallthru
    _
  // Predicated region
  $region22: #{forward.2} parent=0 // pred_check
    _
  $region23: #{forward.2} parent=0 // pred_check_branch
    %4484 = sbr.rel (0) target = $region25
  $region24: #{forward.2} parent=0 // pred_region
    _
  $region25: #{forward.2} parent=0 // pred_fallthru
    _

// kernel: forward.3
$region0: #{forward.3}
  #allocation0 [shape = 'u32[]', space=smem, size = 0x4, offset = 0x4, fixed_abs, tag = 'smem constant byte address 0x4 - core index']
  #allocation1 [shape = 'u32[144,128]{1,0:T(1,128)}', space=vmem, size = 0x12000, scoped, tag = 'internal scratch']
  %s0 = inlined_call_operand.vmem [shape: bf16[128,256], index: 0, kind: input, shape index: {}]
  %s1 = inlined_call_operand.vmem [shape: bf16[256,128], index: 1, kind: input, shape index: {}]
  %s2 = inlined_call_operand.vmem [shape: f32[1,128], index: 2, kind: input, shape index: {}]
  %s3 = inlined_call_operand.vmem [shape: f32[1,128], index: 3, kind: input, shape index: {}]
  %s4 = inlined_call_operand.vmem [shape: bf16[128,1152], index: 4, kind: input, shape index: {}]
  %s5 = inlined_call_operand.vmem [shape: bf16[9,32,32], index: 5, kind: input, shape index: {}]
  %s6 = inlined_call_operand.vmem [shape: f32[1,128], index: 6, kind: input, shape index: {}]
  %s7 = inlined_call_operand.vmem [shape: f32[1,128], index: 7, kind: input, shape index: {}]
  %s8 = inlined_call_operand.vmem [shape: bf16[128,128], index: 8, kind: input, shape index: {}]
  %s9 = inlined_call_operand.vmem [shape: f32[1,128], index: 9, kind: input, shape index: {}]
  %s10 = inlined_call_operand.vmem [shape: f32[128,128], index: 10, kind: input, shape index: {}]
  %s11 = inlined_call_operand.vmem [shape: f32[1,128], index: 11, kind: input, shape index: {}]
  %s12 = inlined_call_operand.vmem [shape: f32[8,128], index: 12, kind: output, shape index: {}]
  %s13 = sld [smem:[#allocation0]]
  $region58: #{forward.3} parent=0
    _
  %s15 = ssub.s32 1, %s13
  %s16 = scalar_select 0, %s15, %s13
  // Predicated region
  $region2: #{forward.3} parent=0 // pred_check
    _
  $region3: #{forward.3} parent=0 // pred_check_branch
    %18 = sbr.rel (0) target = $region5
  $region4: #{forward.3} parent=0 // pred_region
    _
  $region5: #{forward.3} parent=0 // pred_fallthru
    _
  // Predicated region
  $region6: #{forward.3} parent=0 // pred_check
    _
  $region7: #{forward.3} parent=0 // pred_check_branch
    %20 = sbr.rel (0) target = $region9
  $region8: #{forward.3} parent=0 // pred_region
    _
  $region9: #{forward.3} parent=0 // pred_fallthru
    _
  // Predicated region
  $region10: #{forward.3} parent=0 // pred_check
    _
  $region11: #{forward.3} parent=0 // pred_check_branch
    %22 = sbr.rel (0) target = $region13
  $region12: #{forward.3} parent=0 // pred_region
    _
  $region13: #{forward.3} parent=0 // pred_fallthru
    _
  // Predicated region
  $region14: #{forward.3} parent=0 // pred_check
    _
  $region15: #{forward.3} parent=0 // pred_check_branch
    %24 = sbr.rel (0) target = $region17
  $region16: #{forward.3} parent=0 // pred_region
    _
  $region17: #{forward.3} parent=0 // pred_fallthru
    _
  // Predicated region
  $region18: #{forward.3} parent=0 // pred_check
    _
  $region19: #{forward.3} parent=0 // pred_check_branch
    %26 = sbr.rel (0) target = $region21
  $region20: #{forward.3} parent=0 // pred_region
    _
  $region21: #{forward.3} parent=0 // pred_fallthru
    _
  // Predicated region
  $region22: #{forward.3} parent=0 // pred_check
    _
  $region23: #{forward.3} parent=0 // pred_check_branch
    %28 = sbr.rel (0) target = $region25
  $region24: #{forward.3} parent=0 // pred_region
    _
  $region25: #{forward.3} parent=0 // pred_fallthru
    _
  // Predicated region
  $region26: #{forward.3} parent=0 // pred_check
    _
  $region27: #{forward.3} parent=0 // pred_check_branch
    %30 = sbr.rel (0) target = $region29
  $region28: #{forward.3} parent=0 // pred_region
    _
  $region29: #{forward.3} parent=0 // pred_fallthru
    _
  // Predicated region
  $region30: #{forward.3} parent=0 // pred_check
    _
  $region31: #{forward.3} parent=0 // pred_check_branch
    %32 = sbr.rel (0) target = $region33
  $region32: #{forward.3} parent=0 // pred_region
    _
  $region33: #{forward.3} parent=0 // pred_fallthru
    _
  // Predicated region
  $region34: #{forward.3} parent=0 // pred_check
    _
  $region35: #{forward.3} parent=0 // pred_check_branch
    %34 = sbr.rel (0) target = $region37
  $region36: #{forward.3} parent=0 // pred_region
    _
  $region37: #{forward.3} parent=0 // pred_fallthru
    _
  // Predicated region
  $region38: #{forward.3} parent=0 // pred_check
    _
  $region39: #{forward.3} parent=0 // pred_check_branch
    %36 = sbr.rel (0) target = $region41
  $region40: #{forward.3} parent=0 // pred_region
    _
  $region41: #{forward.3} parent=0 // pred_fallthru
    _
  // Predicated region
  $region42: #{forward.3} parent=0 // pred_check
    _
  $region43: #{forward.3} parent=0 // pred_check_branch
    %38 = sbr.rel (0) target = $region45
  $region44: #{forward.3} parent=0 // pred_region
    _
  $region45: #{forward.3} parent=0 // pred_fallthru
    _
  // Predicated region
  $region46: #{forward.3} parent=0 // pred_check
    _
  $region47: #{forward.3} parent=0 // pred_check_branch
    %40 = sbr.rel (0) target = $region49
  $region48: #{forward.3} parent=0 // pred_region
    _
  $region49: #{forward.3} parent=0 // pred_fallthru
    _
  %v42 = vld [vmem:[%s0] sm:$0xff]
  %v43 = vld [vmem:[%s0 + $0x8] sm:$0xff]
  %v44 = vld [vmem:[%s0 + $0x10] sm:$0xff]
  %v45 = vld [vmem:[%s0 + $0x18] sm:$0xff]
  %v46 = vld [vmem:[%s0 + $0x20] sm:$0xff]
  %v47 = vld [vmem:[%s0 + $0x28] sm:$0xff]
  %v48 = vld [vmem:[%s0 + $0x30] sm:$0xff]
  %v49 = vld [vmem:[%s0 + $0x38] sm:$0xff]
  %v50 = vld [vmem:[%s0 + $0x40] sm:$0xff]
  %v51 = vld [vmem:[%s0 + $0x48] sm:$0xff]
  %v52 = vld [vmem:[%s0 + $0x50] sm:$0xff]
  %v53 = vld [vmem:[%s0 + $0x58] sm:$0xff]
  %v54 = vld [vmem:[%s0 + $0x60] sm:$0xff]
  %v55 = vld [vmem:[%s0 + $0x68] sm:$0xff]
  %v56 = vld [vmem:[%s0 + $0x70] sm:$0xff]
  %v57 = vld [vmem:[%s0 + $0x78] sm:$0xff]
  %v58 = vld [vmem:[%s1] sm:$0xf]
  %v59 = vld [vmem:[%s1 + $0x4] sm:$0xf]
  %v60 = vld [vmem:[%s1 + $0x8] sm:$0xf]
  %v61 = vld [vmem:[%s1 + $0xc] sm:$0xf]
  %v62 = vld [vmem:[%s1 + $0x10] sm:$0xf]
  %v63 = vld [vmem:[%s1 + $0x14] sm:$0xf]
  %v64 = vld [vmem:[%s1 + $0x18] sm:$0xf]
  %v65 = vld [vmem:[%s1 + $0x1c] sm:$0xf]
  %v66 = vld [vmem:[%s1 + $0x20] sm:$0xf]
  %v67 = vld [vmem:[%s1 + $0x24] sm:$0xf]
  %v68 = vld [vmem:[%s1 + $0x28] sm:$0xf]
  %v69 = vld [vmem:[%s1 + $0x2c] sm:$0xf]
  %v70 = vld [vmem:[%s1 + $0x30] sm:$0xf]
  %v71 = vld [vmem:[%s1 + $0x34] sm:$0xf]
  %v72 = vld [vmem:[%s1 + $0x38] sm:$0xf]
  %v73 = vld [vmem:[%s1 + $0x3c] sm:$0xf]
  %v74 = vld [vmem:[%s1 + $0x40] sm:$0xf]
  %v75 = vld [vmem:[%s1 + $0x44] sm:$0xf]
  %v76 = vld [vmem:[%s1 + $0x48] sm:$0xf]
  %v77 = vld [vmem:[%s1 + $0x4c] sm:$0xf]
  %v78 = vld [vmem:[%s1 + $0x50] sm:$0xf]
  %v79 = vld [vmem:[%s1 + $0x54] sm:$0xf]
  %v80 = vld [vmem:[%s1 + $0x58] sm:$0xf]
  %v81 = vld [vmem:[%s1 + $0x5c] sm:$0xf]
  %v82 = vld [vmem:[%s1 + $0x60] sm:$0xf]
  %v83 = vld [vmem:[%s1 + $0x64] sm:$0xf]
  %v84 = vld [vmem:[%s1 + $0x68] sm:$0xf]
  %v85 = vld [vmem:[%s1 + $0x6c] sm:$0xf]
  %v86 = vld [vmem:[%s1 + $0x70] sm:$0xf]
  %v87 = vld [vmem:[%s1 + $0x74] sm:$0xf]
  %v88 = vld [vmem:[%s1 + $0x78] sm:$0xf]
  %v89 = vld [vmem:[%s1 + $0x7c] sm:$0xf]
  %v90 = vld [vmem:[%s2] sm:$0x1]
  %v91 = vld [vmem:[%s3] sm:$0x1]
  %v108 = vunpack.c.l.b16 %v42
  %v109 = vunpack.c.h.b16 %v42
  %v110 = vunpack.c.l.b16 %v43
  %v111 = vunpack.c.h.b16 %v43
  %v112 = vunpack.c.l.b16 %v44
  %v113 = vunpack.c.h.b16 %v44
  %v114 = vunpack.c.l.b16 %v45
  %v115 = vunpack.c.h.b16 %v45
  %v116 = vunpack.c.l.b16 %v46
  %v117 = vunpack.c.h.b16 %v46
  %v118 = vunpack.c.l.b16 %v47
  %v119 = vunpack.c.h.b16 %v47
  %v120 = vunpack.c.l.b16 %v48
  %v121 = vunpack.c.h.b16 %v48
  %v122 = vunpack.c.l.b16 %v49
  %v123 = vunpack.c.h.b16 %v49
  %v124 = vunpack.c.l.b16 %v50
  %v125 = vunpack.c.h.b16 %v50
  %v126 = vunpack.c.l.b16 %v51
  %v127 = vunpack.c.h.b16 %v51
  %v128 = vunpack.c.l.b16 %v52
  %v129 = vunpack.c.h.b16 %v52
  %v130 = vunpack.c.l.b16 %v53
  %v131 = vunpack.c.h.b16 %v53
  %v132 = vunpack.c.l.b16 %v54
  %v133 = vunpack.c.h.b16 %v54
  %v134 = vunpack.c.l.b16 %v55
  %v135 = vunpack.c.h.b16 %v55
  %v136 = vunpack.c.l.b16 %v56
  %v137 = vunpack.c.h.b16 %v56
  %v138 = vunpack.c.l.b16 %v57
  %v139 = vunpack.c.h.b16 %v57
  %v140 = vpack.c.b16 %v110, %v108
  %v141 = vpack.c.b16 %v111, %v109
  %v142 = vpack.c.b16 %v114, %v112
  %v143 = vpack.c.b16 %v115, %v113
  %v144 = vpack.c.b16 %v118, %v116
  %v145 = vpack.c.b16 %v119, %v117
  %v146 = vpack.c.b16 %v122, %v120
  %v147 = vpack.c.b16 %v123, %v121
  %v148 = vpack.c.b16 %v126, %v124
  %v149 = vpack.c.b16 %v127, %v125
  %v150 = vpack.c.b16 %v130, %v128
  %v151 = vpack.c.b16 %v131, %v129
  %v152 = vpack.c.b16 %v134, %v132
  %v153 = vpack.c.b16 %v135, %v133
  %v154 = vpack.c.b16 %v138, %v136
  %v155 = vpack.c.b16 %v139, %v137
  %v204 = vunpack.c.l.b16 %v58
  %v205 = vunpack.c.l.b16 %v59
  %v206 = vunpack.c.l.b16 %v60
  %v207 = vunpack.c.l.b16 %v61
  %v208 = vunpack.c.l.b16 %v62
  %v209 = vunpack.c.l.b16 %v63
  %v210 = vunpack.c.l.b16 %v64
  %v211 = vunpack.c.l.b16 %v65
  %v212 = vunpack.c.l.b16 %v66
  %v213 = vunpack.c.l.b16 %v67
  %v214 = vunpack.c.l.b16 %v68
  %v215 = vunpack.c.l.b16 %v69
  %v216 = vunpack.c.l.b16 %v70
  %v217 = vunpack.c.l.b16 %v71
  %v218 = vunpack.c.l.b16 %v72
  %v219 = vunpack.c.l.b16 %v73
  %v220 = vunpack.c.l.b16 %v74
  %v221 = vunpack.c.l.b16 %v75
  %v222 = vunpack.c.l.b16 %v76
  %v223 = vunpack.c.l.b16 %v77
  %v224 = vunpack.c.l.b16 %v78
  %v225 = vunpack.c.l.b16 %v79
  %v226 = vunpack.c.l.b16 %v80
  %v227 = vunpack.c.l.b16 %v81
  %v228 = vunpack.c.l.b16 %v82
  %v229 = vunpack.c.l.b16 %v83
  %v230 = vunpack.c.l.b16 %v84
  %v231 = vunpack.c.l.b16 %v85
  %v232 = vunpack.c.l.b16 %v86
  %v233 = vunpack.c.l.b16 %v87
  %v234 = vunpack.c.l.b16 %v88
  %v235 = vunpack.c.l.b16 %v89
  %v236 = vpack.c.b16 %v205, %v204
  %v237 = vpack.c.b16 %v207, %v206
  %v238 = vpack.c.b16 %v209, %v208
  %v239 = vpack.c.b16 %v211, %v210
  %v240 = vpack.c.b16 %v213, %v212
  %v241 = vpack.c.b16 %v215, %v214
  %v242 = vpack.c.b16 %v217, %v216
  %v243 = vpack.c.b16 %v219, %v218
  %v244 = vpack.c.b16 %v221, %v220
  %v245 = vpack.c.b16 %v223, %v222
  %v246 = vpack.c.b16 %v225, %v224
  %v247 = vpack.c.b16 %v227, %v226
  %v248 = vpack.c.b16 %v229, %v228
  %v249 = vpack.c.b16 %v231, %v230
  %v250 = vpack.c.b16 %v233, %v232
  %v251 = vpack.c.b16 %v235, %v234
  %268 = vmatprep.subr.bf16.mxu0 0
  %269 = vmatpush1.bf16.msra.mxu0 %v236
  %270 = vmatprep.subr.bf16.mxu0 0
  %271 = vmatpush1.bf16.msra.mxu0 %v237
  %272 = vmatprep.subr.bf16.mxu0 0
  %273 = vmatpush1.bf16.msra.mxu0 %v238
  %274 = vmatprep.subr.bf16.mxu0 0
  %275 = vmatpush1.bf16.msra.mxu0 %v239
  %276 = vmatprep.subr.bf16.mxu0 0
  %277 = vmatpush1.bf16.msra.mxu0 %v240
  %278 = vmatprep.subr.bf16.mxu0 0
  %279 = vmatpush1.bf16.msra.mxu0 %v241
  %280 = vmatprep.subr.bf16.mxu0 0
  %281 = vmatpush1.bf16.msra.mxu0 %v242
  %282 = vmatprep.subr.bf16.mxu0 0
  %283 = vmatpush1.bf16.msra.mxu0 %v243
  %284 = vmatprep.subr.bf16.mxu0 0
  %285 = vmatpush1.bf16.msra.mxu0 %v244
  %286 = vmatprep.subr.bf16.mxu0 0
  %287 = vmatpush1.bf16.msra.mxu0 %v245
  %288 = vmatprep.subr.bf16.mxu0 0
  %289 = vmatpush1.bf16.msra.mxu0 %v246
  %290 = vmatprep.subr.bf16.mxu0 0
  %291 = vmatpush1.bf16.msra.mxu0 %v247
  %292 = vmatprep.subr.bf16.mxu0 0
  %293 = vmatpush1.bf16.msra.mxu0 %v248
  %294 = vmatprep.subr.bf16.mxu0 0
  %295 = vmatpush1.bf16.msra.mxu0 %v249
  %296 = vmatprep.subr.bf16.mxu0 0
  %297 = vmatpush1.bf16.msra.mxu0 %v250
  %298 = vmatprep.subr.bf16.mxu0 0
  %299 = vmatpush1.bf16.msra.mxu0 %v251
  %300 = vmatprep.mubr.bf16.mxu0 %v141
  %301 = vmatmul.mubr.bf16.gmra.mrb[0].mxu0 %v140
  %v302 = vpop.f32.mrb[0].mxu0
  %v303 = vadd.f32 0.0, %v302
  %v304 = vpop.f32.mrb[0].mxu0
  %v305 = vpop.f32.mrb[0].mxu0
  %v306 = vadd.f32 0.0, %v305
  %v307 = vpop.f32.mrb[0].mxu0
  %308 = vmatprep.mubr.bf16.mxu0 %v143
  %309 = vmatmul.mubr.bf16.gmra.mrb[0].mxu0 %v142
  %v310 = vpop.f32.mrb[0].mxu0
  %v311 = vadd.f32 0.0, %v310
  %v312 = vpop.f32.mrb[0].mxu0
  %v313 = vpop.f32.mrb[0].mxu0
  %v314 = vadd.f32 0.0, %v313
  %v315 = vpop.f32.mrb[0].mxu0
  %316 = vmatprep.mubr.bf16.mxu0 %v145
  %317 = vmatmul.mubr.bf16.gmra.mrb[0].mxu0 %v144
  %v318 = vpop.f32.mrb[0].mxu0
  %v319 = vadd.f32 0.0, %v318
  %v320 = vpop.f32.mrb[0].mxu0
  %v321 = vpop.f32.mrb[0].mxu0
  %v322 = vadd.f32 0.0, %v321
  %v323 = vpop.f32.mrb[0].mxu0
  %324 = vmatprep.mubr.bf16.mxu0 %v147
  %325 = vmatmul.mubr.bf16.gmra.mrb[0].mxu0 %v146
  %v326 = vpop.f32.mrb[0].mxu0
  %v327 = vadd.f32 0.0, %v326
  %v328 = vpop.f32.mrb[0].mxu0
  %v329 = vpop.f32.mrb[0].mxu0
  %v330 = vadd.f32 0.0, %v329
  %v331 = vpop.f32.mrb[0].mxu0
  %332 = vmatprep.mubr.bf16.mxu0 %v149
  %333 = vmatmul.mubr.bf16.gmra.mrb[0].mxu0 %v148
  %v334 = vpop.f32.mrb[0].mxu0
  %v335 = vadd.f32 0.0, %v334
  %v336 = vpop.f32.mrb[0].mxu0
  %v337 = vpop.f32.mrb[0].mxu0
  %v338 = vadd.f32 0.0, %v337
  %v339 = vpop.f32.mrb[0].mxu0
  %340 = vmatprep.mubr.bf16.mxu0 %v151
  %341 = vmatmul.mubr.bf16.gmra.mrb[0].mxu0 %v150
  %v342 = vpop.f32.mrb[0].mxu0
  %v343 = vadd.f32 0.0, %v342
  %v344 = vpop.f32.mrb[0].mxu0
  %v345 = vpop.f32.mrb[0].mxu0
  %v346 = vadd.f32 0.0, %v345
  %v347 = vpop.f32.mrb[0].mxu0
  %348 = vmatprep.mubr.bf16.mxu0 %v153
  %349 = vmatmul.mubr.bf16.gmra.mrb[0].mxu0 %v152
  %v350 = vpop.f32.mrb[0].mxu0
  %v351 = vadd.f32 0.0, %v350
  %v352 = vpop.f32.mrb[0].mxu0
  %v353 = vpop.f32.mrb[0].mxu0
  %v354 = vadd.f32 0.0, %v353
  %v355 = vpop.f32.mrb[0].mxu0
  %356 = vmatprep.mubr.bf16.mxu0 %v155
  %357 = vmatmul.mubr.bf16.gmra.mrb[0].mxu0 %v154
  %v358 = vpop.f32.mrb[0].mxu0
  %v359 = vadd.f32 0.0, %v358
  %v360 = vpop.f32.mrb[0].mxu0
  %v361 = vpop.f32.mrb[0].mxu0
  %v362 = vadd.f32 0.0, %v361
  %v363 = vpop.f32.mrb[0].mxu0
  %364 = vdwg.mxu0
  %v366 = vlaneseq
  %v367 = vshrl.u32 %v366, 7
  %v368 = vsub.s32 0, %v367
  %v369 = vrot.slane %v90, %v368
  %v371 = vmul.f32 %v303, %v369
  %v372 = vmul.f32 %v306, %v369
  %v373 = vmul.f32 %v311, %v369
  %v374 = vmul.f32 %v314, %v369
  %v375 = vmul.f32 %v319, %v369
  %v376 = vmul.f32 %v322, %v369
  %v377 = vmul.f32 %v327, %v369
  %v378 = vmul.f32 %v330, %v369
  %v379 = vmul.f32 %v335, %v369
  %v380 = vmul.f32 %v338, %v369
  %v381 = vmul.f32 %v343, %v369
  %v382 = vmul.f32 %v346, %v369
  %v383 = vmul.f32 %v351, %v369
  %v384 = vmul.f32 %v354, %v369
  %v385 = vmul.f32 %v359, %v369
  %v386 = vmul.f32 %v362, %v369
  %v388 = vlaneseq
  %v389 = vshrl.u32 %v388, 7
  %v390 = vsub.s32 0, %v389
  %v391 = vrot.slane %v91, %v390
  %v393 = vadd.f32 %v371, %v391
  %v394 = vadd.f32 %v372, %v391
  %v395 = vadd.f32 %v373, %v391
  %v396 = vadd.f32 %v374, %v391
  %v397 = vadd.f32 %v375, %v391
  %v398 = vadd.f32 %v376, %v391
  %v399 = vadd.f32 %v377, %v391
  %v400 = vadd.f32 %v378, %v391
  %v401 = vadd.f32 %v379, %v391
  %v402 = vadd.f32 %v380, %v391
  %v403 = vadd.f32 %v381, %v391
  %v404 = vadd.f32 %v382, %v391
  %v405 = vadd.f32 %v383, %v391
  %v406 = vadd.f32 %v384, %v391
  %v407 = vadd.f32 %v385, %v391
  %v408 = vadd.f32 %v386, %v391
  %v409 = vmul.f32 %v393, 0.5
  %v410 = vmul.f32 %v394, 0.5
  %v411 = vmul.f32 %v395, 0.5
  %v412 = vmul.f32 %v396, 0.5
  %v413 = vmul.f32 %v397, 0.5
  %v414 = vmul.f32 %v398, 0.5
  %v415 = vmul.f32 %v399, 0.5
  %v416 = vmul.f32 %v400, 0.5
  %v417 = vmul.f32 %v401, 0.5
  %v418 = vmul.f32 %v402, 0.5
  %v419 = vmul.f32 %v403, 0.5
  %v420 = vmul.f32 %v404, 0.5
  %v421 = vmul.f32 %v405, 0.5
  %v422 = vmul.f32 %v406, 0.5
  %v423 = vmul.f32 %v407, 0.5
  %v424 = vmul.f32 %v408, 0.5
  %v425 = vtanh.pop %v409
  %v426 = vtanh.pop %v410
  %v427 = vtanh.pop %v411
  %v428 = vtanh.pop %v412
  %v429 = vtanh.pop %v413
  %v430 = vtanh.pop %v414
  %v431 = vtanh.pop %v415
  %v432 = vtanh.pop %v416
  %v433 = vtanh.pop %v417
  %v434 = vtanh.pop %v418
  %v435 = vtanh.pop %v419
  %v436 = vtanh.pop %v420
  %v437 = vtanh.pop %v421
  %v438 = vtanh.pop %v422
  %v439 = vtanh.pop %v423
  %v440 = vtanh.pop %v424
  %v441 = vadd.f32 %v425, 1.0
  %v442 = vadd.f32 %v426, 1.0
  %v443 = vadd.f32 %v427, 1.0
  %v444 = vadd.f32 %v428, 1.0
  %v445 = vadd.f32 %v429, 1.0
  %v446 = vadd.f32 %v430, 1.0
  %v447 = vadd.f32 %v431, 1.0
  %v448 = vadd.f32 %v432, 1.0
  %v449 = vadd.f32 %v433, 1.0
  %v450 = vadd.f32 %v434, 1.0
  %v451 = vadd.f32 %v435, 1.0
  %v452 = vadd.f32 %v436, 1.0
  %v453 = vadd.f32 %v437, 1.0
  %v454 = vadd.f32 %v438, 1.0
  %v455 = vadd.f32 %v439, 1.0
  %v456 = vadd.f32 %v440, 1.0
  %v457 = vmul.f32 %v441, 0.5
  %v458 = vmul.f32 %v442, 0.5
  %v459 = vmul.f32 %v443, 0.5
  %v460 = vmul.f32 %v444, 0.5
  %v461 = vmul.f32 %v445, 0.5
  %v462 = vmul.f32 %v446, 0.5
  %v463 = vmul.f32 %v447, 0.5
  %v464 = vmul.f32 %v448, 0.5
  %v465 = vmul.f32 %v449, 0.5
  %v466 = vmul.f32 %v450, 0.5
  %v467 = vmul.f32 %v451, 0.5
  %v468 = vmul.f32 %v452, 0.5
  %v469 = vmul.f32 %v453, 0.5
  %v470 = vmul.f32 %v454, 0.5
  %v471 = vmul.f32 %v455, 0.5
  %v472 = vmul.f32 %v456, 0.5
  %v473 = vmul.f32 %v393, %v457
  %v474 = vmul.f32 %v394, %v458
  %v475 = vmul.f32 %v395, %v459
  %v476 = vmul.f32 %v396, %v460
  %v477 = vmul.f32 %v397, %v461
  %v478 = vmul.f32 %v398, %v462
  %v479 = vmul.f32 %v399, %v463
  %v480 = vmul.f32 %v400, %v464
  %v481 = vmul.f32 %v401, %v465
  %v482 = vmul.f32 %v402, %v466
  %v483 = vmul.f32 %v403, %v467
  %v484 = vmul.f32 %v404, %v468
  %v485 = vmul.f32 %v405, %v469
  %v486 = vmul.f32 %v406, %v470
  %v487 = vmul.f32 %v407, %v471
  %v488 = vmul.f32 %v408, %v472
  %v489 = vmax.f32 %v473, %v477
  %v490 = vmax.f32 %v474, %v478
  %v491 = vmax.f32 %v475, %v479
  %v492 = vmax.f32 %v476, %v480
  %v493 = vmax.f32 %v481, %v485
  %v494 = vmax.f32 %v482, %v486
  %v495 = vmax.f32 %v483, %v487
  %v496 = vmax.f32 %v484, %v488
  %v497 = vmax.f32 %v489, %v493
  %v498 = vmax.f32 %v490, %v494
  %v499 = vmax.f32 %v491, %v495
  %v500 = vmax.f32 %v492, %v496
  %v501 = vpack.c.bf16 %v498, %v497
  %v502 = vpack.c.bf16 %v500, %v499
  %v503 = vld [vmem:[%s4] sm:$0xff]
  %v504 = vld [vmem:[%s4 + $0x8] sm:$0xff]
  %v505 = vld [vmem:[%s4 + $0x10] sm:$0xff]
  %v506 = vld [vmem:[%s4 + $0x18] sm:$0xff]
  %v507 = vld [vmem:[%s4 + $0x20] sm:$0xf]
  %v508 = vld [vmem:[%s4 + $0x24] sm:$0xff]
  %v509 = vld [vmem:[%s4 + $0x2c] sm:$0xff]
  %v510 = vld [vmem:[%s4 + $0x34] sm:$0xff]
  %v511 = vld [vmem:[%s4 + $0x3c] sm:$0xff]
  %v512 = vld [vmem:[%s4 + $0x44] sm:$0xf]
  %v513 = vld [vmem:[%s4 + $0x48] sm:$0xff]
  %v514 = vld [vmem:[%s4 + $0x50] sm:$0xff]
  %v515 = vld [vmem:[%s4 + $0x58] sm:$0xff]
  %v516 = vld [vmem:[%s4 + $0x60] sm:$0xff]
  %v517 = vld [vmem:[%s4 + $0x68] sm:$0xf]
  %v518 = vld [vmem:[%s4 + $0x6c] sm:$0xff]
  %v519 = vld [vmem:[%s4 + $0x74] sm:$0xff]
  %v520 = vld [vmem:[%s4 + $0x7c] sm:$0xff]
  %v521 = vld [vmem:[%s4 + $0x84] sm:$0xff]
  %v522 = vld [vmem:[%s4 + $0x8c] sm:$0xf]
  %v523 = vld [vmem:[%s4 + $0x90] sm:$0xff]
  %v524 = vld [vmem:[%s4 + $0x98] sm:$0xff]
  %v525 = vld [vmem:[%s4 + $0xa0] sm:$0xff]
  %v526 = vld [vmem:[%s4 + $0xa8] sm:$0xff]
  %v527 = vld [vmem:[%s4 + $0xb0] sm:$0xf]
  %v528 = vld [vmem:[%s4 + $0xb4] sm:$0xff]
  %v529 = vld [vmem:[%s4 + $0xbc] sm:$0xff]
  %v530 = vld [vmem:[%s4 + $0xc4] sm:$0xff]
  %v531 = vld [vmem:[%s4 + $0xcc] sm:$0xff]
  %v532 = vld [vmem:[%s4 + $0xd4] sm:$0xf]
  %v533 = vld [vmem:[%s4 + $0xd8] sm:$0xff]
  %v534 = vld [vmem:[%s4 + $0xe0] sm:$0xff]
  %v535 = vld [vmem:[%s4 + $0xe8] sm:$0xff]
  %v536 = vld [vmem:[%s4 + $0xf0] sm:$0xff]
  %v537 = vld [vmem:[%s4 + $0xf8] sm:$0xf]
  %v538 = vld [vmem:[%s4 + $0xfc] sm:$0xff]
  %v539 = vld [vmem:[%s4 + $0x104] sm:$0xff]
  %v540 = vld [vmem:[%s4 + $0x10c] sm:$0xff]
  %v541 = vld [vmem:[%s4 + $0x114] sm:$0xff]
  %v542 = vld [vmem:[%s4 + $0x11c] sm:$0xf]
  %v543 = vld [vmem:[%s4 + $0x120] sm:$0xff]
  %v544 = vld [vmem:[%s4 + $0x128] sm:$0xff]
  %v545 = vld [vmem:[%s4 + $0x130] sm:$0xff]
  %v546 = vld [vmem:[%s4 + $0x138] sm:$0xff]
  %v547 = vld [vmem:[%s4 + $0x140] sm:$0xf]
  %v548 = vld [vmem:[%s4 + $0x144] sm:$0xff]
  %v549 = vld [vmem:[%s4 + $0x14c] sm:$0xff]
  %v550 = vld [vmem:[%s4 + $0x154] sm:$0xff]
  %v551 = vld [vmem:[%s4 + $0x15c] sm:$0xff]
  %v552 = vld [vmem:[%s4 + $0x164] sm:$0xf]
  %v553 = vld [vmem:[%s4 + $0x168] sm:$0xff]
  %v554 = vld [vmem:[%s4 + $0x170] sm:$0xff]
  %v555 = vld [vmem:[%s4 + $0x178] sm:$0xff]
  %v556 = vld [vmem:[%s4 + $0x180] sm:$0xff]
  %v557 = vld [vmem:[%s4 + $0x188] sm:$0xf]
  %v558 = vld [vmem:[%s4 + $0x18c] sm:$0xff]
  %v559 = vld [vmem:[%s4 + $0x194] sm:$0xff]
  %v560 = vld [vmem:[%s4 + $0x19c] sm:$0xff]
  %v561 = vld [vmem:[%s4 + $0x1a4] sm:$0xff]
  %v562 = vld [vmem:[%s4 + $0x1ac] sm:$0xf]
  %v563 = vld [vmem:[%s4 + $0x1b0] sm:$0xff]
  %v564 = vld [vmem:[%s4 + $0x1b8] sm:$0xff]
  %v565 = vld [vmem:[%s4 + $0x1c0] sm:$0xff]
  %v566 = vld [vmem:[%s4 + $0x1c8] sm:$0xff]
  %v567 = vld [vmem:[%s4 + $0x1d0] sm:$0xf]
  %v568 = vld [vmem:[%s4 + $0x1d4] sm:$0xff]
  %v569 = vld [vmem:[%s4 + $0x1dc] sm:$0xff]
  %v570 = vld [vmem:[%s4 + $0x1e4] sm:$0xff]
  %v571 = vld [vmem:[%s4 + $0x1ec] sm:$0xff]
  %v572 = vld [vmem:[%s4 + $0x1f4] sm:$0xf]
  %v573 = vld [vmem:[%s4 + $0x1f8] sm:$0xff]
  %v574 = vld [vmem:[%s4 + $0x200] sm:$0xff]
  %v575 = vld [vmem:[%s4 + $0x208] sm:$0xff]
  %v576 = vld [vmem:[%s4 + $0x210] sm:$0xff]
  %v577 = vld [vmem:[%s4 + $0x218] sm:$0xf]
  %v578 = vld [vmem:[%s4 + $0x21c] sm:$0xff]
  %v579 = vld [vmem:[%s4 + $0x224] sm:$0xff]
  %v580 = vld [vmem:[%s4 + $0x22c] sm:$0xff]
  %v581 = vld [vmem:[%s4 + $0x234] sm:$0xff]
  %v582 = vld [vmem:[%s4 + $0x23c] sm:$0xf]
  %v663 = vunpack.c.l.b16 %v503
  %v664 = vunpack.c.h.b16 %v503
  %v665 = vunpack.c.l.b16 %v504
  %v666 = vunpack.c.h.b16 %v504
  %v667 = vunpack.c.l.b16 %v505
  %v668 = vunpack.c.h.b16 %v505
  %v669 = vunpack.c.l.b16 %v506
  %v670 = vunpack.c.h.b16 %v506
  %v671 = vunpack.c.l.b16 %v507
  %v672 = vunpack.c.l.b16 %v508
  %v673 = vunpack.c.h.b16 %v508
  %v674 = vunpack.c.l.b16 %v509
  %v675 = vunpack.c.h.b16 %v509
  %v676 = vunpack.c.l.b16 %v510
  %v677 = vunpack.c.h.b16 %v510
  %v678 = vunpack.c.l.b16 %v511
  %v679 = vunpack.c.h.b16 %v511
  %v680 = vunpack.c.l.b16 %v512
  %v681 = vunpack.c.l.b16 %v513
  %v682 = vunpack.c.h.b16 %v513
  %v683 = vunpack.c.l.b16 %v514
  %v684 = vunpack.c.h.b16 %v514
  %v685 = vunpack.c.l.b16 %v515
  %v686 = vunpack.c.h.b16 %v515
  %v687 = vunpack.c.l.b16 %v516
  %v688 = vunpack.c.h.b16 %v516
  %v689 = vunpack.c.l.b16 %v517
  %v690 = vunpack.c.l.b16 %v518
  %v691 = vunpack.c.h.b16 %v518
  %v692 = vunpack.c.l.b16 %v519
  %v693 = vunpack.c.h.b16 %v519
  %v694 = vunpack.c.l.b16 %v520
  %v695 = vunpack.c.h.b16 %v520
  %v696 = vunpack.c.l.b16 %v521
  %v697 = vunpack.c.h.b16 %v521
  %v698 = vunpack.c.l.b16 %v522
  %v699 = vunpack.c.l.b16 %v523
  %v700 = vunpack.c.h.b16 %v523
  %v701 = vunpack.c.l.b16 %v524
  %v702 = vunpack.c.h.b16 %v524
  %v703 = vunpack.c.l.b16 %v525
  %v704 = vunpack.c.h.b16 %v525
  %v705 = vunpack.c.l.b16 %v526
  %v706 = vunpack.c.h.b16 %v526
  %v707 = vunpack.c.l.b16 %v527
  %v708 = vunpack.c.l.b16 %v528
  %v709 = vunpack.c.h.b16 %v528
  %v710 = vunpack.c.l.b16 %v529
  %v711 = vunpack.c.h.b16 %v529
  %v712 = vunpack.c.l.b16 %v530
  %v713 = vunpack.c.h.b16 %v530
  %v714 = vunpack.c.l.b16 %v531
  %v715 = vunpack.c.h.b16 %v531
  %v716 = vunpack.c.l.b16 %v532
  %v717 = vunpack.c.l.b16 %v533
  %v718 = vunpack.c.h.b16 %v533
  %v719 = vunpack.c.l.b16 %v534
  %v720 = vunpack.c.h.b16 %v534
  %v721 = vunpack.c.l.b16 %v535
  %v722 = vunpack.c.h.b16 %v535
  %v723 = vunpack.c.l.b16 %v536
  %v724 = vunpack.c.h.b16 %v536
  %v725 = vunpack.c.l.b16 %v537
  %v726 = vunpack.c.l.b16 %v538
  %v727 = vunpack.c.h.b16 %v538
  %v728 = vunpack.c.l.b16 %v539
  %v729 = vunpack.c.h.b16 %v539
  %v730 = vunpack.c.l.b16 %v540
  %v731 = vunpack.c.h.b16 %v540
  %v732 = vunpack.c.l.b16 %v541
  %v733 = vunpack.c.h.b16 %v541
  %v734 = vunpack.c.l.b16 %v542
  %v735 = vunpack.c.l.b16 %v543
  %v736 = vunpack.c.h.b16 %v543
  %v737 = vunpack.c.l.b16 %v544
  %v738 = vunpack.c.h.b16 %v544
  %v739 = vunpack.c.l.b16 %v545
  %v740 = vunpack.c.h.b16 %v545
  %v741 = vunpack.c.l.b16 %v546
  %v742 = vunpack.c.h.b16 %v546
  %v743 = vunpack.c.l.b16 %v547
  %v744 = vunpack.c.l.b16 %v548
  %v745 = vunpack.c.h.b16 %v548
  %v746 = vunpack.c.l.b16 %v549
  %v747 = vunpack.c.h.b16 %v549
  %v748 = vunpack.c.l.b16 %v550
  %v749 = vunpack.c.h.b16 %v550
  %v750 = vunpack.c.l.b16 %v551
  %v751 = vunpack.c.h.b16 %v551
  %v752 = vunpack.c.l.b16 %v552
  %v753 = vunpack.c.l.b16 %v553
  %v754 = vunpack.c.h.b16 %v553
  %v755 = vunpack.c.l.b16 %v554
  %v756 = vunpack.c.h.b16 %v554
  %v757 = vunpack.c.l.b16 %v555
  %v758 = vunpack.c.h.b16 %v555
  %v759 = vunpack.c.l.b16 %v556
  %v760 = vunpack.c.h.b16 %v556
  %v761 = vunpack.c.l.b16 %v557
  %v762 = vunpack.c.l.b16 %v558
  %v763 = vunpack.c.h.b16 %v558
  %v764 = vunpack.c.l.b16 %v559
  %v765 = vunpack.c.h.b16 %v559
  %v766 = vunpack.c.l.b16 %v560
  %v767 = vunpack.c.h.b16 %v560
  %v768 = vunpack.c.l.b16 %v561
  %v769 = vunpack.c.h.b16 %v561
  %v770 = vunpack.c.l.b16 %v562
  %v771 = vunpack.c.l.b16 %v563
  %v772 = vunpack.c.h.b16 %v563
  %v773 = vunpack.c.l.b16 %v564
  %v774 = vunpack.c.h.b16 %v564
  %v775 = vunpack.c.l.b16 %v565
  %v776 = vunpack.c.h.b16 %v565
  %v777 = vunpack.c.l.b16 %v566
  %v778 = vunpack.c.h.b16 %v566
  %v779 = vunpack.c.l.b16 %v567
  %v780 = vunpack.c.l.b16 %v568
  %v781 = vunpack.c.h.b16 %v568
  %v782 = vunpack.c.l.b16 %v569
  %v783 = vunpack.c.h.b16 %v569
  %v784 = vunpack.c.l.b16 %v570
  %v785 = vunpack.c.h.b16 %v570
  %v786 = vunpack.c.l.b16 %v571
  %v787 = vunpack.c.h.b16 %v571
  %v788 = vunpack.c.l.b16 %v572
  %v789 = vunpack.c.l.b16 %v573
  %v790 = vunpack.c.h.b16 %v573
  %v791 = vunpack.c.l.b16 %v574
  %v792 = vunpack.c.h.b16 %v574
  %v793 = vunpack.c.l.b16 %v575
  %v794 = vunpack.c.h.b16 %v575
  %v795 = vunpack.c.l.b16 %v576
  %v796 = vunpack.c.h.b16 %v576
  %v797 = vunpack.c.l.b16 %v577
  %v798 = vunpack.c.l.b16 %v578
  %v799 = vunpack.c.h.b16 %v578
  %v800 = vunpack.c.l.b16 %v579
  %v801 = vunpack.c.h.b16 %v579
  %v802 = vunpack.c.l.b16 %v580
  %v803 = vunpack.c.h.b16 %v580
  %v804 = vunpack.c.l.b16 %v581
  %v805 = vunpack.c.h.b16 %v581
  %v806 = vunpack.c.l.b16 %v582
  %v807 = vpack.c.b16 %v672, %v663
  %v808 = vpack.c.b16 %v673, %v664
  %v809 = vpack.c.b16 %v674, %v665
  %v810 = vpack.c.b16 %v675, %v666
  %v811 = vpack.c.b16 %v676, %v667
  %v812 = vpack.c.b16 %v677, %v668
  %v813 = vpack.c.b16 %v678, %v669
  %v814 = vpack.c.b16 %v679, %v670
  %v815 = vpack.c.b16 %v680, %v671
  %v816 = vpack.c.b16 %v690, %v681
  %v817 = vpack.c.b16 %v691, %v682
  %v818 = vpack.c.b16 %v692, %v683
  %v819 = vpack.c.b16 %v693, %v684
  %v820 = vpack.c.b16 %v694, %v685
  %v821 = vpack.c.b16 %v695, %v686
  %v822 = vpack.c.b16 %v696, %v687
  %v823 = vpack.c.b16 %v697, %v688
  %v824 = vpack.c.b16 %v698, %v689
  %v825 = vpack.c.b16 %v708, %v699
  %v826 = vpack.c.b16 %v709, %v700
  %v827 = vpack.c.b16 %v710, %v701
  %v828 = vpack.c.b16 %v711, %v702
  %v829 = vpack.c.b16 %v712, %v703
  %v830 = vpack.c.b16 %v713, %v704
  %v831 = vpack.c.b16 %v714, %v705
  %v832 = vpack.c.b16 %v715, %v706
  %v833 = vpack.c.b16 %v716, %v707
  %v834 = vpack.c.b16 %v726, %v717
  %v835 = vpack.c.b16 %v727, %v718
  %v836 = vpack.c.b16 %v728, %v719
  %v837 = vpack.c.b16 %v729, %v720
  %v838 = vpack.c.b16 %v730, %v721
  %v839 = vpack.c.b16 %v731, %v722
  %v840 = vpack.c.b16 %v732, %v723
  %v841 = vpack.c.b16 %v733, %v724
  %v842 = vpack.c.b16 %v734, %v725
  %v843 = vpack.c.b16 %v744, %v735
  %v844 = vpack.c.b16 %v745, %v736
  %v845 = vpack.c.b16 %v746, %v737
  %v846 = vpack.c.b16 %v747, %v738
  %v847 = vpack.c.b16 %v748, %v739
  %v848 = vpack.c.b16 %v749, %v740
  %v849 = vpack.c.b16 %v750, %v741
  %v850 = vpack.c.b16 %v751, %v742
  %v851 = vpack.c.b16 %v752, %v743
  %v852 = vpack.c.b16 %v762, %v753
  %v853 = vpack.c.b16 %v763, %v754
  %v854 = vpack.c.b16 %v764, %v755
  %v855 = vpack.c.b16 %v765, %v756
  %v856 = vpack.c.b16 %v766, %v757
  %v857 = vpack.c.b16 %v767, %v758
  %v858 = vpack.c.b16 %v768, %v759
  %v859 = vpack.c.b16 %v769, %v760
  %v860 = vpack.c.b16 %v770, %v761
  %v861 = vpack.c.b16 %v780, %v771
  %v862 = vpack.c.b16 %v781, %v772
  %v863 = vpack.c.b16 %v782, %v773
  %v864 = vpack.c.b16 %v783, %v774
  %v865 = vpack.c.b16 %v784, %v775
  %v866 = vpack.c.b16 %v785, %v776
  %v867 = vpack.c.b16 %v786, %v777
  %v868 = vpack.c.b16 %v787, %v778
  %v869 = vpack.c.b16 %v788, %v779
  %v870 = vpack.c.b16 %v798, %v789
  %v871 = vpack.c.b16 %v799, %v790
  %v872 = vpack.c.b16 %v800, %v791
  %v873 = vpack.c.b16 %v801, %v792
  %v874 = vpack.c.b16 %v802, %v793
  %v875 = vpack.c.b16 %v803, %v794
  %v876 = vpack.c.b16 %v804, %v795
  %v877 = vpack.c.b16 %v805, %v796
  %v878 = vpack.c.b16 %v806, %v797
  %951 = vmatprep.subr.bf16.mxu0 %v808
  %952 = vmatpush1.bf16.msra.mxu0 %v807
  %953 = vmatprep.subr.bf16.mxu0 %v817
  %954 = vmatpush1.bf16.msra.mxu0 %v816
  %955 = vmatprep.subr.bf16.mxu0 %v826
  %956 = vmatpush1.bf16.msra.mxu0 %v825
  %957 = vmatprep.subr.bf16.mxu0 %v835
  %958 = vmatpush1.bf16.msra.mxu0 %v834
  %959 = vmatprep.subr.bf16.mxu0 %v844
  %960 = vmatpush1.bf16.msra.mxu0 %v843
  %961 = vmatprep.subr.bf16.mxu0 %v853
  %962 = vmatpush1.bf16.msra.mxu0 %v852
  %963 = vmatprep.subr.bf16.mxu0 %v862
  %964 = vmatpush1.bf16.msra.mxu0 %v861
  %965 = vmatprep.subr.bf16.mxu0 %v871
  %966 = vmatpush1.bf16.msra.mxu0 %v870
  %967 = vmatprep.subr.bf16.mxu0 0
  %968 = vmatpush1.bf16.msra.mxu0 0
  %969 = vmatprep.subr.bf16.mxu0 0
  %970 = vmatpush1.bf16.msra.mxu0 0
  %971 = vmatprep.subr.bf16.mxu0 0
  %972 = vmatpush1.bf16.msra.mxu0 0
  %973 = vmatprep.subr.bf16.mxu0 0
  %974 = vmatpush1.bf16.msra.mxu0 0
  %975 = vmatprep.subr.bf16.mxu0 0
  %976 = vmatpush1.bf16.msra.mxu0 0
  %977 = vmatprep.subr.bf16.mxu0 0
  %978 = vmatpush1.bf16.msra.mxu0 0
  %979 = vmatprep.subr.bf16.mxu0 0
  %980 = vmatpush1.bf16.msra.mxu0 0
  %981 = vmatprep.subr.bf16.mxu0 0
  %982 = vmatpush1.bf16.msra.mxu0 0
  %983 = vmatprep.mubr.bf16.mxu0 0
  %984 = vmatmul.mubr.bf16.gmra.mrb[0].mxu0 %v501
  %v985 = vpop.f32.mrb[0].mxu0
  %v986 = vadd.f32 0.0, %v985
  %v987 = vpop.f32.mrb[0].mxu0
  %v988 = vadd.f32 0.0, %v987
  %v989 = vpop.f32.mrb[0].mxu0
  %v990 = vadd.f32 0.0, %v989
  %v991 = vpop.f32.mrb[0].mxu0
  %v992 = vadd.f32 0.0, %v991
  %993 = vmatprep.mubr.bf16.mxu0 0
  %994 = vmatmul.mubr.bf16.gmra.mrb[0].mxu0 %v502
  %v995 = vpop.f32.mrb[0].mxu0
  %v996 = vadd.f32 0.0, %v995
  %v997 = vpop.f32.mrb[0].mxu0
  %v998 = vadd.f32 0.0, %v997
  %v999 = vpop.f32.mrb[0].mxu0
  %v1000 = vadd.f32 0.0, %v999
  %v1001 = vpop.f32.mrb[0].mxu0
  %v1002 = vadd.f32 0.0, %v1001
  %1003 = vdwg.mxu0
  %1004 = vmatprep.subr.bf16.mxu0 %v810
  %1005 = vmatpush1.bf16.msra.mxu0 %v809
  %1006 = vmatprep.subr.bf16.mxu0 %v819
  %1007 = vmatpush1.bf16.msra.mxu0 %v818
  %1008 = vmatprep.subr.bf16.mxu0 %v828
  %1009 = vmatpush1.bf16.msra.mxu0 %v827
  %1010 = vmatprep.subr.bf16.mxu0 %v837
  %1011 = vmatpush1.bf16.msra.mxu0 %v836
  %1012 = vmatprep.subr.bf16.mxu0 %v846
  %1013 = vmatpush1.bf16.msra.mxu0 %v845
  %1014 = vmatprep.subr.bf16.mxu0 %v855
  %1015 = vmatpush1.bf16.msra.mxu0 %v854
  %1016 = vmatprep.subr.bf16.mxu0 %v864
  %1017 = vmatpush1.bf16.msra.mxu0 %v863
  %1018 = vmatprep.subr.bf16.mxu0 %v873
  %1019 = vmatpush1.bf16.msra.mxu0 %v872
  %1020 = vmatprep.subr.bf16.mxu0 0
  %1021 = vmatpush1.bf16.msra.mxu0 0
  %1022 = vmatprep.subr.bf16.mxu0 0
  %1023 = vmatpush1.bf16.msra.mxu0 0
  %1024 = vmatprep.subr.bf16.mxu0 0
  %1025 = vmatpush1.bf16.msra.mxu0 0
  %1026 = vmatprep.subr.bf16.mxu0 0
  %1027 = vmatpush1.bf16.msra.mxu0 0
  %1028 = vmatprep.subr.bf16.mxu0 0
  %1029 = vmatpush1.bf16.msra.mxu0 0
  %1030 = vmatprep.subr.bf16.mxu0 0
  %1031 = vmatpush1.bf16.msra.mxu0 0
  %1032 = vmatprep.subr.bf16.mxu0 0
  %1033 = vmatpush1.bf16.msra.mxu0 0
  %1034 = vmatprep.subr.bf16.mxu0 0
  %1035 = vmatpush1.bf16.msra.mxu0 0
  %1036 = vmatprep.mubr.bf16.mxu0 0
  %1037 = vmatmul.mubr.bf16.gmra.mrb[0].mxu0 %v501
  %v1038 = vpop.f32.mrb[0].mxu0
  %v1039 = vadd.f32 0.0, %v1038
  %v1040 = vpop.f32.mrb[0].mxu0
  %v1041 = vadd.f32 0.0, %v1040
  %v1042 = vpop.f32.mrb[0].mxu0
  %v1043 = vadd.f32 0.0, %v1042
  %v1044 = vpop.f32.mrb[0].mxu0
  %v1045 = vadd.f32 0.0, %v1044
  %1046 = vmatprep.mubr.bf16.mxu0 0
  %1047 = vmatmul.mubr.bf16.gmra.mrb[0].mxu0 %v502
  %v1048 = vpop.f32.mrb[0].mxu0
  %v1049 = vadd.f32 0.0, %v1048
  %v1050 = vpop.f32.mrb[0].mxu0
  %v1051 = vadd.f32 0.0, %v1050
  %v1052 = vpop.f32.mrb[0].mxu0
  %v1053 = vadd.f32 0.0, %v1052
  %v1054 = vpop.f32.mrb[0].mxu0
  %v1055 = vadd.f32 0.0, %v1054
  %1056 = vdwg.mxu0
  %1057 = vmatprep.subr.bf16.mxu0 %v812
  %1058 = vmatpush1.bf16.msra.mxu0 %v811
  %1059 = vmatprep.subr.bf16.mxu0 %v821
  %1060 = vmatpush1.bf16.msra.mxu0 %v820
  %1061 = vmatprep.subr.bf16.mxu0 %v830
  %1062 = vmatpush1.bf16.msra.mxu0 %v829
  %1063 = vmatprep.subr.bf16.mxu0 %v839
  %1064 = vmatpush1.bf16.msra.mxu0 %v838
  %1065 = vmatprep.subr.bf16.mxu0 %v848
  %1066 = vmatpush1.bf16.msra.mxu0 %v847
  %1067 = vmatprep.subr.bf16.mxu0 %v857
  %1068 = vmatpush1.bf16.msra.mxu0 %v856
  %1069 = vmatprep.subr.bf16.mxu0 %v866
  %1070 = vmatpush1.bf16.msra.mxu0 %v865
  %1071 = vmatprep.subr.bf16.mxu0 %v875
  %1072 = vmatpush1.bf16.msra.mxu0 %v874
  %1073 = vmatprep.subr.bf16.mxu0 0
  %1074 = vmatpush1.bf16.msra.mxu0 0
  %1075 = vmatprep.subr.bf16.mxu0 0
  %1076 = vmatpush1.bf16.msra.mxu0 0
  %1077 = vmatprep.subr.bf16.mxu0 0
  %1078 = vmatpush1.bf16.msra.mxu0 0
  %1079 = vmatprep.subr.bf16.mxu0 0
  %1080 = vmatpush1.bf16.msra.mxu0 0
  %1081 = vmatprep.subr.bf16.mxu0 0
  %1082 = vmatpush1.bf16.msra.mxu0 0
  %1083 = vmatprep.subr.bf16.mxu0 0
  %1084 = vmatpush1.bf16.msra.mxu0 0
  %1085 = vmatprep.subr.bf16.mxu0 0
  %1086 = vmatpush1.bf16.msra.mxu0 0
  %1087 = vmatprep.subr.bf16.mxu0 0
  %1088 = vmatpush1.bf16.msra.mxu0 0
  %1089 = vmatprep.mubr.bf16.mxu0 0
  %1090 = vmatmul.mubr.bf16.gmra.mrb[0].mxu0 %v501
  %v1091 = vpop.f32.mrb[0].mxu0
  %v1092 = vadd.f32 0.0, %v1091
  %v1093 = vpop.f32.mrb[0].mxu0
  %v1094 = vadd.f32 0.0, %v1093
  %v1095 = vpop.f32.mrb[0].mxu0
  %v1096 = vadd.f32 0.0, %v1095
  %v1097 = vpop.f32.mrb[0].mxu0
  %v1098 = vadd.f32 0.0, %v1097
  %1099 = vmatprep.mubr.bf16.mxu0 0
  %1100 = vmatmul.mubr.bf16.gmra.mrb[0].mxu0 %v502
  %v1101 = vpop.f32.mrb[0].mxu0
  %v1102 = vadd.f32 0.0, %v1101
  %v1103 = vpop.f32.mrb[0].mxu0
  %v1104 = vadd.f32 0.0, %v1103
  %v1105 = vpop.f32.mrb[0].mxu0
  %v1106 = vadd.f32 0.0, %v1105
  %v1107 = vpop.f32.mrb[0].mxu0
  %v1108 = vadd.f32 0.0, %v1107
  %1109 = vdwg.mxu0
  %1110 = vmatprep.subr.bf16.mxu0 %v814
  %1111 = vmatpush1.bf16.msra.mxu0 %v813
  %1112 = vmatprep.subr.bf16.mxu0 %v823
  %1113 = vmatpush1.bf16.msra.mxu0 %v822
  %1114 = vmatprep.subr.bf16.mxu0 %v832
  %1115 = vmatpush1.bf16.msra.mxu0 %v831
  %1116 = vmatprep.subr.bf16.mxu0 %v841
  %1117 = vmatpush1.bf16.msra.mxu0 %v840
  %1118 = vmatprep.subr.bf16.mxu0 %v850
  %1119 = vmatpush1.bf16.msra.mxu0 %v849
  %1120 = vmatprep.subr.bf16.mxu0 %v859
  %1121 = vmatpush1.bf16.msra.mxu0 %v858
  %1122 = vmatprep.subr.bf16.mxu0 %v868
  %1123 = vmatpush1.bf16.msra.mxu0 %v867
  %1124 = vmatprep.subr.bf16.mxu0 %v877
  %1125 = vmatpush1.bf16.msra.mxu0 %v876
  %1126 = vmatprep.subr.bf16.mxu0 0
  %1127 = vmatpush1.bf16.msra.mxu0 0
  %1128 = vmatprep.subr.bf16.mxu0 0
  %1129 = vmatpush1.bf16.msra.mxu0 0
  %1130 = vmatprep.subr.bf16.mxu0 0
  %1131 = vmatpush1.bf16.msra.mxu0 0
  %1132 = vmatprep.subr.bf16.mxu0 0
  %1133 = vmatpush1.bf16.msra.mxu0 0
  %1134 = vmatprep.subr.bf16.mxu0 0
  %1135 = vmatpush1.bf16.msra.mxu0 0
  %1136 = vmatprep.subr.bf16.mxu0 0
  %1137 = vmatpush1.bf16.msra.mxu0 0
  %1138 = vmatprep.subr.bf16.mxu0 0
  %1139 = vmatpush1.bf16.msra.mxu0 0
  %1140 = vmatprep.subr.bf16.mxu0 0
  %1141 = vmatpush1.bf16.msra.mxu0 0
  %1142 = vmatprep.mubr.bf16.mxu0 0
  %1143 = vmatmul.mubr.bf16.gmra.mrb[0].mxu0 %v501
  %v1144 = vpop.f32.mrb[0].mxu0
  %v1145 = vadd.f32 0.0, %v1144
  %v1146 = vpop.f32.mrb[0].mxu0
  %v1147 = vadd.f32 0.0, %v1146
  %v1148 = vpop.f32.mrb[0].mxu0
  %v1149 = vadd.f32 0.0, %v1148
  %v1150 = vpop.f32.mrb[0].mxu0
  %v1151 = vadd.f32 0.0, %v1150
  %1152 = vmatprep.mubr.bf16.mxu0 0
  %1153 = vmatmul.mubr.bf16.gmra.mrb[0].mxu0 %v502
  %v1154 = vpop.f32.mrb[0].mxu0
  %v1155 = vadd.f32 0.0, %v1154
  %v1156 = vpop.f32.mrb[0].mxu0
  %v1157 = vadd.f32 0.0, %v1156
  %v1158 = vpop.f32.mrb[0].mxu0
  %v1159 = vadd.f32 0.0, %v1158
  %v1160 = vpop.f32.mrb[0].mxu0
  %v1161 = vadd.f32 0.0, %v1160
  %1162 = vdwg.mxu0
  %1163 = vmatprep.subr.bf16.mxu0 0
  %1164 = vmatpush1.bf16.msra.mxu0 %v815
  %1165 = vmatprep.subr.bf16.mxu0 0
  %1166 = vmatpush1.bf16.msra.mxu0 %v824
  %1167 = vmatprep.subr.bf16.mxu0 0
  %1168 = vmatpush1.bf16.msra.mxu0 %v833
  %1169 = vmatprep.subr.bf16.mxu0 0
  %1170 = vmatpush1.bf16.msra.mxu0 %v842
  %1171 = vmatprep.subr.bf16.mxu0 0
  %1172 = vmatpush1.bf16.msra.mxu0 %v851
  %1173 = vmatprep.subr.bf16.mxu0 0
  %1174 = vmatpush1.bf16.msra.mxu0 %v860
  %1175 = vmatprep.subr.bf16.mxu0 0
  %1176 = vmatpush1.bf16.msra.mxu0 %v869
  %1177 = vmatprep.subr.bf16.mxu0 0
  %1178 = vmatpush1.bf16.msra.mxu0 %v878
  %1179 = vmatprep.subr.bf16.mxu0 0
  %1180 = vmatpush1.bf16.msra.mxu0 0
  %1181 = vmatprep.subr.bf16.mxu0 0
  %1182 = vmatpush1.bf16.msra.mxu0 0
  %1183 = vmatprep.subr.bf16.mxu0 0
  %1184 = vmatpush1.bf16.msra.mxu0 0
  %1185 = vmatprep.subr.bf16.mxu0 0
  %1186 = vmatpush1.bf16.msra.mxu0 0
  %1187 = vmatprep.subr.bf16.mxu0 0
  %1188 = vmatpush1.bf16.msra.mxu0 0
  %1189 = vmatprep.subr.bf16.mxu0 0
  %1190 = vmatpush1.bf16.msra.mxu0 0
  %1191 = vmatprep.subr.bf16.mxu0 0
  %1192 = vmatpush1.bf16.msra.mxu0 0
  %1193 = vmatprep.subr.bf16.mxu0 0
  %1194 = vmatpush1.bf16.msra.mxu0 0
  %1195 = vmatprep.mubr.bf16.mxu0 0
  %1196 = vmatmul.mubr.bf16.gmra.mrb[0].mxu0 %v501
  %v1197 = vpop.f32.mrb[0].mxu0
  %v1198 = vadd.f32 0.0, %v1197
  %v1199 = vpop.f32.mrb[0].mxu0
  %v1200 = vpop.f32.mrb[0].mxu0
  %v1201 = vadd.f32 0.0, %v1200
  %v1202 = vpop.f32.mrb[0].mxu0
  %1203 = vmatprep.mubr.bf16.mxu0 0
  %1204 = vmatmul.mubr.bf16.gmra.mrb[0].mxu0 %v502
  %v1205 = vpop.f32.mrb[0].mxu0
  %v1206 = vadd.f32 0.0, %v1205
  %v1207 = vpop.f32.mrb[0].mxu0
  %v1208 = vpop.f32.mrb[0].mxu0
  %v1209 = vadd.f32 0.0, %v1208
  %v1210 = vpop.f32.mrb[0].mxu0
  %1211 = vdwg.mxu0
  %v1212 = vpack.c.bf16 %v990, %v986
  %v1213 = vpack.c.bf16 %v992, %v988
  %v1214 = vpack.c.bf16 %v1043, %v1039
  %v1215 = vpack.c.bf16 %v1045, %v1041
  %v1216 = vpack.c.bf16 %v1096, %v1092
  %v1217 = vpack.c.bf16 %v1098, %v1094
  %v1218 = vpack.c.bf16 %v1149, %v1145
  %v1219 = vpack.c.bf16 %v1151, %v1147
  %v1220 = vpack.c.bf16 %v1201, %v1198
  %v1221 = vpack.c.bf16 %v1000, %v996
  %v1222 = vpack.c.bf16 %v1002, %v998
  %v1223 = vpack.c.bf16 %v1053, %v1049
  %v1224 = vpack.c.bf16 %v1055, %v1051
  %v1225 = vpack.c.bf16 %v1106, %v1102
  %v1226 = vpack.c.bf16 %v1108, %v1104
  %v1227 = vpack.c.bf16 %v1159, %v1155
  %v1228 = vpack.c.bf16 %v1161, %v1157
  %v1229 = vpack.c.bf16 %v1209, %v1206
  %v1230 = vld [vmem:[%s5] sm:$0xf]
  %v1231 = vld [vmem:[%s5 + $0x4] sm:$0xf]
  %v1232 = vld [vmem:[%s5 + $0x8] sm:$0xf]
  %v1233 = vld [vmem:[%s5 + $0xc] sm:$0xf]
  %s1234 = scalar_lea.vmem %s5, 16
  %v1235 = vld [vmem:[%s1234] sm:$0xf]
  %v1236 = vld [vmem:[%s1234 + $0x4] sm:$0xf]
  %v1237 = vld [vmem:[%s1234 + $0x8] sm:$0xf]
  %v1238 = vld [vmem:[%s1234 + $0xc] sm:$0xf]
  %v1243 = vunpack.c.l.b16 %v1235
  %v1244 = vunpack.c.l.b16 %v1236
  %v1245 = vunpack.c.l.b16 %v1237
  %v1246 = vunpack.c.l.b16 %v1238
  %v1247 = vpack.c.b16 %v1244, %v1243
  %v1248 = vpack.c.b16 %v1246, %v1245
  %vm1249 = vcmask 261120
  %v1251 = vsel %vm1249, %v1247, 0
  %v1254 = vsel %vm1249, %v1248, 0
  %1256 = vmatprep.subr.bf16.mxu0 0
  %1257 = vmatpush1.bf16.msra.mxu0 %v1213
  %1258 = vmatprep.subr.bf16.mxu0 0
  %1259 = vmatpush1.bf16.msra.mxu0 %v1222
  %1260 = vmatprep.subr.bf16.mxu0 0
  %1261 = vmatpush1.bf16.msra.mxu0 0
  %1262 = vmatprep.subr.bf16.mxu0 0
  %1263 = vmatpush1.bf16.msra.mxu0 0
  %1264 = vmatprep.subr.bf16.mxu0 0
  %1265 = vmatpush1.bf16.msra.mxu0 0
  %1266 = vmatprep.subr.bf16.mxu0 0
  %1267 = vmatpush1.bf16.msra.mxu0 0
  %1268 = vmatprep.subr.bf16.mxu0 0
  %1269 = vmatpush1.bf16.msra.mxu0 0
  %1270 = vmatprep.subr.bf16.mxu0 0
  %1271 = vmatpush1.bf16.msra.mxu0 0
  %1272 = vmatprep.subr.bf16.mxu0 0
  %1273 = vmatpush1.bf16.msra.mxu0 0
  %1274 = vmatprep.subr.bf16.mxu0 0
  %1275 = vmatpush1.bf16.msra.mxu0 0
  %1276 = vmatprep.subr.bf16.mxu0 0
  %1277 = vmatpush1.bf16.msra.mxu0 0
  %1278 = vmatprep.subr.bf16.mxu0 0
  %1279 = vmatpush1.bf16.msra.mxu0 0
  %1280 = vmatprep.subr.bf16.mxu0 0
  %1281 = vmatpush1.bf16.msra.mxu0 0
  %1282 = vmatprep.subr.bf16.mxu0 0
  %1283 = vmatpush1.bf16.msra.mxu0 0
  %1284 = vmatprep.subr.bf16.mxu0 0
  %1285 = vmatpush1.bf16.msra.mxu0 0
  %1286 = vmatprep.subr.bf16.mxu0 0
  %1287 = vmatpush1.bf16.msra.mxu0 0
  %1288 = vmatprep.mubr.bf16.mxu0 0
  %1289 = vmatmul.mubr.bf16.gmra.mrb[0].mxu0 %v1251
  %v1290 = vpop.f32.mrb[0].mxu0
  %v1291 = vadd.f32 0.0, %v1290
  %v1292 = vpop.f32.mrb[0].mxu0
  %v1293 = vpop.f32.mrb[0].mxu0
  %v1294 = vadd.f32 0.0, %v1293
  %v1295 = vpop.f32.mrb[0].mxu0
  %1296 = vmatprep.mubr.bf16.mxu0 0
  %1297 = vmatmul.mubr.bf16.gmra.mrb[0].mxu0 %v1254
  %v1298 = vpop.f32.mrb[0].mxu0
  %v1299 = vadd.f32 0.0, %v1298
  %v1300 = vpop.f32.mrb[0].mxu0
  %v1301 = vpop.f32.mrb[0].mxu0
  %v1302 = vadd.f32 0.0, %v1301
  %v1303 = vpop.f32.mrb[0].mxu0
  %1304 = vdwg.mxu0
  %v1309 = vunpack.c.l.b16 %v1230
  %v1310 = vunpack.c.l.b16 %v1231
  %v1311 = vunpack.c.l.b16 %v1232
  %v1312 = vunpack.c.l.b16 %v1233
  %v1313 = vpack.c.b16 %v1310, %v1309
  %v1314 = vpack.c.b16 %v1312, %v1311
  %v1316 = vsel %vm1249, %v1313, 0
  %v1319 = vsel %vm1249, %v1314, 0
  %1321 = vmatprep.subr.bf16.mxu0 0
  %1322 = vmatpush1.bf16.msra.mxu0 %v1212
  %1323 = vmatprep.subr.bf16.mxu0 0
  %1324 = vmatpush1.bf16.msra.mxu0 %v1221
  %1325 = vmatprep.subr.bf16.mxu0 0
  %1326 = vmatpush1.bf16.msra.mxu0 0
  %1327 = vmatprep.subr.bf16.mxu0 0
  %1328 = vmatpush1.bf16.msra.mxu0 0
  %1329 = vmatprep.subr.bf16.mxu0 0
  %1330 = vmatpush1.bf16.msra.mxu0 0
  %1331 = vmatprep.subr.bf16.mxu0 0
  %1332 = vmatpush1.bf16.msra.mxu0 0
  %1333 = vmatprep.subr.bf16.mxu0 0
  %1334 = vmatpush1.bf16.msra.mxu0 0
  %1335 = vmatprep.subr.bf16.mxu0 0
  %1336 = vmatpush1.bf16.msra.mxu0 0
  %1337 = vmatprep.subr.bf16.mxu0 0
  %1338 = vmatpush1.bf16.msra.mxu0 0
  %1339 = vmatprep.subr.bf16.mxu0 0
  %1340 = vmatpush1.bf16.msra.mxu0 0
  %1341 = vmatprep.subr.bf16.mxu0 0
  %1342 = vmatpush1.bf16.msra.mxu0 0
  %1343 = vmatprep.subr.bf16.mxu0 0
  %1344 = vmatpush1.bf16.msra.mxu0 0
  %1345 = vmatprep.subr.bf16.mxu0 0
  %1346 = vmatpush1.bf16.msra.mxu0 0
  %1347 = vmatprep.subr.bf16.mxu0 0
  %1348 = vmatpush1.bf16.msra.mxu0 0
  %1349 = vmatprep.subr.bf16.mxu0 0
  %1350 = vmatpush1.bf16.msra.mxu0 0
  %1351 = vmatprep.subr.bf16.mxu0 0
  %1352 = vmatpush1.bf16.msra.mxu0 0
  %1353 = vmatprep.mubr.bf16.mxu0 0
  %1354 = vmatmul.mubr.bf16.gmra.mrb[0].mxu0 %v1316
  %v1355 = vpop.f32.mrb[0].mxu0
  %v1356 = vadd.f32 %v1291, %v1355
  %v1357 = vpop.f32.mrb[0].mxu0
  %v1358 = vpop.f32.mrb[0].mxu0
  %v1359 = vadd.f32 %v1294, %v1358
  %v1360 = vpop.f32.mrb[0].mxu0
  %1361 = vmatprep.mubr.bf16.mxu0 0
  %1362 = vmatmul.mubr.bf16.gmra.mrb[0].mxu0 %v1319
  %v1363 = vpop.f32.mrb[0].mxu0
  %v1364 = vadd.f32 %v1299, %v1363
  %v1365 = vpop.f32.mrb[0].mxu0
  %v1366 = vpop.f32.mrb[0].mxu0
  %v1367 = vadd.f32 %v1302, %v1366
  %v1368 = vpop.f32.mrb[0].mxu0
  %1369 = vdwg.mxu0
  %s1370 = scalar_lea.vmem %s5, 32
  %v1371 = vld [vmem:[%s1370] sm:$0xf]
  %v1372 = vld [vmem:[%s1370 + $0x4] sm:$0xf]
  %v1373 = vld [vmem:[%s1370 + $0x8] sm:$0xf]
  %v1374 = vld [vmem:[%s1370 + $0xc] sm:$0xf]
  %v1379 = vunpack.c.l.b16 %v1371
  %v1380 = vunpack.c.l.b16 %v1372
  %v1381 = vunpack.c.l.b16 %v1373
  %v1382 = vunpack.c.l.b16 %v1374
  %v1383 = vpack.c.b16 %v1380, %v1379
  %v1384 = vpack.c.b16 %v1382, %v1381
  %v1386 = vsel %vm1249, %v1383, 0
  %v1389 = vsel %vm1249, %v1384, 0
  %1391 = vmatprep.subr.bf16.mxu0 0
  %1392 = vmatpush1.bf16.msra.mxu0 %v1214
  %1393 = vmatprep.subr.bf16.mxu0 0
  %1394 = vmatpush1.bf16.msra.mxu0 %v1223
  %1395 = vmatprep.subr.bf16.mxu0 0
  %1396 = vmatpush1.bf16.msra.mxu0 0
  %1397 = vmatprep.subr.bf16.mxu0 0
  %1398 = vmatpush1.bf16.msra.mxu0 0
  %1399 = vmatprep.subr.bf16.mxu0 0
  %1400 = vmatpush1.bf16.msra.mxu0 0
  %1401 = vmatprep.subr.bf16.mxu0 0
  %1402 = vmatpush1.bf16.msra.mxu0 0
  %1403 = vmatprep.subr.bf16.mxu0 0
  %1404 = vmatpush1.bf16.msra.mxu0 0
  %1405 = vmatprep.subr.bf16.mxu0 0
  %1406 = vmatpush1.bf16.msra.mxu0 0
  %1407 = vmatprep.subr.bf16.mxu0 0
  %1408 = vmatpush1.bf16.msra.mxu0 0
  %1409 = vmatprep.subr.bf16.mxu0 0
  %1410 = vmatpush1.bf16.msra.mxu0 0
  %1411 = vmatprep.subr.bf16.mxu0 0
  %1412 = vmatpush1.bf16.msra.mxu0 0
  %1413 = vmatprep.subr.bf16.mxu0 0
  %1414 = vmatpush1.bf16.msra.mxu0 0
  %1415 = vmatprep.subr.bf16.mxu0 0
  %1416 = vmatpush1.bf16.msra.mxu0 0
  %1417 = vmatprep.subr.bf16.mxu0 0
  %1418 = vmatpush1.bf16.msra.mxu0 0
  %1419 = vmatprep.subr.bf16.mxu0 0
  %1420 = vmatpush1.bf16.msra.mxu0 0
  %1421 = vmatprep.subr.bf16.mxu0 0
  %1422 = vmatpush1.bf16.msra.mxu0 0
  %1423 = vmatprep.mubr.bf16.mxu0 0
  %1424 = vmatmul.mubr.bf16.gmra.mrb[0].mxu0 %v1386
  %v1425 = vpop.f32.mrb[0].mxu0
  %v1426 = vadd.f32 0.0, %v1425
  %v1427 = vpop.f32.mrb[0].mxu0
  %v1428 = vpop.f32.mrb[0].mxu0
  %v1429 = vadd.f32 0.0, %v1428
  %v1430 = vpop.f32.mrb[0].mxu0
  %1431 = vmatprep.mubr.bf16.mxu0 0
  %1432 = vmatmul.mubr.bf16.gmra.mrb[0].mxu0 %v1389
  %v1433 = vpop.f32.mrb[0].mxu0
  %v1434 = vadd.f32 0.0, %v1433
  %v1435 = vpop.f32.mrb[0].mxu0
  %v1436 = vpop.f32.mrb[0].mxu0
  %v1437 = vadd.f32 0.0, %v1436
  %v1438 = vpop.f32.mrb[0].mxu0
  %1439 = vdwg.mxu0
  %v1440 = vadd.f32 %v1356, %v1426
  %v1441 = vadd.f32 %v1359, %v1429
  %v1442 = vadd.f32 %v1364, %v1434
  %v1443 = vadd.f32 %v1367, %v1437
  %s1444 = scalar_lea.vmem %s5, 48
  %v1445 = vld [vmem:[%s1444] sm:$0xf]
  %v1446 = vld [vmem:[%s1444 + $0x4] sm:$0xf]
  %v1447 = vld [vmem:[%s1444 + $0x8] sm:$0xf]
  %v1448 = vld [vmem:[%s1444 + $0xc] sm:$0xf]
  %v1453 = vunpack.c.l.b16 %v1445
  %v1454 = vunpack.c.l.b16 %v1446
  %v1455 = vunpack.c.l.b16 %v1447
  %v1456 = vunpack.c.l.b16 %v1448
  %v1457 = vpack.c.b16 %v1454, %v1453
  %v1458 = vpack.c.b16 %v1456, %v1455
  %v1460 = vsel %vm1249, %v1457, 0
  %v1463 = vsel %vm1249, %v1458, 0
  %1465 = vmatprep.subr.bf16.mxu0 0
  %1466 = vmatpush1.bf16.msra.mxu0 %v1215
  %1467 = vmatprep.subr.bf16.mxu0 0
  %1468 = vmatpush1.bf16.msra.mxu0 %v1224
  %1469 = vmatprep.subr.bf16.mxu0 0
  %1470 = vmatpush1.bf16.msra.mxu0 0
  %1471 = vmatprep.subr.bf16.mxu0 0
  %1472 = vmatpush1.bf16.msra.mxu0 0
  %1473 = vmatprep.subr.bf16.mxu0 0
  %1474 = vmatpush1.bf16.msra.mxu0 0
  %1475 = vmatprep.subr.bf16.mxu0 0
  %1476 = vmatpush1.bf16.msra.mxu0 0
  %1477 = vmatprep.subr.bf16.mxu0 0
  %1478 = vmatpush1.bf16.msra.mxu0 0
  %1479 = vmatprep.subr.bf16.mxu0 0
  %1480 = vmatpush1.bf16.msra.mxu0 0
  %1481 = vmatprep.subr.bf16.mxu0 0
  %1482 = vmatpush1.bf16.msra.mxu0 0
  %1483 = vmatprep.subr.bf16.mxu0 0
  %1484 = vmatpush1.bf16.msra.mxu0 0
  %1485 = vmatprep.subr.bf16.mxu0 0
  %1486 = vmatpush1.bf16.msra.mxu0 0
  %1487 = vmatprep.subr.bf16.mxu0 0
  %1488 = vmatpush1.bf16.msra.mxu0 0
  %1489 = vmatprep.subr.bf16.mxu0 0
  %1490 = vmatpush1.bf16.msra.mxu0 0
  %1491 = vmatprep.subr.bf16.mxu0 0
  %1492 = vmatpush1.bf16.msra.mxu0 0
  %1493 = vmatprep.subr.bf16.mxu0 0
  %1494 = vmatpush1.bf16.msra.mxu0 0
  %1495 = vmatprep.subr.bf16.mxu0 0
  %1496 = vmatpush1.bf16.msra.mxu0 0
  %1497 = vmatprep.mubr.bf16.mxu0 0
  %1498 = vmatmul.mubr.bf16.gmra.mrb[0].mxu0 %v1460
  %v1499 = vpop.f32.mrb[0].mxu0
  %v1500 = vadd.f32 0.0, %v1499
  %v1501 = vpop.f32.mrb[0].mxu0
  %v1502 = vpop.f32.mrb[0].mxu0
  %v1503 = vadd.f32 0.0, %v1502
  %v1504 = vpop.f32.mrb[0].mxu0
  %1505 = vmatprep.mubr.bf16.mxu0 0
  %1506 = vmatmul.mubr.bf16.gmra.mrb[0].mxu0 %v1463
  %v1507 = vpop.f32.mrb[0].mxu0
  %v1508 = vadd.f32 0.0, %v1507
  %v1509 = vpop.f32.mrb[0].mxu0
  %v1510 = vpop.f32.mrb[0].mxu0
  %v1511 = vadd.f32 0.0, %v1510
  %v1512 = vpop.f32.mrb[0].mxu0
  %1513 = vdwg.mxu0
  %v1514 = vadd.f32 %v1440, %v1500
  %v1515 = vadd.f32 %v1441, %v1503
  %v1516 = vadd.f32 %v1442, %v1508
  %v1517 = vadd.f32 %v1443, %v1511
  %s1518 = scalar_lea.vmem %s5, 64
  %v1519 = vld [vmem:[%s1518] sm:$0xf]
  %v1520 = vld [vmem:[%s1518 + $0x4] sm:$0xf]
  %v1521 = vld [vmem:[%s1518 + $0x8] sm:$0xf]
  %v1522 = vld [vmem:[%s1518 + $0xc] sm:$0xf]
  %v1527 = vunpack.c.l.b16 %v1519
  %v1528 = vunpack.c.l.b16 %v1520
  %v1529 = vunpack.c.l.b16 %v1521
  %v1530 = vunpack.c.l.b16 %v1522
  %v1531 = vpack.c.b16 %v1528, %v1527
  %v1532 = vpack.c.b16 %v1530, %v1529
  %v1534 = vsel %vm1249, %v1531, 0
  %v1537 = vsel %vm1249, %v1532, 0
  %1539 = vmatprep.subr.bf16.mxu0 0
  %1540 = vmatpush1.bf16.msra.mxu0 %v1216
  %1541 = vmatprep.subr.bf16.mxu0 0
  %1542 = vmatpush1.bf16.msra.mxu0 %v1225
  %1543 = vmatprep.subr.bf16.mxu0 0
  %1544 = vmatpush1.bf16.msra.mxu0 0
  %1545 = vmatprep.subr.bf16.mxu0 0
  %1546 = vmatpush1.bf16.msra.mxu0 0
  %1547 = vmatprep.subr.bf16.mxu0 0
  %1548 = vmatpush1.bf16.msra.mxu0 0
  %1549 = vmatprep.subr.bf16.mxu0 0
  %1550 = vmatpush1.bf16.msra.mxu0 0
  %1551 = vmatprep.subr.bf16.mxu0 0
  %1552 = vmatpush1.bf16.msra.mxu0 0
  %1553 = vmatprep.subr.bf16.mxu0 0
  %1554 = vmatpush1.bf16.msra.mxu0 0
  %1555 = vmatprep.subr.bf16.mxu0 0
  %1556 = vmatpush1.bf16.msra.mxu0 0
  %1557 = vmatprep.subr.bf16.mxu0 0
  %1558 = vmatpush1.bf16.msra.mxu0 0
  %1559 = vmatprep.subr.bf16.mxu0 0
  %1560 = vmatpush1.bf16.msra.mxu0 0
  %1561 = vmatprep.subr.bf16.mxu0 0
  %1562 = vmatpush1.bf16.msra.mxu0 0
  %1563 = vmatprep.subr.bf16.mxu0 0
  %1564 = vmatpush1.bf16.msra.mxu0 0
  %1565 = vmatprep.subr.bf16.mxu0 0
  %1566 = vmatpush1.bf16.msra.mxu0 0
  %1567 = vmatprep.subr.bf16.mxu0 0
  %1568 = vmatpush1.bf16.msra.mxu0 0
  %1569 = vmatprep.subr.bf16.mxu0 0
  %1570 = vmatpush1.bf16.msra.mxu0 0
  %1571 = vmatprep.mubr.bf16.mxu0 0
  %1572 = vmatmul.mubr.bf16.gmra.mrb[0].mxu0 %v1534
  %v1573 = vpop.f32.mrb[0].mxu0
  %v1574 = vadd.f32 0.0, %v1573
  %v1575 = vpop.f32.mrb[0].mxu0
  %v1576 = vpop.f32.mrb[0].mxu0
  %v1577 = vadd.f32 0.0, %v1576
  %v1578 = vpop.f32.mrb[0].mxu0
  %1579 = vmatprep.mubr.bf16.mxu0 0
  %1580 = vmatmul.mubr.bf16.gmra.mrb[0].mxu0 %v1537
  %v1581 = vpop.f32.mrb[0].mxu0
  %v1582 = vadd.f32 0.0, %v1581
  %v1583 = vpop.f32.mrb[0].mxu0
  %v1584 = vpop.f32.mrb[0].mxu0
  %v1585 = vadd.f32 0.0, %v1584
  %v1586 = vpop.f32.mrb[0].mxu0
  %1587 = vdwg.mxu0
  %v1588 = vadd.f32 %v1514, %v1574
  %v1589 = vadd.f32 %v1515, %v1577
  %v1590 = vadd.f32 %v1516, %v1582
  %v1591 = vadd.f32 %v1517, %v1585
  %s1592 = scalar_lea.vmem %s5, 80
  %v1593 = vld [vmem:[%s1592] sm:$0xf]
  %v1594 = vld [vmem:[%s1592 + $0x4] sm:$0xf]
  %v1595 = vld [vmem:[%s1592 + $0x8] sm:$0xf]
  %v1596 = vld [vmem:[%s1592 + $0xc] sm:$0xf]
  %v1601 = vunpack.c.l.b16 %v1593
  %v1602 = vunpack.c.l.b16 %v1594
  %v1603 = vunpack.c.l.b16 %v1595
  %v1604 = vunpack.c.l.b16 %v1596
  %v1605 = vpack.c.b16 %v1602, %v1601
  %v1606 = vpack.c.b16 %v1604, %v1603
  %v1608 = vsel %vm1249, %v1605, 0
  %v1611 = vsel %vm1249, %v1606, 0
  %1613 = vmatprep.subr.bf16.mxu0 0
  %1614 = vmatpush1.bf16.msra.mxu0 %v1217
  %1615 = vmatprep.subr.bf16.mxu0 0
  %1616 = vmatpush1.bf16.msra.mxu0 %v1226
  %1617 = vmatprep.subr.bf16.mxu0 0
  %1618 = vmatpush1.bf16.msra.mxu0 0
  %1619 = vmatprep.subr.bf16.mxu0 0
  %1620 = vmatpush1.bf16.msra.mxu0 0
  %1621 = vmatprep.subr.bf16.mxu0 0
  %1622 = vmatpush1.bf16.msra.mxu0 0
  %1623 = vmatprep.subr.bf16.mxu0 0
  %1624 = vmatpush1.bf16.msra.mxu0 0
  %1625 = vmatprep.subr.bf16.mxu0 0
  %1626 = vmatpush1.bf16.msra.mxu0 0
  %1627 = vmatprep.subr.bf16.mxu0 0
  %1628 = vmatpush1.bf16.msra.mxu0 0
  %1629 = vmatprep.subr.bf16.mxu0 0
  %1630 = vmatpush1.bf16.msra.mxu0 0
  %1631 = vmatprep.subr.bf16.mxu0 0
  %1632 = vmatpush1.bf16.msra.mxu0 0
  %1633 = vmatprep.subr.bf16.mxu0 0
  %1634 = vmatpush1.bf16.msra.mxu0 0
  %1635 = vmatprep.subr.bf16.mxu0 0
  %1636 = vmatpush1.bf16.msra.mxu0 0
  %1637 = vmatprep.subr.bf16.mxu0 0
  %1638 = vmatpush1.bf16.msra.mxu0 0
  %1639 = vmatprep.subr.bf16.mxu0 0
  %1640 = vmatpush1.bf16.msra.mxu0 0
  %1641 = vmatprep.subr.bf16.mxu0 0
  %1642 = vmatpush1.bf16.msra.mxu0 0
  %1643 = vmatprep.subr.bf16.mxu0 0
  %1644 = vmatpush1.bf16.msra.mxu0 0
  %1645 = vmatprep.mubr.bf16.mxu0 0
  %1646 = vmatmul.mubr.bf16.gmra.mrb[0].mxu0 %v1608
  %v1647 = vpop.f32.mrb[0].mxu0
  %v1648 = vadd.f32 0.0, %v1647
  %v1649 = vpop.f32.mrb[0].mxu0
  %v1650 = vpop.f32.mrb[0].mxu0
  %v1651 = vadd.f32 0.0, %v1650
  %v1652 = vpop.f32.mrb[0].mxu0
  %1653 = vmatprep.mubr.bf16.mxu0 0
  %1654 = vmatmul.mubr.bf16.gmra.mrb[0].mxu0 %v1611
  %v1655 = vpop.f32.mrb[0].mxu0
  %v1656 = vadd.f32 0.0, %v1655
  %v1657 = vpop.f32.mrb[0].mxu0
  %v1658 = vpop.f32.mrb[0].mxu0
  %v1659 = vadd.f32 0.0, %v1658
  %v1660 = vpop.f32.mrb[0].mxu0
  %1661 = vdwg.mxu0
  %v1662 = vadd.f32 %v1588, %v1648
  %v1663 = vadd.f32 %v1589, %v1651
  %v1664 = vadd.f32 %v1590, %v1656
  %v1665 = vadd.f32 %v1591, %v1659
  %s1666 = scalar_lea.vmem %s5, 96
  %v1667 = vld [vmem:[%s1666] sm:$0xf]
  %v1668 = vld [vmem:[%s1666 + $0x4] sm:$0xf]
  %v1669 = vld [vmem:[%s1666 + $0x8] sm:$0xf]
  %v1670 = vld [vmem:[%s1666 + $0xc] sm:$0xf]
  %v1675 = vunpack.c.l.b16 %v1667
  %v1676 = vunpack.c.l.b16 %v1668
  %v1677 = vunpack.c.l.b16 %v1669
  %v1678 = vunpack.c.l.b16 %v1670
  %v1679 = vpack.c.b16 %v1676, %v1675
  %v1680 = vpack.c.b16 %v1678, %v1677
  %v1682 = vsel %vm1249, %v1679, 0
  %v1685 = vsel %vm1249, %v1680, 0
  %1687 = vmatprep.subr.bf16.mxu0 0
  %1688 = vmatpush1.bf16.msra.mxu0 %v1218
  %1689 = vmatprep.subr.bf16.mxu0 0
  %1690 = vmatpush1.bf16.msra.mxu0 %v1227
  %1691 = vmatprep.subr.bf16.mxu0 0
  %1692 = vmatpush1.bf16.msra.mxu0 0
  %1693 = vmatprep.subr.bf16.mxu0 0
  %1694 = vmatpush1.bf16.msra.mxu0 0
  %1695 = vmatprep.subr.bf16.mxu0 0
  %1696 = vmatpush1.bf16.msra.mxu0 0
  %1697 = vmatprep.subr.bf16.mxu0 0
  %1698 = vmatpush1.bf16.msra.mxu0 0
  %1699 = vmatprep.subr.bf16.mxu0 0
  %1700 = vmatpush1.bf16.msra.mxu0 0
  %1701 = vmatprep.subr.bf16.mxu0 0
  %1702 = vmatpush1.bf16.msra.mxu0 0
  %1703 = vmatprep.subr.bf16.mxu0 0
  %1704 = vmatpush1.bf16.msra.mxu0 0
  %1705 = vmatprep.subr.bf16.mxu0 0
  %1706 = vmatpush1.bf16.msra.mxu0 0
  %1707 = vmatprep.subr.bf16.mxu0 0
  %1708 = vmatpush1.bf16.msra.mxu0 0
  %1709 = vmatprep.subr.bf16.mxu0 0
  %1710 = vmatpush1.bf16.msra.mxu0 0
  %1711 = vmatprep.subr.bf16.mxu0 0
  %1712 = vmatpush1.bf16.msra.mxu0 0
  %1713 = vmatprep.subr.bf16.mxu0 0
  %1714 = vmatpush1.bf16.msra.mxu0 0
  %1715 = vmatprep.subr.bf16.mxu0 0
  %1716 = vmatpush1.bf16.msra.mxu0 0
  %1717 = vmatprep.subr.bf16.mxu0 0
  %1718 = vmatpush1.bf16.msra.mxu0 0
  %1719 = vmatprep.mubr.bf16.mxu0 0
  %1720 = vmatmul.mubr.bf16.gmra.mrb[0].mxu0 %v1682
  %v1721 = vpop.f32.mrb[0].mxu0
  %v1722 = vadd.f32 0.0, %v1721
  %v1723 = vpop.f32.mrb[0].mxu0
  %v1724 = vpop.f32.mrb[0].mxu0
  %v1725 = vadd.f32 0.0, %v1724
  %v1726 = vpop.f32.mrb[0].mxu0
  %1727 = vmatprep.mubr.bf16.mxu0 0
  %1728 = vmatmul.mubr.bf16.gmra.mrb[0].mxu0 %v1685
  %v1729 = vpop.f32.mrb[0].mxu0
  %v1730 = vadd.f32 0.0, %v1729
  %v1731 = vpop.f32.mrb[0].mxu0
  %v1732 = vpop.f32.mrb[0].mxu0
  %v1733 = vadd.f32 0.0, %v1732
  %v1734 = vpop.f32.mrb[0].mxu0
  %1735 = vdwg.mxu0
  %v1736 = vadd.f32 %v1662, %v1722
  %v1737 = vadd.f32 %v1663, %v1725
  %v1738 = vadd.f32 %v1664, %v1730
  %v1739 = vadd.f32 %v1665, %v1733
  %s1740 = scalar_lea.vmem %s5, 112
  %v1741 = vld [vmem:[%s1740] sm:$0xf]
  %v1742 = vld [vmem:[%s1740 + $0x4] sm:$0xf]
  %v1743 = vld [vmem:[%s1740 + $0x8] sm:$0xf]
  %v1744 = vld [vmem:[%s1740 + $0xc] sm:$0xf]
  %v1749 = vunpack.c.l.b16 %v1741
  %v1750 = vunpack.c.l.b16 %v1742
  %v1751 = vunpack.c.l.b16 %v1743
  %v1752 = vunpack.c.l.b16 %v1744
  %v1753 = vpack.c.b16 %v1750, %v1749
  %v1754 = vpack.c.b16 %v1752, %v1751
  %v1756 = vsel %vm1249, %v1753, 0
  %v1759 = vsel %vm1249, %v1754, 0
  %1761 = vmatprep.subr.bf16.mxu0 0
  %1762 = vmatpush1.bf16.msra.mxu0 %v1219
  %1763 = vmatprep.subr.bf16.mxu0 0
  %1764 = vmatpush1.bf16.msra.mxu0 %v1228
  %1765 = vmatprep.subr.bf16.mxu0 0
  %1766 = vmatpush1.bf16.msra.mxu0 0
  %1767 = vmatprep.subr.bf16.mxu0 0
  %1768 = vmatpush1.bf16.msra.mxu0 0
  %1769 = vmatprep.subr.bf16.mxu0 0
  %1770 = vmatpush1.bf16.msra.mxu0 0
  %1771 = vmatprep.subr.bf16.mxu0 0
  %1772 = vmatpush1.bf16.msra.mxu0 0
  %1773 = vmatprep.subr.bf16.mxu0 0
  %1774 = vmatpush1.bf16.msra.mxu0 0
  %1775 = vmatprep.subr.bf16.mxu0 0
  %1776 = vmatpush1.bf16.msra.mxu0 0
  %1777 = vmatprep.subr.bf16.mxu0 0
  %1778 = vmatpush1.bf16.msra.mxu0 0
  %1779 = vmatprep.subr.bf16.mxu0 0
  %1780 = vmatpush1.bf16.msra.mxu0 0
  %1781 = vmatprep.subr.bf16.mxu0 0
  %1782 = vmatpush1.bf16.msra.mxu0 0
  %1783 = vmatprep.subr.bf16.mxu0 0
  %1784 = vmatpush1.bf16.msra.mxu0 0
  %1785 = vmatprep.subr.bf16.mxu0 0
  %1786 = vmatpush1.bf16.msra.mxu0 0
  %1787 = vmatprep.subr.bf16.mxu0 0
  %1788 = vmatpush1.bf16.msra.mxu0 0
  %1789 = vmatprep.subr.bf16.mxu0 0
  %1790 = vmatpush1.bf16.msra.mxu0 0
  %1791 = vmatprep.subr.bf16.mxu0 0
  %1792 = vmatpush1.bf16.msra.mxu0 0
  %1793 = vmatprep.mubr.bf16.mxu0 0
  %1794 = vmatmul.mubr.bf16.gmra.mrb[0].mxu0 %v1756
  %v1795 = vpop.f32.mrb[0].mxu0
  %v1796 = vadd.f32 0.0, %v1795
  %v1797 = vpop.f32.mrb[0].mxu0
  %v1798 = vpop.f32.mrb[0].mxu0
  %v1799 = vadd.f32 0.0, %v1798
  %v1800 = vpop.f32.mrb[0].mxu0
  %1801 = vmatprep.mubr.bf16.mxu0 0
  %1802 = vmatmul.mubr.bf16.gmra.mrb[0].mxu0 %v1759
  %v1803 = vpop.f32.mrb[0].mxu0
  %v1804 = vadd.f32 0.0, %v1803
  %v1805 = vpop.f32.mrb[0].mxu0
  %v1806 = vpop.f32.mrb[0].mxu0
  %v1807 = vadd.f32 0.0, %v1806
  %v1808 = vpop.f32.mrb[0].mxu0
  %1809 = vdwg.mxu0
  %v1810 = vadd.f32 %v1736, %v1796
  %v1811 = vadd.f32 %v1737, %v1799
  %v1812 = vadd.f32 %v1738, %v1804
  %v1813 = vadd.f32 %v1739, %v1807
  %s1814 = scalar_lea.vmem %s5, 128
  %v1815 = vld [vmem:[%s1814] sm:$0xf]
  %v1816 = vld [vmem:[%s1814 + $0x4] sm:$0xf]
  %v1817 = vld [vmem:[%s1814 + $0x8] sm:$0xf]
  %v1818 = vld [vmem:[%s1814 + $0xc] sm:$0xf]
  %v1823 = vunpack.c.l.b16 %v1815
  %v1824 = vunpack.c.l.b16 %v1816
  %v1825 = vunpack.c.l.b16 %v1817
  %v1826 = vunpack.c.l.b16 %v1818
  %v1827 = vpack.c.b16 %v1824, %v1823
  %v1828 = vpack.c.b16 %v1826, %v1825
  %v1830 = vsel %vm1249, %v1827, 0
  %v1833 = vsel %vm1249, %v1828, 0
  %1835 = vmatprep.subr.bf16.mxu0 0
  %1836 = vmatpush1.bf16.msra.mxu0 %v1220
  %1837 = vmatprep.subr.bf16.mxu0 0
  %1838 = vmatpush1.bf16.msra.mxu0 %v1229
  %1839 = vmatprep.subr.bf16.mxu0 0
  %1840 = vmatpush1.bf16.msra.mxu0 0
  %1841 = vmatprep.subr.bf16.mxu0 0
  %1842 = vmatpush1.bf16.msra.mxu0 0
  %1843 = vmatprep.subr.bf16.mxu0 0
  %1844 = vmatpush1.bf16.msra.mxu0 0
  %1845 = vmatprep.subr.bf16.mxu0 0
  %1846 = vmatpush1.bf16.msra.mxu0 0
  %1847 = vmatprep.subr.bf16.mxu0 0
  %1848 = vmatpush1.bf16.msra.mxu0 0
  %1849 = vmatprep.subr.bf16.mxu0 0
  %1850 = vmatpush1.bf16.msra.mxu0 0
  %1851 = vmatprep.subr.bf16.mxu0 0
  %1852 = vmatpush1.bf16.msra.mxu0 0
  %1853 = vmatprep.subr.bf16.mxu0 0
  %1854 = vmatpush1.bf16.msra.mxu0 0
  %1855 = vmatprep.subr.bf16.mxu0 0
  %1856 = vmatpush1.bf16.msra.mxu0 0
  %1857 = vmatprep.subr.bf16.mxu0 0
  %1858 = vmatpush1.bf16.msra.mxu0 0
  %1859 = vmatprep.subr.bf16.mxu0 0
  %1860 = vmatpush1.bf16.msra.mxu0 0
  %1861 = vmatprep.subr.bf16.mxu0 0
  %1862 = vmatpush1.bf16.msra.mxu0 0
  %1863 = vmatprep.subr.bf16.mxu0 0
  %1864 = vmatpush1.bf16.msra.mxu0 0
  %1865 = vmatprep.subr.bf16.mxu0 0
  %1866 = vmatpush1.bf16.msra.mxu0 0
  %1867 = vmatprep.mubr.bf16.mxu0 0
  %1868 = vmatmul.mubr.bf16.gmra.mrb[0].mxu0 %v1830
  %v1869 = vpop.f32.mrb[0].mxu0
  %v1870 = vadd.f32 0.0, %v1869
  %v1871 = vpop.f32.mrb[0].mxu0
  %v1872 = vpop.f32.mrb[0].mxu0
  %v1873 = vadd.f32 0.0, %v1872
  %v1874 = vpop.f32.mrb[0].mxu0
  %1875 = vmatprep.mubr.bf16.mxu0 0
  %1876 = vmatmul.mubr.bf16.gmra.mrb[0].mxu0 %v1833
  %v1877 = vpop.f32.mrb[0].mxu0
  %v1878 = vadd.f32 0.0, %v1877
  %v1879 = vpop.f32.mrb[0].mxu0
  %v1880 = vpop.f32.mrb[0].mxu0
  %v1881 = vadd.f32 0.0, %v1880
  %v1882 = vpop.f32.mrb[0].mxu0
  %1883 = vdwg.mxu0
  %v1884 = vadd.f32 %v1810, %v1870
  %v1885 = vadd.f32 %v1811, %v1873
  %v1886 = vadd.f32 %v1812, %v1878
  %v1887 = vadd.f32 %v1813, %v1881
  %v1888 = vld [vmem:[%s6] sm:$0x1]
  %v1890 = vlaneseq
  %v1891 = vshrl.u32 %v1890, 7
  %v1892 = vsub.s32 0, %v1891
  %v1893 = vrot.slane %v1888, %v1892
  %v1895 = vmul.f32 %v1884, %v1893
  %v1896 = vmul.f32 %v1885, %v1893
  %v1897 = vmul.f32 %v1886, %v1893
  %v1898 = vmul.f32 %v1887, %v1893
  %v1899 = vld [vmem:[%s7] sm:$0x1]
  %v1901 = vlaneseq
  %v1902 = vshrl.u32 %v1901, 7
  %v1903 = vsub.s32 0, %v1902
  %v1904 = vrot.slane %v1899, %v1903
  %v1906 = vadd.f32 %v1895, %v1904
  %v1907 = vadd.f32 %v1896, %v1904
  %v1908 = vadd.f32 %v1897, %v1904
  %v1909 = vadd.f32 %v1898, %v1904
  %v1910 = vmul.f32 %v1906, 0.5
  %v1911 = vmul.f32 %v1907, 0.5
  %v1912 = vmul.f32 %v1908, 0.5
  %v1913 = vmul.f32 %v1909, 0.5
  %v1914 = vtanh.pop %v1910
  %v1915 = vtanh.pop %v1911
  %v1916 = vtanh.pop %v1912
  %v1917 = vtanh.pop %v1913
  %v1918 = vadd.f32 %v1914, 1.0
  %v1919 = vadd.f32 %v1915, 1.0
  %v1920 = vadd.f32 %v1916, 1.0
  %v1921 = vadd.f32 %v1917, 1.0
  %v1922 = vmul.f32 %v1918, 0.5
  %v1923 = vmul.f32 %v1919, 0.5
  %v1924 = vmul.f32 %v1920, 0.5
  %v1925 = vmul.f32 %v1921, 0.5
  %v1926 = vmul.f32 %v1906, %v1922
  %v1927 = vmul.f32 %v1907, %v1923
  %v1928 = vmul.f32 %v1908, %v1924
  %v1929 = vmul.f32 %v1909, %v1925
  %v1930 = vmax.f32 %v1926, %v1927
  %v1931 = vmax.f32 %v1928, %v1929
  %v1932 = vmax.f32 %v1930, %v1931
  %v1933 = vpack.c.bf16 %v1932, %v1932
  %v1934 = vld [vmem:[%s8] sm:$0xf]
  %v1935 = vld [vmem:[%s8 + $0x4] sm:$0xf]
  %v1936 = vld [vmem:[%s8 + $0x8] sm:$0xf]
  %v1937 = vld [vmem:[%s8 + $0xc] sm:$0xf]
  %v1938 = vld [vmem:[%s8 + $0x10] sm:$0xf]
  %v1939 = vld [vmem:[%s8 + $0x14] sm:$0xf]
  %v1940 = vld [vmem:[%s8 + $0x18] sm:$0xf]
  %v1941 = vld [vmem:[%s8 + $0x1c] sm:$0xf]
  %v1942 = vld [vmem:[%s8 + $0x20] sm:$0xf]
  %v1943 = vld [vmem:[%s8 + $0x24] sm:$0xf]
  %v1944 = vld [vmem:[%s8 + $0x28] sm:$0xf]
  %v1945 = vld [vmem:[%s8 + $0x2c] sm:$0xf]
  %v1946 = vld [vmem:[%s8 + $0x30] sm:$0xf]
  %v1947 = vld [vmem:[%s8 + $0x34] sm:$0xf]
  %v1948 = vld [vmem:[%s8 + $0x38] sm:$0xf]
  %v1949 = vld [vmem:[%s8 + $0x3c] sm:$0xf]
  %v1950 = vld [vmem:[%s9] sm:$0x1]
  %v1952 = vlaneseq
  %v1953 = vshrl.u32 %v1952, 7
  %v1954 = vsub.s32 0, %v1953
  %v1955 = vrot.slane %v1950, %v1954
  %v1973 = vunpack.c.l.b16 %v1934
  %v1974 = vunpack.c.l.b16 %v1935
  %v1975 = vunpack.c.l.b16 %v1936
  %v1976 = vunpack.c.l.b16 %v1937
  %v1977 = vunpack.c.l.b16 %v1938
  %v1978 = vunpack.c.l.b16 %v1939
  %v1979 = vunpack.c.l.b16 %v1940
  %v1980 = vunpack.c.l.b16 %v1941
  %v1981 = vunpack.c.l.b16 %v1942
  %v1982 = vunpack.c.l.b16 %v1943
  %v1983 = vunpack.c.l.b16 %v1944
  %v1984 = vunpack.c.l.b16 %v1945
  %v1985 = vunpack.c.l.b16 %v1946
  %v1986 = vunpack.c.l.b16 %v1947
  %v1987 = vunpack.c.l.b16 %v1948
  %v1988 = vunpack.c.l.b16 %v1949
  %v1989 = vpack.c.b16 %v1974, %v1973
  %v1990 = vpack.c.b16 %v1976, %v1975
  %v1991 = vpack.c.b16 %v1978, %v1977
  %v1992 = vpack.c.b16 %v1980, %v1979
  %v1993 = vpack.c.b16 %v1982, %v1981
  %v1994 = vpack.c.b16 %v1984, %v1983
  %v1995 = vpack.c.b16 %v1986, %v1985
  %v1996 = vpack.c.b16 %v1988, %v1987
  %2005 = vmatprep.subr.bf16.mxu0 0
  %2006 = vmatpush1.bf16.msra.mxu0 %v1989
  %2007 = vmatprep.subr.bf16.mxu0 0
  %2008 = vmatpush1.bf16.msra.mxu0 %v1990
  %2009 = vmatprep.subr.bf16.mxu0 0
  %2010 = vmatpush1.bf16.msra.mxu0 %v1991
  %2011 = vmatprep.subr.bf16.mxu0 0
  %2012 = vmatpush1.bf16.msra.mxu0 %v1992
  %2013 = vmatprep.subr.bf16.mxu0 0
  %2014 = vmatpush1.bf16.msra.mxu0 %v1993
  %2015 = vmatprep.subr.bf16.mxu0 0
  %2016 = vmatpush1.bf16.msra.mxu0 %v1994
  %2017 = vmatprep.subr.bf16.mxu0 0
  %2018 = vmatpush1.bf16.msra.mxu0 %v1995
  %2019 = vmatprep.subr.bf16.mxu0 0
  %2020 = vmatpush1.bf16.msra.mxu0 %v1996
  %2021 = vmatprep.subr.bf16.mxu0 0
  %2022 = vmatpush1.bf16.msra.mxu0 0
  %2023 = vmatprep.subr.bf16.mxu0 0
  %2024 = vmatpush1.bf16.msra.mxu0 0
  %2025 = vmatprep.subr.bf16.mxu0 0
  %2026 = vmatpush1.bf16.msra.mxu0 0
  %2027 = vmatprep.subr.bf16.mxu0 0
  %2028 = vmatpush1.bf16.msra.mxu0 0
  %2029 = vmatprep.subr.bf16.mxu0 0
  %2030 = vmatpush1.bf16.msra.mxu0 0
  %2031 = vmatprep.subr.bf16.mxu0 0
  %2032 = vmatpush1.bf16.msra.mxu0 0
  %2033 = vmatprep.subr.bf16.mxu0 0
  %2034 = vmatpush1.bf16.msra.mxu0 0
  %2035 = vmatprep.subr.bf16.mxu0 0
  %2036 = vmatpush1.bf16.msra.mxu0 0
  %2037 = vmatprep.mubr.bf16.mxu0 0
  %2038 = vmatmul.mubr.bf16.gmra.mrb[0].mxu0 %v1933
  %v2039 = vpop.f32.mrb[0].mxu0
  %v2040 = vadd.f32 %v1955, %v2039
  %v2041 = vpop.f32.mrb[0].mxu0
  %v2042 = vpop.f32.mrb[0].mxu0
  %v2043 = vpop.f32.mrb[0].mxu0
  %2044 = vdwg.mxu0
  %2045 = vmax.xlane.f32.xlu0 %v2040
  %v2046 = vpop.xlane.xlu0 %2045
  %v2047 = vsub.f32 %v2040, %v2046
  %v2048 = vmul.f32 %v2047, 1.442695
  %v2049 = vpow.pop %v2048
  %2050 = vadd.xlane.f32.xlu0 %v2049
  %v2051 = vpop.xlane.xlu0 %2050
  %v2052 = vrcp.pop %v2051
  %v2053 = vmul.f32 %v2049, %v2052
  %v2054 = vld [vmem:[%s10] sm:$0xff]
  %v2055 = vld [vmem:[%s10 + $0x8] sm:$0xff]
  %v2056 = vld [vmem:[%s10 + $0x10] sm:$0xff]
  %v2057 = vld [vmem:[%s10 + $0x18] sm:$0xff]
  %v2058 = vld [vmem:[%s10 + $0x20] sm:$0xff]
  %v2059 = vld [vmem:[%s10 + $0x28] sm:$0xff]
  %v2060 = vld [vmem:[%s10 + $0x30] sm:$0xff]
  %v2061 = vld [vmem:[%s10 + $0x38] sm:$0xff]
  %v2062 = vld [vmem:[%s10 + $0x40] sm:$0xff]
  %v2063 = vld [vmem:[%s10 + $0x48] sm:$0xff]
  %v2064 = vld [vmem:[%s10 + $0x50] sm:$0xff]
  %v2065 = vld [vmem:[%s10 + $0x58] sm:$0xff]
  %v2066 = vld [vmem:[%s10 + $0x60] sm:$0xff]
  %v2067 = vld [vmem:[%s10 + $0x68] sm:$0xff]
  %v2068 = vld [vmem:[%s10 + $0x70] sm:$0xff]
  %v2069 = vld [vmem:[%s10 + $0x78] sm:$0xff]
  %v2070 = vld [vmem:[%s11] sm:$0x1]
  %v2072 = vlaneseq
  %v2073 = vshrl.u32 %v2072, 7
  %v2074 = vsub.s32 0, %v2073
  %v2075 = vrot.slane %v2070, %v2074
  %2077 = vmatprep.subr.mxu0 0.0
  %2078 = vmatpush1.msra.mxu0 %v2054
  %2079 = vmatprep.subr.mxu0 0.0
  %2080 = vmatpush1.msra.mxu0 %v2055
  %2081 = vmatprep.subr.mxu0 0.0
  %2082 = vmatpush1.msra.mxu0 %v2056
  %2083 = vmatprep.subr.mxu0 0.0
  %2084 = vmatpush1.msra.mxu0 %v2057
  %2085 = vmatprep.subr.mxu0 0.0
  %2086 = vmatpush1.msra.mxu0 %v2058
  %2087 = vmatprep.subr.mxu0 0.0
  %2088 = vmatpush1.msra.mxu0 %v2059
  %2089 = vmatprep.subr.mxu0 0.0
  %2090 = vmatpush1.msra.mxu0 %v2060
  %2091 = vmatprep.subr.mxu0 0.0
  %2092 = vmatpush1.msra.mxu0 %v2061
  %2093 = vmatprep.subr.mxu0 0.0
  %2094 = vmatpush1.msra.mxu0 %v2062
  %2095 = vmatprep.subr.mxu0 0.0
  %2096 = vmatpush1.msra.mxu0 %v2063
  %2097 = vmatprep.subr.mxu0 0.0
  %2098 = vmatpush1.msra.mxu0 %v2064
  %2099 = vmatprep.subr.mxu0 0.0
  %2100 = vmatpush1.msra.mxu0 %v2065
  %2101 = vmatprep.subr.mxu0 0.0
  %2102 = vmatpush1.msra.mxu0 %v2066
  %2103 = vmatprep.subr.mxu0 0.0
  %2104 = vmatpush1.msra.mxu0 %v2067
  %2105 = vmatprep.subr.mxu0 0.0
  %2106 = vmatpush1.msra.mxu0 %v2068
  %2107 = vmatprep.subr.mxu0 0.0
  %2108 = vmatpush1.msra.mxu0 %v2069
  %2109 = vmatprep.subr.mxu0 0.0
  %2110 = vmatpush1.msra.mxu0 0.0
  %2111 = vmatprep.subr.mxu0 0.0
  %2112 = vmatpush1.msra.mxu0 0.0
  %2113 = vmatprep.subr.mxu0 0.0
  %2114 = vmatpush1.msra.mxu0 0.0
  %2115 = vmatprep.subr.mxu0 0.0
  %2116 = vmatpush1.msra.mxu0 0.0
  %2117 = vmatprep.subr.mxu0 0.0
  %2118 = vmatpush1.msra.mxu0 0.0
  %2119 = vmatprep.subr.mxu0 0.0
  %2120 = vmatpush1.msra.mxu0 0.0
  %2121 = vmatprep.subr.mxu0 0.0
  %2122 = vmatpush1.msra.mxu0 0.0
  %2123 = vmatprep.subr.mxu0 0.0
  %2124 = vmatpush1.msra.mxu0 0.0
  %2125 = vmatprep.subr.mxu0 0.0
  %2126 = vmatpush1.msra.mxu0 0.0
  %2127 = vmatprep.subr.mxu0 0.0
  %2128 = vmatpush1.msra.mxu0 0.0
  %2129 = vmatprep.subr.mxu0 0.0
  %2130 = vmatpush1.msra.mxu0 0.0
  %2131 = vmatprep.subr.mxu0 0.0
  %2132 = vmatpush1.msra.mxu0 0.0
  %2133 = vmatprep.subr.mxu0 0.0
  %2134 = vmatpush1.msra.mxu0 0.0
  %2135 = vmatprep.subr.mxu0 0.0
  %2136 = vmatpush1.msra.mxu0 0.0
  %2137 = vmatprep.subr.mxu0 0.0
  %2138 = vmatpush1.msra.mxu0 0.0
  %2139 = vmatprep.subr.mxu0 0.0
  %2140 = vmatpush1.msra.mxu0 0.0
  %2141 = vmatprep.mubr.f32.mxu0 0.0
  %2142 = vmatmul.mubr.f32.gmra.mrb[0].mxu0 %v2053
  %v2143 = vpop.f32.mrb[0].mxu0
  %v2144 = vadd.f32 %v2075, %v2143
  %v2145 = vpop.f32.mrb[0].mxu0
  %2146 = vdwg.mxu0
  %2147 = vst [vmem:[%s12] sm:$0xff] %v2144
  // Predicated region
  $region50: #{forward.3} parent=0 // pred_check
    _
  $region51: #{forward.3} parent=0 // pred_check_branch
    %2149 = sbr.rel (0) target = $region53
  $region52: #{forward.3} parent=0 // pred_region
    _
  $region53: #{forward.3} parent=0 // pred_fallthru
    _
  // Predicated region
  $region54: #{forward.3} parent=0 // pred_check
    _
  $region55: #{forward.3} parent=0 // pred_check_branch
    %2151 = sbr.rel (0) target = $region57
  $region56: #{forward.3} parent=0 // pred_region
    _
  $region57: #{forward.3} parent=0 // pred_fallthru
    _

</llo_original>
